<compile_context>
chip_gen: v7x
topology: tpu7x:2x2x1
jax: 0.10.0
libtpu: 0.0.40
codegen_flags: <defaults>
</compile_context>

<pallas_src>
import functools

import jax
import jax.numpy as jnp
from jax.experimental import pallas as pl
from jax.experimental.pallas import tpu as pltpu

# ----------------------------- model hyper-params -----------------------------
NUM_CLASSES = 8          # roi_heads.num_classes
BACKBONE_CH = 32         # backbone feature channels
RPN_CH = 32              # RPN hidden conv channels
NUM_ANCHORS = 3
ANCHOR_SIZES = (8.0, 16.0, 24.0)
FEAT_STRIDE = 2          # backbone downsamples by 2
POOL = 7                 # ROI pool output resolution
TOPK = 8                 # proposals kept per image
FC_DIM = 128             # box head hidden dim
RPN_HEAD_CH = 16         # 3 obj + 12 delta channels, padded (merged 1x1 heads -> one store)
PRED_CH = 48             # 9 cls + 32 box channels, padded (merged predictors -> one store)

PIXEL_MEAN = jnp.array([103.53, 116.28, 123.675], dtype=jnp.float32)
PIXEL_STD = jnp.array([57.375, 57.120, 58.395], dtype=jnp.float32)

# Explicit VMEM budget (safe on v5e/v6e 128 MiB and v7x 64 MiB physical); parallel grid axis
# lets v7x's two TensorCores split the per-image / per-row-tile work.
COMPILER_PARAMS = pltpu.CompilerParams(
    dimension_semantics=("parallel",),
    vmem_limit_bytes=32 * 1024 * 1024,
)


# ------------------------------- Pallas kernels -------------------------------
def _htap_conv_kernel(x_ref, w_ref, b_ref, o_ref, *, relu):
    """Conv with W-taps pre-folded into channels; H-taps accumulated in-kernel.

    x_ref: (Ho + taps - 1, Wo, K)  W-expanded, H-padded input block (bf16)
    w_ref: (taps, K, Cout)         per-H-tap weights (bf16)
    b_ref: (1, Cout)               bias (f32)
    o_ref: (Ho, Wo, Cout)          output block
    """
    Ho, Wo, Cout = o_ref.shape
    taps, K, _ = w_ref.shape
    x = x_ref[...]
    acc = jnp.zeros((Ho * Wo, Cout), jnp.float32)
    for t in range(taps):                                  # static unroll (2 or 3 taps)
        tap = x[t:t + Ho].reshape(Ho * Wo, K)              # contiguous outer-dim slice
        acc = acc + jnp.dot(tap, w_ref[t], preferred_element_type=jnp.float32)
    acc = acc + b_ref[...]
    if relu:
        acc = jnp.maximum(acc, 0.0)
    o_ref[...] = acc.reshape(Ho, Wo, Cout).astype(o_ref.dtype)


def _rpn_fused_kernel(x_ref, wc_ref, bc_ref, wh_ref, bh_ref, o_ref):
    """RPN 3x3 conv (+ReLU) fused with the merged objectness/delta 1x1 heads.

    The hidden activation never leaves vregs/VMEM; one kernel replaces three calls.
    """
    Ho, Wo, Hc = o_ref.shape
    taps, K, Cr = wc_ref.shape
    x = x_ref[...]
    acc = jnp.zeros((Ho * Wo, Cr), jnp.float32)
    for t in range(taps):
        tap = x[t:t + Ho].reshape(Ho * Wo, K)
        acc = acc + jnp.dot(tap, wc_ref[t], preferred_element_type=jnp.float32)
    hidden = jnp.maximum(acc + bc_ref[...], 0.0).astype(wh_ref.dtype)
    head = jnp.dot(hidden, wh_ref[...], preferred_element_type=jnp.float32) + bh_ref[...]
    o_ref[...] = head.reshape(Ho, Wo, Hc).astype(o_ref.dtype)


def _box_head_kernel(x_ref, w1_ref, b1_ref, w2_ref, b2_ref, wp_ref, bp_ref, o_ref):
    """Fused box head: fc1 -> relu -> fc2 -> relu -> merged (cls | box) predictor."""
    h1 = jnp.maximum(
        jnp.dot(x_ref[...], w1_ref[...], preferred_element_type=jnp.float32) + b1_ref[...], 0.0)
    h2 = jnp.maximum(
        jnp.dot(h1.astype(w2_ref.dtype), w2_ref[...], preferred_element_type=jnp.float32)
        + b2_ref[...], 0.0)
    out = jnp.dot(h2.astype(wp_ref.dtype), wp_ref[...],
                  preferred_element_type=jnp.float32) + bp_ref[...]
    o_ref[...] = out.astype(o_ref.dtype)


# ------------------------------- kernel wrappers -------------------------------
def htap_conv(xh, w, b, *, relu, out_dtype):
    """xh: (N, Hp, Wo, K) prepared input; w: (taps, K, Cout); b: (Cout,)."""
    N, Hp, Wo, K = xh.shape
    taps, _, Cout = w.shape
    Ho = Hp - (taps - 1)
    # TODO(synk): for large images, also tile Ho with halo handling (manual DMA / pl.Element).
    return pl.pallas_call(
        functools.partial(_htap_conv_kernel, relu=relu),
        out_shape=jax.ShapeDtypeStruct((N, Ho, Wo, Cout), out_dtype),
        grid=(N,),
        in_specs=[
            pl.BlockSpec((None, Hp, Wo, K), lambda n: (n, 0, 0, 0)),
            pl.BlockSpec((taps, K, Cout), lambda n: (0, 0, 0)),   # weights resident
            pl.BlockSpec((1, Cout), lambda n: (0, 0)),
        ],
        out_specs=pl.BlockSpec((None, Ho, Wo, Cout), lambda n: (n, 0, 0, 0)),
        compiler_params=COMPILER_PARAMS,
    )(xh, w, b.reshape(1, Cout))


def rpn_fused(xh, wc, bc, wh, bh):
    """Fused RPN conv + merged 1x1 heads. Returns (N, Ho, Wo, RPN_HEAD_CH) f32."""
    N, Hp, Wo, K = xh.shape
    taps, _, Cr = wc.shape
    Ho = Hp - (taps - 1)
    Hc = wh.shape[1]
    return pl.pallas_call(
        _rpn_fused_kernel,
        out_shape=jax.ShapeDtypeStruct((N, Ho, Wo, Hc), jnp.float32),
        grid=(N,),
        in_specs=[
            pl.BlockSpec((None, Hp, Wo, K), lambda n: (n, 0, 0, 0)),
            pl.BlockSpec((taps, K, Cr), lambda n: (0, 0, 0)),
            pl.BlockSpec((1, Cr), lambda n: (0, 0)),
            pl.BlockSpec((Cr, Hc), lambda n: (0, 0)),
            pl.BlockSpec((1, Hc), lambda n: (0, 0)),
        ],
        out_specs=pl.BlockSpec((None, Ho, Wo, Hc), lambda n: (n, 0, 0, 0)),
        compiler_params=COMPILER_PARAMS,
    )(xh, wc, bc.reshape(1, Cr), wh, bh.reshape(1, Hc))


def fused_box_head(x, w1, b1, w2, b2, wp, bp):
    """x: (M, K) pooled ROI features (bf16). One fused kernel, row-tiled grid, resident weights."""
    M, K = x.shape
    tm = M if M <= 256 else 256
    assert M % tm == 0  # TODO(synk): ragged last tile would need masked stores
    n1, n2, npred = w1.shape[1], w2.shape[1], wp.shape[1]
    return pl.pallas_call(
        _box_head_kernel,
        out_shape=jax.ShapeDtypeStruct((M, npred), jnp.float32),
        grid=(M // tm,),
        in_specs=[
            pl.BlockSpec((tm, K), lambda i: (i, 0)),
            pl.BlockSpec((K, n1), lambda i: (0, 0)),
            pl.BlockSpec((1, n1), lambda i: (0, 0)),
            pl.BlockSpec((n1, n2), lambda i: (0, 0)),
            pl.BlockSpec((1, n2), lambda i: (0, 0)),
            pl.BlockSpec((n2, npred), lambda i: (0, 0)),
            pl.BlockSpec((1, npred), lambda i: (0, 0)),
        ],
        out_specs=pl.BlockSpec((tm, npred), lambda i: (i, 0)),
        compiler_params=COMPILER_PARAMS,
    )(x, w1, b1.reshape(1, n1), w2, b2.reshape(1, n2), wp, bp.reshape(1, npred))


# --------------------------- wrapper-side data prep ----------------------------
def space_to_depth2(x):
    """(N, H, W, C) -> (N, H/2, W/2, 4C); turns the stride-2 conv1 into a stride-1 conv."""
    N, H, W, C = x.shape
    x = x.reshape(N, H // 2, 2, W // 2, 2, C)
    x = jnp.transpose(x, (0, 1, 3, 2, 4, 5))
    return x.reshape(N, H // 2, W // 2, 4 * C)


def expand_w_taps(x, taps, pad_left, pad_right):
    """Fold W-axis conv taps into channels: out[..., w, t*C+c] = x_padW[..., w+t, c]."""
    xp = jnp.pad(x, ((0, 0), (0, 0), (pad_left, pad_right), (0, 0)))
    Wo = x.shape[2] + pad_left + pad_right - (taps - 1)
    return jnp.concatenate([xp[:, :, t:t + Wo, :] for t in range(taps)], axis=-1)


def pad_h(x, top, bottom):
    return jnp.pad(x, ((0, 0), (top, bottom), (0, 0), (0, 0)))


def prep_conv1_input(images_nchw):
    """NCHW -> NHWC, mean-subtract (std scale is folded into conv1 weights), space-to-depth,
    fold W taps, pad H. Everything fuses into the unavoidable prep copy under jit."""
    x = jnp.transpose(images_nchw, (0, 2, 3, 1)).astype(jnp.float32) - PIXEL_MEAN
    s2d = space_to_depth2(x)                                    # (N, H/2, W/2, 12)
    xw = expand_w_taps(s2d, taps=2, pad_left=1, pad_right=0)    # (N, H/2, W/2, 24)
    return pad_h(xw, 1, 0).astype(jnp.bfloat16)                 # (N, H/2+1, W/2, 24)


def prep_conv3x3_input(feat):
    """Prepare a 3x3/stride-1/pad-1 conv input: W-taps into channels (3x, not 9x im2col)."""
    xw = expand_w_taps(feat, taps=3, pad_left=1, pad_right=1)   # (N, Hf, Wf, 3C)
    return pad_h(xw, 1, 1).astype(jnp.bfloat16)                 # (N, Hf+2, Wf, 3C)


# ------------------------------ weight packing ---------------------------------
def pack_conv1_weight(w1_hwio, pixel_std):
    """Fold 1/pixel_std per input channel into the 3x3 stride-2 conv1 weight and repack it for
    the space-to-depth + W-expanded layout: returns (2 H-taps, 8*Cin, Cout)."""
    w1f = w1_hwio / pixel_std[None, None, :, None]
    cin, cout = w1_hwio.shape[2], w1_hwio.shape[3]
    sub_to_tap = {(-1, 1): 0, (0, 0): 1, (0, 1): 2}   # (cell offset, sub-pos) -> conv tap index
    eff = jnp.zeros((2, 2, 2, 2, cin, cout), jnp.float32)   # (t, dqi, u, v, cin, cout)
    for t in range(2):              # H cell offset (dp = t-1)
        for u in range(2):          # H sub-position within the 2x2 cell
            di = sub_to_tap.get((t - 1, u))
            if di is None:
                continue
            for dqi in range(2):    # W cell offset (dq = dqi-1)
                for v in range(2):  # W sub-position
                    dj = sub_to_tap.get((dqi - 1, v))
                    if dj is None:
                        continue
                    eff = eff.at[t, dqi, u, v].set(w1f[di, dj])
    return eff.reshape(2, 8 * cin, cout)


def pack_conv3x3_weight(w_hwio):
    """(3, 3, Cin, Cout) -> (3 H-taps, 3*Cin, Cout); row order (dj, cin) matches the prep."""
    kh, kw, cin, cout = w_hwio.shape
    return w_hwio.reshape(kh, kw * cin, cout)


# --------------------------------- parameters ----------------------------------
def init_params(key):
    def norm(k, shape, scale=0.05):
        return scale * jax.random.normal(k, shape, dtype=jnp.float32)

    ks = jax.random.split(key, 10)
    p = {}
    # backbone: conv1 3x3 s2 (3 -> 32), conv2 3x3 s1 (32 -> 32)   (HWIO layout)
    p["bb_w1"] = norm(ks[0], (3, 3, 3, BACKBONE_CH))
    p["bb_b1"] = jnp.zeros((BACKBONE_CH,), jnp.float32)
    p["bb_w2"] = norm(ks[1], (3, 3, BACKBONE_CH, BACKBONE_CH))
    p["bb_b2"] = jnp.zeros((BACKBONE_CH,), jnp.float32)
    # RPN: conv 3x3 (32 -> 32), objectness 1x1 (32 -> A), deltas 1x1 (32 -> 4A)
    p["rpn_w"] = norm(ks[2], (3, 3, BACKBONE_CH, RPN_CH))
    p["rpn_b"] = jnp.zeros((RPN_CH,), jnp.float32)
    p["obj_w"] = norm(ks[3], (RPN_CH, NUM_ANCHORS))
    p["obj_b"] = jnp.zeros((NUM_ANCHORS,), jnp.float32)
    p["dlt_w"] = norm(ks[4], (RPN_CH, 4 * NUM_ANCHORS))
    p["dlt_b"] = jnp.zeros((4 * NUM_ANCHORS,), jnp.float32)
    # box head: fc1, fc2, class score, box regression
    in_dim = POOL * POOL * BACKBONE_CH
    p["fc1_w"] = norm(ks[5], (in_dim, FC_DIM))
    p["fc1_b"] = jnp.zeros((FC_DIM,), jnp.float32)
    p["fc2_w"] = norm(ks[6], (FC_DIM, FC_DIM))
    p["fc2_b"] = jnp.zeros((FC_DIM,), jnp.float32)
    p["cls_w"] = norm(ks[7], (FC_DIM, NUM_CLASSES + 1))
    p["cls_b"] = jnp.zeros((NUM_CLASSES + 1,), jnp.float32)
    p["box_w"] = norm(ks[8], (FC_DIM, 4 * NUM_CLASSES))
    p["box_b"] = jnp.zeros((4 * NUM_CLASSES,), jnp.float32)
    return p


def prepare_params(p):
    """Pack / fuse weights into the layouts the Pallas kernels consume (done once)."""
    q = {}
    q["conv1_w"] = pack_conv1_weight(p["bb_w1"], PIXEL_STD).astype(jnp.bfloat16)
    q["conv1_b"] = p["bb_b1"]
    q["conv2_w"] = pack_conv3x3_weight(p["bb_w2"]).astype(jnp.bfloat16)
    q["conv2_b"] = p["bb_b2"]
    q["rpn_conv_w"] = pack_conv3x3_weight(p["rpn_w"]).astype(jnp.bfloat16)
    q["rpn_conv_b"] = p["rpn_b"]
    # merged objectness + delta 1x1 heads (3 + 12 channels, zero-padded to RPN_HEAD_CH)
    head_w = jnp.concatenate([p["obj_w"], p["dlt_w"]], axis=1)
    head_b = jnp.concatenate([p["obj_b"], p["dlt_b"]], axis=0)
    pad = RPN_HEAD_CH - head_w.shape[1]
    q["rpn_head_w"] = jnp.pad(head_w, ((0, 0), (0, pad))).astype(jnp.bfloat16)
    q["rpn_head_b"] = jnp.pad(head_b, (0, pad))
    # box head
    q["fc1_w"] = p["fc1_w"].astype(jnp.bfloat16)
    q["fc1_b"] = p["fc1_b"]
    q["fc2_w"] = p["fc2_w"].astype(jnp.bfloat16)
    q["fc2_b"] = p["fc2_b"]
    # merged class-score + box-regression predictors (9 + 32 channels, padded to PRED_CH)
    pred_w = jnp.concatenate([p["cls_w"], p["box_w"]], axis=1)
    pred_b = jnp.concatenate([p["cls_b"], p["box_b"]], axis=0)
    padp = PRED_CH - pred_w.shape[1]
    q["pred_w"] = jnp.pad(pred_w, ((0, 0), (0, padp))).astype(jnp.bfloat16)
    q["pred_b"] = jnp.pad(pred_b, (0, padp))
    return q


# ------------------------------ JAX glue (RPN/ROI) ------------------------------
def make_anchors(hf, wf, stride):
    ys = (jnp.arange(hf, dtype=jnp.float32) + 0.5) * stride
    xs = (jnp.arange(wf, dtype=jnp.float32) + 0.5) * stride
    cy, cx = jnp.meshgrid(ys, xs, indexing="ij")
    sizes = jnp.array(ANCHOR_SIZES, dtype=jnp.float32)
    half = sizes / 2.0
    x1 = cx[..., None] - half
    y1 = cy[..., None] - half
    x2 = cx[..., None] + half
    y2 = cy[..., None] + half
    return jnp.stack([x1, y1, x2, y2], axis=-1).reshape(-1, 4)   # (hf*wf*A, 4)


def decode_boxes(boxes, deltas, img_h, img_w):
    """Standard Faster-RCNN box decode, then clip to the image."""
    w = boxes[:, 2] - boxes[:, 0]
    h = boxes[:, 3] - boxes[:, 1]
    cx = boxes[:, 0] + 0.5 * w
    cy = boxes[:, 1] + 0.5 * h
    dx, dy, dw, dh = deltas[:, 0], deltas[:, 1], deltas[:, 2], deltas[:, 3]
    dw = jnp.clip(dw, -4.0, 4.0)
    dh = jnp.clip(dh, -4.0, 4.0)
    ncx = cx + dx * w
    ncy = cy + dy * h
    nw = w * jnp.exp(dw)
    nh = h * jnp.exp(dh)
    x1 = jnp.clip(ncx - 0.5 * nw, 0.0, img_w)
    y1 = jnp.clip(ncy - 0.5 * nh, 0.0, img_h)
    x2 = jnp.clip(ncx + 0.5 * nw, 0.0, img_w)
    y2 = jnp.clip(ncy + 0.5 * nh, 0.0, img_h)
    return jnp.stack([x1, y1, x2, y2], axis=-1)


def roi_bilinear_pool(feat, boxes, stride=float(FEAT_STRIDE), out_size=POOL):
    """Simplified ROIAlign (one bilinear sample per bin). feat: (Hf, Wf, C) f32."""
    # TODO(synk): full detectron2 ROIAlign (multi-sample-per-bin, level assignment) not ported.
    Hf, Wf, C = feat.shape
    K = boxes.shape[0]
    x1, y1, x2, y2 = boxes[:, 0], boxes[:, 1], boxes[:, 2], boxes[:, 3]
    frac = (jnp.arange(out_size, dtype=jnp.float32) + 0.5) / out_size
    ys = (y1[:, None] + frac[None, :] * (y2 - y1)[:, None]) / stride - 0.5
    xs = (x1[:, None] + frac[None, :] * (x2 - x1)[:, None]) / stride - 0.5
    yg = ys[:, :, None]
    xg = xs[:, None, :]
    y0 = jnp.floor(yg)
    x0 = jnp.floor(xg)
    wy = jnp.clip(yg - y0, 0.0, 1.0)[..., None]
    wx = jnp.clip(xg - x0, 0.0, 1.0)[..., None]

    def gather(yi, xi):
        yi = jnp.clip(yi, 0, Hf - 1).astype(jnp.int32)
        xi = jnp.clip(xi, 0, Wf - 1).astype(jnp.int32)
        yi = jnp.broadcast_to(yi, (K, out_size, out_size))
        xi = jnp.broadcast_to(xi, (K, out_size, out_size))
        return feat[yi, xi]

    v00 = gather(y0, x0)
    v01 = gather(y0, x0 + 1)
    v10 = gather(y0 + 1, x0)
    v11 = gather(y0 + 1, x0 + 1)
    return (v00 * (1 - wy) * (1 - wx) + v01 * (1 - wy) * wx
            + v10 * wy * (1 - wx) + v11 * wy * wx)


# ------------------------------ teacher forward --------------------------------
@jax.jit
def teacher_forward(q, images_nchw):
    """Inference forward. images_nchw: (N, 3, H, W) raw pixel values (PyTorch layout)."""
    N, C, H, W = images_nchw.shape
    img_h, img_w = float(H), float(W)

    # ---- _preprocess_image + backbone conv1 (pixel norm folded into weights) ----
    x1 = prep_conv1_input(images_nchw)                               # (N, H/2+1, W/2, 24) bf16
    f1 = htap_conv(x1, q["conv1_w"], q["conv1_b"], relu=True,
                   out_dtype=jnp.bfloat16)                           # (N, H/2, W/2, 32)

    # ---- backbone conv2 -> features ----
    x2 = prep_conv3x3_input(f1)
    feats = htap_conv(x2, q["conv2_w"], q["conv2_b"], relu=True,
                      out_dtype=jnp.bfloat16)                        # (N, Hf, Wf, 32)
    _, Hf, Wf, _ = feats.shape

    # ---- proposal_generator: fused RPN conv + merged objectness/delta heads ----
    xr = prep_conv3x3_input(feats)
    rpn_out = rpn_fused(xr, q["rpn_conv_w"], q["rpn_conv_b"],
                        q["rpn_head_w"], q["rpn_head_b"])            # (N, Hf, Wf, 16) f32
    obj = rpn_out[..., :NUM_ANCHORS].reshape(N, Hf * Wf * NUM_ANCHORS)
    dlt = rpn_out[..., NUM_ANCHORS:NUM_ANCHORS + 4 * NUM_ANCHORS].reshape(
        N, Hf * Wf * NUM_ANCHORS, 4)

    anchors = make_anchors(Hf, Wf, FEAT_STRIDE)

    def proposals_one(obj_i, dlt_i):
        boxes = decode_boxes(anchors, dlt_i, img_h, img_w)
        scores, idx = jax.lax.top_k(obj_i, TOPK)                     # TODO(synk): NMS omitted
        return boxes[idx], jax.nn.sigmoid(scores)

    prop_boxes, prop_scores = jax.vmap(proposals_one)(obj, dlt)      # (N, K, 4), (N, K)

    # ---- roi_heads: ROI pooling (JAX gather glue) + fused box head kernel ----
    pooled = jax.vmap(roi_bilinear_pool)(feats.astype(jnp.float32), prop_boxes)
    pooled_flat = pooled.reshape(N * TOPK, POOL * POOL * BACKBONE_CH).astype(jnp.bfloat16)

    head_out = fused_box_head(pooled_flat,
                              q["fc1_w"], q["fc1_b"], q["fc2_w"], q["fc2_b"],
                              q["pred_w"], q["pred_b"])              # (N*K, 48) f32
    cls_logits = head_out[:, :NUM_CLASSES + 1]
    box_deltas = head_out[:, NUM_CLASSES + 1:NUM_CLASSES + 1 + 4 * NUM_CLASSES]

    probs = jax.nn.softmax(cls_logits, axis=-1)
    fg_probs = probs[:, :NUM_CLASSES]
    pred_classes = jnp.argmax(fg_probs, axis=-1)
    scores = jnp.max(fg_probs, axis=-1)

    deltas_per_cls = box_deltas.reshape(N * TOPK, NUM_CLASSES, 4)
    sel_deltas = jnp.take_along_axis(
        deltas_per_cls,
        pred_classes[:, None, None].astype(jnp.int32).repeat(4, axis=-1), axis=1)[:, 0, :]
    pred_boxes = decode_boxes(prop_boxes.reshape(N * TOPK, 4), sel_deltas, img_h, img_w)

    # TODO(synk): detector_postprocess rescaling, noise injection and synthetic-box augmentation
    # operate on dynamic Instances lists and are not ported to the static-shape kernel path.
    return {
        "features": feats,                                           # (N, Hf, Wf, C) NHWC bf16
        "proposal_boxes": prop_boxes,                                # (N, K, 4)
        "proposal_scores": prop_scores,                              # (N, K)
        "pred_boxes": pred_boxes.reshape(N, TOPK, 4),
        "scores": scores.reshape(N, TOPK),
        "pred_classes": pred_classes.reshape(N, TOPK).astype(jnp.int32),
    }


# ------------------------------------ main --------------------------------------
if __name__ == "__main__":
    key = jax.random.PRNGKey(0)
    k_img, k_par = jax.random.split(key)

    N, C, H, W = 2, 3, 32, 32
    # raw uint8-like pixel values in [0, 255), NCHW like PyTorch
    images = jax.random.uniform(k_img, (N, C, H, W), dtype=jnp.float32, minval=0.0, maxval=255.0)

    params = init_params(k_par)
    packed = prepare_params(params)
    out = teacher_forward(packed, images)
    out = jax.tree_util.tree_map(jax.block_until_ready, out)

    # light sanity checks
    assert out["features"].shape == (N, H // 2, W // 2, BACKBONE_CH)
    assert out["pred_boxes"].shape == (N, TOPK, 4)
    assert out["scores"].shape == (N, TOPK)
    assert out["pred_classes"].shape == (N, TOPK)
    assert bool(jnp.all(jnp.isfinite(out["pred_boxes"])))

    print("KERNEL_OK")
</pallas_src>

<mosaic_0001>
module attributes {stable_mosaic.version = 11 : i64} {
  func.func @_htap_conv_kernel(%arg0: i32, %arg1: memref<1x17x16x24xbf16, #tpu.memory_space<vmem>>, %arg2: memref<2x24x32xbf16, #tpu.memory_space<vmem>>, %arg3: memref<1x32xf32, #tpu.memory_space<vmem>>, %arg4: memref<1x16x16x32xbf16, #tpu.memory_space<vmem>>) attributes {dimension_semantics = [#tpu.dimension_semantics<parallel>], iteration_bounds = array<i64: 2>, scalar_prefetch = 0 : i64, scratch_operands = 0 : i64, tpu.core_type = #tpu.core_type<tc>, window_params = [{transform_indices = @transform_0, window_bounds = array<i64: 1, 17, 16, 24>}, {pipeline_mode = #tpu.pipeline_mode<synchronous>, transform_indices = @transform_1, window_bounds = array<i64: 2, 24, 32>}, {pipeline_mode = #tpu.pipeline_mode<synchronous>, transform_indices = @transform_2, window_bounds = array<i64: 1, 32>}, {transform_indices = @transform_3, window_bounds = array<i64: 1, 16, 16, 32>}]} {
    %c0 = arith.constant 0 : index
    %c0_0 = arith.constant 0 : index
    %c0_1 = arith.constant 0 : index
    %c0_2 = arith.constant 0 : index
    %0 = vector.load %arg1[%c0, %c0_0, %c0_1, %c0_2] : memref<1x17x16x24xbf16, #tpu.memory_space<vmem>>, vector<1x17x16x24xbf16>
    %1 = vector.shape_cast %0 : vector<1x17x16x24xbf16> to vector<17x16x24xbf16>
    %cst = arith.constant 0.000000e+00 : f32
    %2 = vector.broadcast %cst : f32 to vector<256x32xf32>
    %3 = vector.extract_strided_slice %1 {offsets = [0, 0, 0], sizes = [16, 16, 24], strides = [1, 1, 1]} : vector<17x16x24xbf16> to vector<16x16x24xbf16>
    %4 = vector.shape_cast %3 : vector<16x16x24xbf16> to vector<256x24xbf16>
    %c0_3 = arith.constant 0 : index
    %c0_4 = arith.constant 0 : index
    %c0_5 = arith.constant 0 : index
    %5 = vector.load %arg2[%c0_3, %c0_4, %c0_5] : memref<2x24x32xbf16, #tpu.memory_space<vmem>>, vector<1x24x32xbf16>
    %6 = vector.shape_cast %5 : vector<1x24x32xbf16> to vector<24x32xbf16>
    %cst_6 = arith.constant dense<0.000000e+00> : vector<256x32xf32>
    %7 = tpu.matmul %4, %6, %cst_6 {dimension_numbers = #tpu.dot_dimension_numbers<[1], [0], [0], [1], [0, 0, 1, 1], [], []>} : vector<256x24xbf16>, vector<24x32xbf16>, vector<256x32xf32> -> vector<256x32xf32>
    %8 = arith.addf %2, %7 : vector<256x32xf32>
    %9 = vector.extract_strided_slice %1 {offsets = [1, 0, 0], sizes = [16, 16, 24], strides = [1, 1, 1]} : vector<17x16x24xbf16> to vector<16x16x24xbf16>
    %10 = vector.shape_cast %9 : vector<16x16x24xbf16> to vector<256x24xbf16>
    %c1 = arith.constant 1 : index
    %c0_7 = arith.constant 0 : index
    %c0_8 = arith.constant 0 : index
    %11 = vector.load %arg2[%c1, %c0_7, %c0_8] : memref<2x24x32xbf16, #tpu.memory_space<vmem>>, vector<1x24x32xbf16>
    %12 = vector.shape_cast %11 : vector<1x24x32xbf16> to vector<24x32xbf16>
    %cst_9 = arith.constant dense<0.000000e+00> : vector<256x32xf32>
    %13 = tpu.matmul %10, %12, %cst_9 {dimension_numbers = #tpu.dot_dimension_numbers<[1], [0], [0], [1], [0, 0, 1, 1], [], []>} : vector<256x24xbf16>, vector<24x32xbf16>, vector<256x32xf32> -> vector<256x32xf32>
    %14 = arith.addf %8, %13 : vector<256x32xf32>
    %c0_10 = arith.constant 0 : index
    %c0_11 = arith.constant 0 : index
    %15 = vector.load %arg3[%c0_10, %c0_11] : memref<1x32xf32, #tpu.memory_space<vmem>>, vector<1x32xf32>
    %16 = vector.broadcast %15 : vector<1x32xf32> to vector<256x32xf32>
    %17 = arith.addf %14, %16 : vector<256x32xf32>
    %cst_12 = arith.constant 0.000000e+00 : f32
    %18 = vector.broadcast %cst_12 : f32 to vector<256x32xf32>
    %19 = arith.maximumf %17, %18 : vector<256x32xf32>
    %20 = vector.shape_cast %19 : vector<256x32xf32> to vector<16x16x32xf32>
    %21 = arith.truncf %20 : vector<16x16x32xf32> to vector<16x16x32xbf16>
    %c0_13 = arith.constant 0 : index
    %c0_14 = arith.constant 0 : index
    %c0_15 = arith.constant 0 : index
    %c0_16 = arith.constant 0 : index
    %22 = vector.load %arg4[%c0_13, %c0_14, %c0_15, %c0_16] : memref<1x16x16x32xbf16, #tpu.memory_space<vmem>>, vector<1x16x16x32xbf16>
    %23 = vector.shape_cast %22 : vector<1x16x16x32xbf16> to vector<16x16x32xbf16>
    %24 = vector.shape_cast %21 : vector<16x16x32xbf16> to vector<1x16x16x32xbf16>
    tpu.vector_store %arg4[%c0_13, %c0_14, %c0_15, %c0_16], %24 {strides = array<i32>} : memref<1x16x16x32xbf16, #tpu.memory_space<vmem>>, vector<1x16x16x32xbf16>,
    return
  }
  func.func @transform_0(%arg0: i32) -> (i32, i32, i32, i32) {
    %c0_i32 = arith.constant 0 : i32
    %c0_i32_0 = arith.constant 0 : i32
    %c0_i32_1 = arith.constant 0 : i32
    %c0_i32_2 = arith.constant 0 : i32
    return %arg0, %c0_i32, %c0_i32_0, %c0_i32_1 : i32, i32, i32, i32
  }
  func.func @transform_1(%arg0: i32) -> (i32, i32, i32) {
    %c0_i32 = arith.constant 0 : i32
    %c0_i32_0 = arith.constant 0 : i32
    %c0_i32_1 = arith.constant 0 : i32
    %c0_i32_2 = arith.constant 0 : i32
    return %c0_i32, %c0_i32_0, %c0_i32_1 : i32, i32, i32
  }
  func.func @transform_2(%arg0: i32) -> (i32, i32) {
    %c0_i32 = arith.constant 0 : i32
    %c0_i32_0 = arith.constant 0 : i32
    %c0_i32_1 = arith.constant 0 : i32
    return %c0_i32, %c0_i32_0 : i32, i32
  }
  func.func @transform_3(%arg0: i32) -> (i32, i32, i32, i32) {
    %c0_i32 = arith.constant 0 : i32
    %c0_i32_0 = arith.constant 0 : i32
    %c0_i32_1 = arith.constant 0 : i32
    %c0_i32_2 = arith.constant 0 : i32
    return %arg0, %c0_i32, %c0_i32_0, %c0_i32_1 : i32, i32, i32, i32
  }
}

module attributes {stable_mosaic.version = 11 : i64} {
  func.func @_htap_conv_kernel(%arg0: i32, %arg1: memref<1x18x16x96xbf16, #tpu.memory_space<vmem>>, %arg2: memref<3x96x32xbf16, #tpu.memory_space<vmem>>, %arg3: memref<1x32xf32, #tpu.memory_space<vmem>>, %arg4: memref<1x16x16x32xbf16, #tpu.memory_space<vmem>>) attributes {dimension_semantics = [#tpu.dimension_semantics<parallel>], iteration_bounds = array<i64: 2>, scalar_prefetch = 0 : i64, scratch_operands = 0 : i64, tpu.core_type = #tpu.core_type<tc>, window_params = [{transform_indices = @transform_0, window_bounds = array<i64: 1, 18, 16, 96>}, {pipeline_mode = #tpu.pipeline_mode<synchronous>, transform_indices = @transform_1, window_bounds = array<i64: 3, 96, 32>}, {pipeline_mode = #tpu.pipeline_mode<synchronous>, transform_indices = @transform_2, window_bounds = array<i64: 1, 32>}, {transform_indices = @transform_3, window_bounds = array<i64: 1, 16, 16, 32>}]} {
    %c0 = arith.constant 0 : index
    %c0_0 = arith.constant 0 : index
    %c0_1 = arith.constant 0 : index
    %c0_2 = arith.constant 0 : index
    %0 = vector.load %arg1[%c0, %c0_0, %c0_1, %c0_2] : memref<1x18x16x96xbf16, #tpu.memory_space<vmem>>, vector<1x18x16x96xbf16>
    %1 = vector.shape_cast %0 : vector<1x18x16x96xbf16> to vector<18x16x96xbf16>
    %cst = arith.constant 0.000000e+00 : f32
    %2 = vector.broadcast %cst : f32 to vector<256x32xf32>
    %3 = vector.extract_strided_slice %1 {offsets = [0, 0, 0], sizes = [16, 16, 96], strides = [1, 1, 1]} : vector<18x16x96xbf16> to vector<16x16x96xbf16>
    %4 = vector.shape_cast %3 : vector<16x16x96xbf16> to vector<256x96xbf16>
    %c0_3 = arith.constant 0 : index
    %c0_4 = arith.constant 0 : index
    %c0_5 = arith.constant 0 : index
    %5 = vector.load %arg2[%c0_3, %c0_4, %c0_5] : memref<3x96x32xbf16, #tpu.memory_space<vmem>>, vector<1x96x32xbf16>
    %6 = vector.shape_cast %5 : vector<1x96x32xbf16> to vector<96x32xbf16>
    %cst_6 = arith.constant dense<0.000000e+00> : vector<256x32xf32>
    %7 = tpu.matmul %4, %6, %cst_6 {dimension_numbers = #tpu.dot_dimension_numbers<[1], [0], [0], [1], [0, 0, 1, 1], [], []>} : vector<256x96xbf16>, vector<96x32xbf16>, vector<256x32xf32> -> vector<256x32xf32>
    %8 = arith.addf %2, %7 : vector<256x32xf32>
    %9 = vector.extract_strided_slice %1 {offsets = [1, 0, 0], sizes = [16, 16, 96], strides = [1, 1, 1]} : vector<18x16x96xbf16> to vector<16x16x96xbf16>
    %10 = vector.shape_cast %9 : vector<16x16x96xbf16> to vector<256x96xbf16>
    %c1 = arith.constant 1 : index
    %c0_7 = arith.constant 0 : index
    %c0_8 = arith.constant 0 : index
    %11 = vector.load %arg2[%c1, %c0_7, %c0_8] : memref<3x96x32xbf16, #tpu.memory_space<vmem>>, vector<1x96x32xbf16>
    %12 = vector.shape_cast %11 : vector<1x96x32xbf16> to vector<96x32xbf16>
    %cst_9 = arith.constant dense<0.000000e+00> : vector<256x32xf32>
    %13 = tpu.matmul %10, %12, %cst_9 {dimension_numbers = #tpu.dot_dimension_numbers<[1], [0], [0], [1], [0, 0, 1, 1], [], []>} : vector<256x96xbf16>, vector<96x32xbf16>, vector<256x32xf32> -> vector<256x32xf32>
    %14 = arith.addf %8, %13 : vector<256x32xf32>
    %15 = vector.extract_strided_slice %1 {offsets = [2, 0, 0], sizes = [16, 16, 96], strides = [1, 1, 1]} : vector<18x16x96xbf16> to vector<16x16x96xbf16>
    %16 = vector.shape_cast %15 : vector<16x16x96xbf16> to vector<256x96xbf16>
    %c2 = arith.constant 2 : index
    %c0_10 = arith.constant 0 : index
    %c0_11 = arith.constant 0 : index
    %17 = vector.load %arg2[%c2, %c0_10, %c0_11] : memref<3x96x32xbf16, #tpu.memory_space<vmem>>, vector<1x96x32xbf16>
    %18 = vector.shape_cast %17 : vector<1x96x32xbf16> to vector<96x32xbf16>
    %cst_12 = arith.constant dense<0.000000e+00> : vector<256x32xf32>
    %19 = tpu.matmul %16, %18, %cst_12 {dimension_numbers = #tpu.dot_dimension_numbers<[1], [0], [0], [1], [0, 0, 1, 1], [], []>} : vector<256x96xbf16>, vector<96x32xbf16>, vector<256x32xf32> -> vector<256x32xf32>
    %20 = arith.addf %14, %19 : vector<256x32xf32>
    %c0_13 = arith.constant 0 : index
    %c0_14 = arith.constant 0 : index
    %21 = vector.load %arg3[%c0_13, %c0_14] : memref<1x32xf32, #tpu.memory_space<vmem>>, vector<1x32xf32>
    %22 = vector.broadcast %21 : vector<1x32xf32> to vector<256x32xf32>
    %23 = arith.addf %20, %22 : vector<256x32xf32>
    %cst_15 = arith.constant 0.000000e+00 : f32
    %24 = vector.broadcast %cst_15 : f32 to vector<256x32xf32>
    %25 = arith.maximumf %23, %24 : vector<256x32xf32>
    %26 = vector.shape_cast %25 : vector<256x32xf32> to vector<16x16x32xf32>
    %27 = arith.truncf %26 : vector<16x16x32xf32> to vector<16x16x32xbf16>
    %c0_16 = arith.constant 0 : index
    %c0_17 = arith.constant 0 : index
    %c0_18 = arith.constant 0 : index
    %c0_19 = arith.constant 0 : index
    %28 = vector.load %arg4[%c0_16, %c0_17, %c0_18, %c0_19] : memref<1x16x16x32xbf16, #tpu.memory_space<vmem>>, vector<1x16x16x32xbf16>
    %29 = vector.shape_cast %28 : vector<1x16x16x32xbf16> to vector<16x16x32xbf16>
    %30 = vector.shape_cast %27 : vector<16x16x32xbf16> to vector<1x16x16x32xbf16>
    tpu.vector_store %arg4[%c0_16, %c0_17, %c0_18, %c0_19], %30 {strides = array<i32>} : memref<1x16x16x32xbf16, #tpu.memory_space<vmem>>, vector<1x16x16x32xbf16>,
    return
  }
  func.func @transform_0(%arg0: i32) -> (i32, i32, i32, i32) {
    %c0_i32 = arith.constant 0 : i32
    %c0_i32_0 = arith.constant 0 : i32
    %c0_i32_1 = arith.constant 0 : i32
    %c0_i32_2 = arith.constant 0 : i32
    return %arg0, %c0_i32, %c0_i32_0, %c0_i32_1 : i32, i32, i32, i32
  }
  func.func @transform_1(%arg0: i32) -> (i32, i32, i32) {
    %c0_i32 = arith.constant 0 : i32
    %c0_i32_0 = arith.constant 0 : i32
    %c0_i32_1 = arith.constant 0 : i32
    %c0_i32_2 = arith.constant 0 : i32
    return %c0_i32, %c0_i32_0, %c0_i32_1 : i32, i32, i32
  }
  func.func @transform_2(%arg0: i32) -> (i32, i32) {
    %c0_i32 = arith.constant 0 : i32
    %c0_i32_0 = arith.constant 0 : i32
    %c0_i32_1 = arith.constant 0 : i32
    return %c0_i32, %c0_i32_0 : i32, i32
  }
  func.func @transform_3(%arg0: i32) -> (i32, i32, i32, i32) {
    %c0_i32 = arith.constant 0 : i32
    %c0_i32_0 = arith.constant 0 : i32
    %c0_i32_1 = arith.constant 0 : i32
    %c0_i32_2 = arith.constant 0 : i32
    return %arg0, %c0_i32, %c0_i32_0, %c0_i32_1 : i32, i32, i32, i32
  }
}

module attributes {stable_mosaic.version = 11 : i64} {
  func.func @_rpn_fused_kernel(%arg0: i32, %arg1: memref<1x18x16x96xbf16, #tpu.memory_space<vmem>>, %arg2: memref<3x96x32xbf16, #tpu.memory_space<vmem>>, %arg3: memref<1x32xf32, #tpu.memory_space<vmem>>, %arg4: memref<32x16xbf16, #tpu.memory_space<vmem>>, %arg5: memref<1x16xf32, #tpu.memory_space<vmem>>, %arg6: memref<1x16x16x16xf32, #tpu.memory_space<vmem>>) attributes {dimension_semantics = [#tpu.dimension_semantics<parallel>], iteration_bounds = array<i64: 2>, scalar_prefetch = 0 : i64, scratch_operands = 0 : i64, tpu.core_type = #tpu.core_type<tc>, window_params = [{transform_indices = @transform_0, window_bounds = array<i64: 1, 18, 16, 96>}, {pipeline_mode = #tpu.pipeline_mode<synchronous>, transform_indices = @transform_1, window_bounds = array<i64: 3, 96, 32>}, {pipeline_mode = #tpu.pipeline_mode<synchronous>, transform_indices = @transform_2, window_bounds = array<i64: 1, 32>}, {pipeline_mode = #tpu.pipeline_mode<synchronous>, transform_indices = @transform_3, window_bounds = array<i64: 32, 16>}, {pipeline_mode = #tpu.pipeline_mode<synchronous>, transform_indices = @transform_4, window_bounds = array<i64: 1, 16>}, {transform_indices = @transform_5, window_bounds = array<i64: 1, 16, 16, 16>}]} {
    %c0 = arith.constant 0 : index
    %c0_0 = arith.constant 0 : index
    %c0_1 = arith.constant 0 : index
    %c0_2 = arith.constant 0 : index
    %0 = vector.load %arg1[%c0, %c0_0, %c0_1, %c0_2] : memref<1x18x16x96xbf16, #tpu.memory_space<vmem>>, vector<1x18x16x96xbf16>
    %1 = vector.shape_cast %0 : vector<1x18x16x96xbf16> to vector<18x16x96xbf16>
    %cst = arith.constant 0.000000e+00 : f32
    %2 = vector.broadcast %cst : f32 to vector<256x32xf32>
    %3 = vector.extract_strided_slice %1 {offsets = [0, 0, 0], sizes = [16, 16, 96], strides = [1, 1, 1]} : vector<18x16x96xbf16> to vector<16x16x96xbf16>
    %4 = vector.shape_cast %3 : vector<16x16x96xbf16> to vector<256x96xbf16>
    %c0_3 = arith.constant 0 : index
    %c0_4 = arith.constant 0 : index
    %c0_5 = arith.constant 0 : index
    %5 = vector.load %arg2[%c0_3, %c0_4, %c0_5] : memref<3x96x32xbf16, #tpu.memory_space<vmem>>, vector<1x96x32xbf16>
    %6 = vector.shape_cast %5 : vector<1x96x32xbf16> to vector<96x32xbf16>
    %cst_6 = arith.constant dense<0.000000e+00> : vector<256x32xf32>
    %7 = tpu.matmul %4, %6, %cst_6 {dimension_numbers = #tpu.dot_dimension_numbers<[1], [0], [0], [1], [0, 0, 1, 1], [], []>} : vector<256x96xbf16>, vector<96x32xbf16>, vector<256x32xf32> -> vector<256x32xf32>
    %8 = arith.addf %2, %7 : vector<256x32xf32>
    %9 = vector.extract_strided_slice %1 {offsets = [1, 0, 0], sizes = [16, 16, 96], strides = [1, 1, 1]} : vector<18x16x96xbf16> to vector<16x16x96xbf16>
    %10 = vector.shape_cast %9 : vector<16x16x96xbf16> to vector<256x96xbf16>
    %c1 = arith.constant 1 : index
    %c0_7 = arith.constant 0 : index
    %c0_8 = arith.constant 0 : index
    %11 = vector.load %arg2[%c1, %c0_7, %c0_8] : memref<3x96x32xbf16, #tpu.memory_space<vmem>>, vector<1x96x32xbf16>
    %12 = vector.shape_cast %11 : vector<1x96x32xbf16> to vector<96x32xbf16>
    %cst_9 = arith.constant dense<0.000000e+00> : vector<256x32xf32>
    %13 = tpu.matmul %10, %12, %cst_9 {dimension_numbers = #tpu.dot_dimension_numbers<[1], [0], [0], [1], [0, 0, 1, 1], [], []>} : vector<256x96xbf16>, vector<96x32xbf16>, vector<256x32xf32> -> vector<256x32xf32>
    %14 = arith.addf %8, %13 : vector<256x32xf32>
    %15 = vector.extract_strided_slice %1 {offsets = [2, 0, 0], sizes = [16, 16, 96], strides = [1, 1, 1]} : vector<18x16x96xbf16> to vector<16x16x96xbf16>
    %16 = vector.shape_cast %15 : vector<16x16x96xbf16> to vector<256x96xbf16>
    %c2 = arith.constant 2 : index
    %c0_10 = arith.constant 0 : index
    %c0_11 = arith.constant 0 : index
    %17 = vector.load %arg2[%c2, %c0_10, %c0_11] : memref<3x96x32xbf16, #tpu.memory_space<vmem>>, vector<1x96x32xbf16>
    %18 = vector.shape_cast %17 : vector<1x96x32xbf16> to vector<96x32xbf16>
    %cst_12 = arith.constant dense<0.000000e+00> : vector<256x32xf32>
    %19 = tpu.matmul %16, %18, %cst_12 {dimension_numbers = #tpu.dot_dimension_numbers<[1], [0], [0], [1], [0, 0, 1, 1], [], []>} : vector<256x96xbf16>, vector<96x32xbf16>, vector<256x32xf32> -> vector<256x32xf32>
    %20 = arith.addf %14, %19 : vector<256x32xf32>
    %c0_13 = arith.constant 0 : index
    %c0_14 = arith.constant 0 : index
    %21 = vector.load %arg3[%c0_13, %c0_14] : memref<1x32xf32, #tpu.memory_space<vmem>>, vector<1x32xf32>
    %22 = vector.broadcast %21 : vector<1x32xf32> to vector<256x32xf32>
    %23 = arith.addf %20, %22 : vector<256x32xf32>
    %cst_15 = arith.constant 0.000000e+00 : f32
    %24 = vector.broadcast %cst_15 : f32 to vector<256x32xf32>
    %25 = arith.maximumf %23, %24 : vector<256x32xf32>
    %26 = arith.truncf %25 : vector<256x32xf32> to vector<256x32xbf16>
    %c0_16 = arith.constant 0 : index
    %c0_17 = arith.constant 0 : index
    %27 = vector.load %arg4[%c0_16, %c0_17] : memref<32x16xbf16, #tpu.memory_space<vmem>>, vector<32x16xbf16>
    %cst_18 = arith.constant dense<0.000000e+00> : vector<256x16xf32>
    %28 = tpu.matmul %26, %27, %cst_18 {dimension_numbers = #tpu.dot_dimension_numbers<[1], [0], [0], [1], [0, 0, 1, 1], [], []>} : vector<256x32xbf16>, vector<32x16xbf16>, vector<256x16xf32> -> vector<256x16xf32>
    %c0_19 = arith.constant 0 : index
    %c0_20 = arith.constant 0 : index
    %29 = vector.load %arg5[%c0_19, %c0_20] : memref<1x16xf32, #tpu.memory_space<vmem>>, vector<1x16xf32>
    %30 = vector.broadcast %29 : vector<1x16xf32> to vector<256x16xf32>
    %31 = arith.addf %28, %30 : vector<256x16xf32>
    %32 = vector.shape_cast %31 : vector<256x16xf32> to vector<16x16x16xf32>
    %c0_21 = arith.constant 0 : index
    %c0_22 = arith.constant 0 : index
    %c0_23 = arith.constant 0 : index
    %c0_24 = arith.constant 0 : index
    %33 = vector.load %arg6[%c0_21, %c0_22, %c0_23, %c0_24] : memref<1x16x16x16xf32, #tpu.memory_space<vmem>>, vector<1x16x16x16xf32>
    %34 = vector.shape_cast %33 : vector<1x16x16x16xf32> to vector<16x16x16xf32>
    %35 = vector.shape_cast %32 : vector<16x16x16xf32> to vector<1x16x16x16xf32>
    tpu.vector_store %arg6[%c0_21, %c0_22, %c0_23, %c0_24], %35 {strides = array<i32>} : memref<1x16x16x16xf32, #tpu.memory_space<vmem>>, vector<1x16x16x16xf32>,
    return
  }
  func.func @transform_0(%arg0: i32) -> (i32, i32, i32, i32) {
    %c0_i32 = arith.constant 0 : i32
    %c0_i32_0 = arith.constant 0 : i32
    %c0_i32_1 = arith.constant 0 : i32
    %c0_i32_2 = arith.constant 0 : i32
    return %arg0, %c0_i32, %c0_i32_0, %c0_i32_1 : i32, i32, i32, i32
  }
  func.func @transform_1(%arg0: i32) -> (i32, i32, i32) {
    %c0_i32 = arith.constant 0 : i32
    %c0_i32_0 = arith.constant 0 : i32
    %c0_i32_1 = arith.constant 0 : i32
    %c0_i32_2 = arith.constant 0 : i32
    return %c0_i32, %c0_i32_0, %c0_i32_1 : i32, i32, i32
  }
  func.func @transform_2(%arg0: i32) -> (i32, i32) {
    %c0_i32 = arith.constant 0 : i32
    %c0_i32_0 = arith.constant 0 : i32
    %c0_i32_1 = arith.constant 0 : i32
    return %c0_i32, %c0_i32_0 : i32, i32
  }
  func.func @transform_3(%arg0: i32) -> (i32, i32) {
    %c0_i32 = arith.constant 0 : i32
    %c0_i32_0 = arith.constant 0 : i32
    %c0_i32_1 = arith.constant 0 : i32
    return %c0_i32, %c0_i32_0 : i32, i32
  }
  func.func @transform_4(%arg0: i32) -> (i32, i32) {
    %c0_i32 = arith.constant 0 : i32
    %c0_i32_0 = arith.constant 0 : i32
    %c0_i32_1 = arith.constant 0 : i32
    return %c0_i32, %c0_i32_0 : i32, i32
  }
  func.func @transform_5(%arg0: i32) -> (i32, i32, i32, i32) {
    %c0_i32 = arith.constant 0 : i32
    %c0_i32_0 = arith.constant 0 : i32
    %c0_i32_1 = arith.constant 0 : i32
    %c0_i32_2 = arith.constant 0 : i32
    return %arg0, %c0_i32, %c0_i32_0, %c0_i32_1 : i32, i32, i32, i32
  }
}

module attributes {stable_mosaic.version = 11 : i64} {
  func.func @_box_head_kernel(%arg0: i32, %arg1: memref<16x1568xbf16, #tpu.memory_space<vmem>>, %arg2: memref<1568x128xbf16, #tpu.memory_space<vmem>>, %arg3: memref<1x128xf32, #tpu.memory_space<vmem>>, %arg4: memref<128x128xbf16, #tpu.memory_space<vmem>>, %arg5: memref<1x128xf32, #tpu.memory_space<vmem>>, %arg6: memref<128x48xbf16, #tpu.memory_space<vmem>>, %arg7: memref<1x48xf32, #tpu.memory_space<vmem>>, %arg8: memref<16x48xf32, #tpu.memory_space<vmem>>) attributes {dimension_semantics = [#tpu.dimension_semantics<parallel>], iteration_bounds = array<i64: 1>, scalar_prefetch = 0 : i64, scratch_operands = 0 : i64, tpu.core_type = #tpu.core_type<tc>, window_params = [{transform_indices = @transform_0, window_bounds = array<i64: 16, 1568>}, {pipeline_mode = #tpu.pipeline_mode<synchronous>, transform_indices = @transform_1, window_bounds = array<i64: 1568, 128>}, {pipeline_mode = #tpu.pipeline_mode<synchronous>, transform_indices = @transform_2, window_bounds = array<i64: 1, 128>}, {pipeline_mode = #tpu.pipeline_mode<synchronous>, transform_indices = @transform_3, window_bounds = array<i64: 128, 128>}, {pipeline_mode = #tpu.pipeline_mode<synchronous>, transform_indices = @transform_4, window_bounds = array<i64: 1, 128>}, {pipeline_mode = #tpu.pipeline_mode<synchronous>, transform_indices = @transform_5, window_bounds = array<i64: 128, 48>}, {pipeline_mode = #tpu.pipeline_mode<synchronous>, transform_indices = @transform_6, window_bounds = array<i64: 1, 48>}, {transform_indices = @transform_7, window_bounds = array<i64: 16, 48>}]} {
    %c0 = arith.constant 0 : index
    %c0_0 = arith.constant 0 : index
    %0 = vector.load %arg1[%c0, %c0_0] : memref<16x1568xbf16, #tpu.memory_space<vmem>>, vector<16x1568xbf16>
    %c0_1 = arith.constant 0 : index
    %c0_2 = arith.constant 0 : index
    %1 = vector.load %arg2[%c0_1, %c0_2] : memref<1568x128xbf16, #tpu.memory_space<vmem>>, vector<1568x128xbf16>
    %cst = arith.constant dense<0.000000e+00> : vector<16x128xf32>
    %2 = tpu.matmul %0, %1, %cst {dimension_numbers = #tpu.dot_dimension_numbers<[1], [0], [0], [1], [0, 0, 1, 1], [], []>} : vector<16x1568xbf16>, vector<1568x128xbf16>, vector<16x128xf32> -> vector<16x128xf32>
    %c0_3 = arith.constant 0 : index
    %c0_4 = arith.constant 0 : index
    %3 = vector.load %arg3[%c0_3, %c0_4] : memref<1x128xf32, #tpu.memory_space<vmem>>, vector<1x128xf32>
    %4 = vector.broadcast %3 : vector<1x128xf32> to vector<16x128xf32>
    %5 = arith.addf %2, %4 : vector<16x128xf32>
    %cst_5 = arith.constant 0.000000e+00 : f32
    %6 = vector.broadcast %cst_5 : f32 to vector<16x128xf32>
    %7 = arith.maximumf %5, %6 : vector<16x128xf32>
    %8 = arith.truncf %7 : vector<16x128xf32> to vector<16x128xbf16>
    %c0_6 = arith.constant 0 : index
    %c0_7 = arith.constant 0 : index
    %9 = vector.load %arg4[%c0_6, %c0_7] : memref<128x128xbf16, #tpu.memory_space<vmem>>, vector<128x128xbf16>
    %cst_8 = arith.constant dense<0.000000e+00> : vector<16x128xf32>
    %10 = tpu.matmul %8, %9, %cst_8 {dimension_numbers = #tpu.dot_dimension_numbers<[1], [0], [0], [1], [0, 0, 1, 1], [], []>} : vector<16x128xbf16>, vector<128x128xbf16>, vector<16x128xf32> -> vector<16x128xf32>
    %c0_9 = arith.constant 0 : index
    %c0_10 = arith.constant 0 : index
    %11 = vector.load %arg5[%c0_9, %c0_10] : memref<1x128xf32, #tpu.memory_space<vmem>>, vector<1x128xf32>
    %12 = vector.broadcast %11 : vector<1x128xf32> to vector<16x128xf32>
    %13 = arith.addf %10, %12 : vector<16x128xf32>
    %cst_11 = arith.constant 0.000000e+00 : f32
    %14 = vector.broadcast %cst_11 : f32 to vector<16x128xf32>
    %15 = arith.maximumf %13, %14 : vector<16x128xf32>
    %16 = arith.truncf %15 : vector<16x128xf32> to vector<16x128xbf16>
    %c0_12 = arith.constant 0 : index
    %c0_13 = arith.constant 0 : index
    %17 = vector.load %arg6[%c0_12, %c0_13] : memref<128x48xbf16, #tpu.memory_space<vmem>>, vector<128x48xbf16>
    %cst_14 = arith.constant dense<0.000000e+00> : vector<16x48xf32>
    %18 = tpu.matmul %16, %17, %cst_14 {dimension_numbers = #tpu.dot_dimension_numbers<[1], [0], [0], [1], [0, 0, 1, 1], [], []>} : vector<16x128xbf16>, vector<128x48xbf16>, vector<16x48xf32> -> vector<16x48xf32>
    %c0_15 = arith.constant 0 : index
    %c0_16 = arith.constant 0 : index
    %19 = vector.load %arg7[%c0_15, %c0_16] : memref<1x48xf32, #tpu.memory_space<vmem>>, vector<1x48xf32>
    %20 = vector.broadcast %19 : vector<1x48xf32> to vector<16x48xf32>
    %21 = arith.addf %18, %20 : vector<16x48xf32>
    %c0_17 = arith.constant 0 : index
    %c0_18 = arith.constant 0 : index
    %22 = vector.load %arg8[%c0_17, %c0_18] : memref<16x48xf32, #tpu.memory_space<vmem>>, vector<16x48xf32>
    tpu.vector_store %arg8[%c0_17, %c0_18], %21 {strides = array<i32>} : memref<16x48xf32, #tpu.memory_space<vmem>>, vector<16x48xf32>,
    return
  }
  func.func @transform_0(%arg0: i32) -> (i32, i32) {
    %c0_i32 = arith.constant 0 : i32
    %c0_i32_0 = arith.constant 0 : i32
    return %arg0, %c0_i32 : i32, i32
  }
  func.func @transform_1(%arg0: i32) -> (i32, i32) {
    %c0_i32 = arith.constant 0 : i32
    %c0_i32_0 = arith.constant 0 : i32
    %c0_i32_1 = arith.constant 0 : i32
    return %c0_i32, %c0_i32_0 : i32, i32
  }
  func.func @transform_2(%arg0: i32) -> (i32, i32) {
    %c0_i32 = arith.constant 0 : i32
    %c0_i32_0 = arith.constant 0 : i32
    %c0_i32_1 = arith.constant 0 : i32
    return %c0_i32, %c0_i32_0 : i32, i32
  }
  func.func @transform_3(%arg0: i32) -> (i32, i32) {
    %c0_i32 = arith.constant 0 : i32
    %c0_i32_0 = arith.constant 0 : i32
    %c0_i32_1 = arith.constant 0 : i32
    return %c0_i32, %c0_i32_0 : i32, i32
  }
  func.func @transform_4(%arg0: i32) -> (i32, i32) {
    %c0_i32 = arith.constant 0 : i32
    %c0_i32_0 = arith.constant 0 : i32
    %c0_i32_1 = arith.constant 0 : i32
    return %c0_i32, %c0_i32_0 : i32, i32
  }
  func.func @transform_5(%arg0: i32) -> (i32, i32) {
    %c0_i32 = arith.constant 0 : i32
    %c0_i32_0 = arith.constant 0 : i32
    %c0_i32_1 = arith.constant 0 : i32
    return %c0_i32, %c0_i32_0 : i32, i32
  }
  func.func @transform_6(%arg0: i32) -> (i32, i32) {
    %c0_i32 = arith.constant 0 : i32
    %c0_i32_0 = arith.constant 0 : i32
    %c0_i32_1 = arith.constant 0 : i32
    return %c0_i32, %c0_i32_0 : i32, i32
  }
  func.func @transform_7(%arg0: i32) -> (i32, i32) {
    %c0_i32 = arith.constant 0 : i32
    %c0_i32_0 = arith.constant 0 : i32
    return %arg0, %c0_i32 : i32, i32
  }
}

</mosaic_0001>

<llo_original>
// kernel: teacher_forward.4
$region0: #{teacher_forward.4}
  #allocation0 [shape = 'u32[]', space=smem, size = 0x4, offset = 0x4, fixed_abs, tag = 'smem constant byte address 0x4 - core index']
  #allocation1 [shape = 'u32[144,128]{1,0:T(1,128)}', space=vmem, size = 0x12000, scoped, tag = 'internal scratch']
  %s0 = inlined_call_operand.vmem [shape: bf16[2,17,16,24], index: 0, kind: input, shape index: {}]
  %s1 = inlined_call_operand.vmem [shape: bf16[2,24,32], index: 1, kind: input, shape index: {}]
  %s2 = inlined_call_operand.vmem [shape: f32[1,32], index: 2, kind: input, shape index: {}]
  %s3 = inlined_call_operand.vmem [shape: bf16[2,16,16,32], index: 3, kind: output, shape index: {}]
  %s4 = sld [smem:[#allocation0]]
  $region45: #{teacher_forward.4} parent=0
    _
  %s6 = ssub.s32 1, %s4
  %s7 = scalar_select 0, %s6, %s4
  loop: start=0, step=1, limit=4
  $region2: #{teacher_forward.4} parent=0 // loop_pre_header
    _
  $region3: #{teacher_forward.4} parent=0 // loop_header
    %s9 = sphi 0, %s13
    %p10 = scmp.ge.s32.totalorder %s9, 4
    %s19 = sphi 0, %s21
    %s22 = sphi 0, %s19
    %s23 = sphi 0, %s22
    %s39 = sphi 0, %s23
    %s43 = sphi 0, %s43
    %s45 = sphi 0, %s43
    %s46 = sphi 0, %s45
    %s60 = sphi 0, %s46
    %s64 = sphi 0, %s64
    %s66 = sphi 0, %s64
    %s67 = sphi 0, %s66
    %s81 = sphi 0, %s67
    %s87 = sphi 0, %s89
    %s90 = sphi 0, %s87
    %s91 = sphi 0, %s90
    %s107 = sphi 0, %s91
  $region4: #{teacher_forward.4} parent=0 // loop_header_branch
    %12 = sbr.rel (%p10) target = $region8
  $region5: #{teacher_forward.4} parent=0 // loop_body
    %s14 = ssub.s32 %s9, 1
    %s15 = ssub.s32 %s9, 2
    %s16 = sadd.s32 %s9, 1
    %s17 = ssub.s32 %s9, %s16
    %p18 = scmp.eq.s32.totalorder %s17, 0
    %s20 = sadd.s32 %s19, 1
    %s21 = scalar_select %p18, %s19, %s20
    %p24 = pneg %p18
    %p25 = scmp.eq.s32.totalorder %s9, 1
    %p26 = por %p24, %p25
    %p27 = scmp.ne.s32.totalorder %s19, %s22
    %p28 = scmp.eq.s32.totalorder %s9, 0
    %p29 = por %p27, %p28
    %p30 = scmp.ne.s32.totalorder %s19, %s22
    %p31 = scmp.eq.s32.totalorder %s14, 1
    %p32 = por %p30, %p31
    %p33 = scmp.ne.s32.totalorder %s22, %s23
    %p34 = scmp.eq.s32.totalorder %s14, 0
    %p35 = por %p33, %p34
    %p36 = scmp.ne.s32.totalorder %s22, %s23
    %p37 = scmp.eq.s32.totalorder %s15, 1
    %p38 = por %p36, %p37
    %p40 = scmp.ne.s32.totalorder %s23, %s39
    %p41 = scmp.eq.s32.totalorder %s15, 0
    %p42 = por %p40, %p41
    %s44 = sadd.s32 %s43, 1
    %p47 = scmp.eq.s32.totalorder %s9, 1
    %p48 = scmp.ne.s32.totalorder %s43, %s45
    %p49 = scmp.eq.s32.totalorder %s9, 0
    %p50 = por %p48, %p49
    %p51 = scmp.ne.s32.totalorder %s43, %s45
    %p52 = scmp.eq.s32.totalorder %s14, 1
    %p53 = por %p51, %p52
    %p54 = scmp.ne.s32.totalorder %s45, %s46
    %p55 = scmp.eq.s32.totalorder %s14, 0
    %p56 = por %p54, %p55
    %p57 = scmp.ne.s32.totalorder %s45, %s46
    %p58 = scmp.eq.s32.totalorder %s15, 1
    %p59 = por %p57, %p58
    %p61 = scmp.ne.s32.totalorder %s46, %s60
    %p62 = scmp.eq.s32.totalorder %s15, 0
    %p63 = por %p61, %p62
    %s65 = sadd.s32 %s64, 1
    %p68 = scmp.eq.s32.totalorder %s9, 1
    %p69 = scmp.ne.s32.totalorder %s64, %s66
    %p70 = scmp.eq.s32.totalorder %s9, 0
    %p71 = por %p69, %p70
    %p72 = scmp.ne.s32.totalorder %s64, %s66
    %p73 = scmp.eq.s32.totalorder %s14, 1
    %p74 = por %p72, %p73
    %p75 = scmp.ne.s32.totalorder %s66, %s67
    %p76 = scmp.eq.s32.totalorder %s14, 0
    %p77 = por %p75, %p76
    %p78 = scmp.ne.s32.totalorder %s66, %s67
    %p79 = scmp.eq.s32.totalorder %s15, 1
    %p80 = por %p78, %p79
    %p82 = scmp.ne.s32.totalorder %s67, %s81
    %p83 = scmp.eq.s32.totalorder %s15, 0
    %p84 = por %p82, %p83
    %s85 = ssub.s32 %s9, %s16
    %p86 = scmp.eq.s32.totalorder %s85, 0
    %s88 = sadd.s32 %s87, 1
    %s89 = scalar_select %p86, %s87, %s88
    %p92 = pneg %p86
    %p93 = scmp.eq.s32.totalorder %s9, 1
    %p94 = por %p92, %p93
    %p95 = scmp.ne.s32.totalorder %s87, %s90
    %p96 = scmp.eq.s32.totalorder %s9, 0
    %p97 = por %p95, %p96
    %p98 = scmp.ne.s32.totalorder %s87, %s90
    %p99 = scmp.eq.s32.totalorder %s14, 1
    %p100 = por %p98, %p99
    %p101 = scmp.ne.s32.totalorder %s90, %s91
    %p102 = scmp.eq.s32.totalorder %s14, 0
    %p103 = por %p101, %p102
    %p104 = scmp.ne.s32.totalorder %s90, %s91
    %p105 = scmp.eq.s32.totalorder %s15, 1
    %p106 = por %p104, %p105
    %p108 = scmp.ne.s32.totalorder %s91, %s107
    %p109 = scmp.eq.s32.totalorder %s15, 0
    %p110 = por %p108, %p109
    %p111 = scmp.le.s32.totalorder 1, %s9
    %p112 = scmp.lt.s32.totalorder %s9, 3
    %p113 = pnand %p111, %p112
    %p114 = pneg %p113
    // Predicated region
    $region9: #{teacher_forward.4} parent=5 // pred_check
      _
    $region10: #{teacher_forward.4} parent=5 // pred_check_branch
      %116 = sbr.rel (%p113) target = $region12
    $region11: #{teacher_forward.4} parent=5 // pred_region
      %s117 = ssub.s32 %s9, 1
      // Predicated region
      $region13: #{teacher_forward.4} parent=11 // pred_check
        %p118 = pneg %p56
      $region14: #{teacher_forward.4} parent=11 // pred_check_branch
        %120 = sbr.rel (%p118) target = $region16
      $region15: #{teacher_forward.4} parent=11 // pred_region
        _
      $region16: #{teacher_forward.4} parent=11 // pred_fallthru
        _
      // Predicated region
      $region17: #{teacher_forward.4} parent=11 // pred_check
        %p121 = pneg %p77
      $region18: #{teacher_forward.4} parent=11 // pred_check_branch
        %123 = sbr.rel (%p121) target = $region20
      $region19: #{teacher_forward.4} parent=11 // pred_region
        _
      $region20: #{teacher_forward.4} parent=11 // pred_fallthru
        _
    $region12: #{teacher_forward.4} parent=5 // pred_fallthru
      _
    %p124 = scmp.lt.s32.totalorder %s9, 2
    // Predicated region
    $region21: #{teacher_forward.4} parent=5 // pred_check
      %p125 = pneg %p124
    $region22: #{teacher_forward.4} parent=5 // pred_check_branch
      %127 = sbr.rel (%p125) target = $region24
    $region23: #{teacher_forward.4} parent=5 // pred_region
      // Predicated region
      $region25: #{teacher_forward.4} parent=23 // pred_check
        %p128 = pneg %p29
      $region26: #{teacher_forward.4} parent=23 // pred_check_branch
        %130 = sbr.rel (%p128) target = $region28
      $region27: #{teacher_forward.4} parent=23 // pred_region
        %p131 = scmp.lt.s32.totalorder %s9, 1
        %s132 = scalar_select %p131, %s9, 1
        %s133 = smul.addr %s132, 34
        %s134 = smul.addr %s133, 4
        %s135 = scalar_lea.vmem %s0, %s134
      $region28: #{teacher_forward.4} parent=23 // pred_fallthru
        _
    $region24: #{teacher_forward.4} parent=5 // pred_fallthru
      _
    %p136 = scmp.le.s32.totalorder 1, %s9
    %p137 = scmp.lt.s32.totalorder %s9, 3
    %p138 = pnand %p136, %p137
    %p139 = pneg %p138
    // Predicated region
    $region29: #{teacher_forward.4} parent=5 // pred_check
      _
    $region30: #{teacher_forward.4} parent=5 // pred_check_branch
      %141 = sbr.rel (%p138) target = $region32
    $region31: #{teacher_forward.4} parent=5 // pred_region
      %s142 = ssub.s32 %s9, 1
      %p143 = scmp.lt.s32.totalorder %s14, 1
      %s144 = scalar_select %p143, %s14, 1
      %s145 = smul.addr %s144, 34
      %s146 = smul.addr %s145, 4
      %s147 = scalar_lea.vmem %s0, %s146
      %p148 = pneg %p35
      %p149 = pneg %p32
      %p150 = pneg %p56
      %p151 = pneg %p53
      %p152 = pneg %p77
      %p153 = pneg %p74
      %p154 = pneg %p103
      %p155 = pneg %p100
      %p156 = scmp.lt.s32.totalorder %s14, 1
      %s157 = scalar_select %p156, %s14, 1
      %s158 = smul.addr %s157, 32
      %s159 = smul.addr %s158, 4
      %s160 = scalar_lea.vmem %s3, %s159
      %p161 = scmp.lt.s32.totalorder %s14, 1
      %s162 = scalar_select %p161, %s14, 1
      %s163 = smul.addr %s162, 34
      %s164 = smul.addr %s163, 4
      %s165 = scalar_lea.vmem %s0, %s164
      %p166 = scmp.lt.s32.totalorder %s14, 1
      %s167 = scalar_select %p166, %s14, 1
      %s168 = smul.addr %s167, 32
      %s169 = smul.addr %s168, 4
      %s170 = scalar_lea.vmem %s3, %s169
      %v172 = vld [vmem:[%s165] sm:$0xf]
      %v173 = vld [vmem:[%s165 + $0x4] sm:$0xf]
      %v174 = vld [vmem:[%s165 + $0x8] sm:$0xf]
      %v175 = vld [vmem:[%s165 + $0xc] sm:$0xf]
      %v176 = vld [vmem:[%s165 + $0x10] sm:$0xf]
      %v177 = vld [vmem:[%s165 + $0x14] sm:$0xf]
      %v178 = vld [vmem:[%s165 + $0x18] sm:$0xf]
      %v179 = vld [vmem:[%s165 + $0x1c] sm:$0xf]
      %v180 = vld [vmem:[%s165 + $0x20] sm:$0xf]
      %v181 = vld [vmem:[%s165 + $0x24] sm:$0xf]
      %v182 = vld [vmem:[%s165 + $0x28] sm:$0xf]
      %v183 = vld [vmem:[%s165 + $0x2c] sm:$0xf]
      %v184 = vld [vmem:[%s165 + $0x30] sm:$0xf]
      %v185 = vld [vmem:[%s165 + $0x34] sm:$0xf]
      %v186 = vld [vmem:[%s165 + $0x38] sm:$0xf]
      %v187 = vld [vmem:[%s165 + $0x3c] sm:$0xf]
      %v188 = vld [vmem:[%s165 + $0x40] sm:$0xf]
      %v189 = vld [vmem:[%s165 + $0x44] sm:$0xf]
      %v190 = vld [vmem:[%s165 + $0x48] sm:$0xf]
      %v191 = vld [vmem:[%s165 + $0x4c] sm:$0xf]
      %v192 = vld [vmem:[%s165 + $0x50] sm:$0xf]
      %v193 = vld [vmem:[%s165 + $0x54] sm:$0xf]
      %v194 = vld [vmem:[%s165 + $0x58] sm:$0xf]
      %v195 = vld [vmem:[%s165 + $0x5c] sm:$0xf]
      %v196 = vld [vmem:[%s165 + $0x60] sm:$0xf]
      %v197 = vld [vmem:[%s165 + $0x64] sm:$0xf]
      %v198 = vld [vmem:[%s165 + $0x68] sm:$0xf]
      %v199 = vld [vmem:[%s165 + $0x6c] sm:$0xf]
      %v200 = vld [vmem:[%s165 + $0x70] sm:$0xf]
      %v201 = vld [vmem:[%s165 + $0x74] sm:$0xf]
      %v202 = vld [vmem:[%s165 + $0x78] sm:$0xf]
      %v203 = vld [vmem:[%s165 + $0x7c] sm:$0xf]
      %v204 = vld [vmem:[%s165 + $0x80] sm:$0xf]
      %v205 = vld [vmem:[%s165 + $0x84] sm:$0xf]
      %v206 = vld [vmem:[%s1] sm:$0xf]
      %v207 = vld [vmem:[%s1 + $0x4] sm:$0xf]
      %v208 = vld [vmem:[%s1 + $0x8] sm:$0xf]
      %s209 = scalar_lea.vmem %s1, 12
      %v210 = vld [vmem:[%s209] sm:$0xf]
      %v211 = vld [vmem:[%s209 + $0x4] sm:$0xf]
      %v212 = vld [vmem:[%s209 + $0x8] sm:$0xf]
      %v245 = vunpack.c.l.b16 %v174
      %v246 = vunpack.c.l.b16 %v175
      %v247 = vunpack.c.l.b16 %v176
      %v248 = vunpack.c.l.b16 %v177
      %v249 = vunpack.c.l.b16 %v178
      %v250 = vunpack.c.l.b16 %v179
      %v251 = vunpack.c.l.b16 %v180
      %v252 = vunpack.c.l.b16 %v181
      %v253 = vunpack.c.l.b16 %v182
      %v254 = vunpack.c.l.b16 %v183
      %v255 = vunpack.c.l.b16 %v184
      %v256 = vunpack.c.l.b16 %v185
      %v257 = vunpack.c.l.b16 %v186
      %v258 = vunpack.c.l.b16 %v187
      %v259 = vunpack.c.l.b16 %v188
      %v260 = vunpack.c.l.b16 %v189
      %v261 = vunpack.c.l.b16 %v190
      %v262 = vunpack.c.l.b16 %v191
      %v263 = vunpack.c.l.b16 %v192
      %v264 = vunpack.c.l.b16 %v193
      %v265 = vunpack.c.l.b16 %v194
      %v266 = vunpack.c.l.b16 %v195
      %v267 = vunpack.c.l.b16 %v196
      %v268 = vunpack.c.l.b16 %v197
      %v269 = vunpack.c.l.b16 %v198
      %v270 = vunpack.c.l.b16 %v199
      %v271 = vunpack.c.l.b16 %v200
      %v272 = vunpack.c.l.b16 %v201
      %v273 = vunpack.c.l.b16 %v202
      %v274 = vunpack.c.l.b16 %v203
      %v275 = vunpack.c.l.b16 %v204
      %v276 = vunpack.c.l.b16 %v205
      %v277 = vpack.c.b16 %v246, %v245
      %v278 = vpack.c.b16 %v248, %v247
      %v279 = vpack.c.b16 %v250, %v249
      %v280 = vpack.c.b16 %v252, %v251
      %v281 = vpack.c.b16 %v254, %v253
      %v282 = vpack.c.b16 %v256, %v255
      %v283 = vpack.c.b16 %v258, %v257
      %v284 = vpack.c.b16 %v260, %v259
      %v285 = vpack.c.b16 %v262, %v261
      %v286 = vpack.c.b16 %v264, %v263
      %v287 = vpack.c.b16 %v266, %v265
      %v288 = vpack.c.b16 %v268, %v267
      %v289 = vpack.c.b16 %v270, %v269
      %v290 = vpack.c.b16 %v272, %v271
      %v291 = vpack.c.b16 %v274, %v273
      %v292 = vpack.c.b16 %v276, %v275
      %v296 = vunpack.c.l.b16 %v210
      %v297 = vunpack.c.l.b16 %v211
      %v298 = vunpack.c.l.b16 %v212
      %v299 = vpack.c.b16 %v297, %v296
      %v300 = vpack.c.b16 %v298, %v298
      %vm302 = vcmask 195584
      %v304 = vsel %vm302, %v277, 0
      %v307 = vsel %vm302, %v278, 0
      %v310 = vsel %vm302, %v279, 0
      %v313 = vsel %vm302, %v280, 0
      %v316 = vsel %vm302, %v281, 0
      %v319 = vsel %vm302, %v282, 0
      %v322 = vsel %vm302, %v283, 0
      %v325 = vsel %vm302, %v284, 0
      %v328 = vsel %vm302, %v285, 0
      %v331 = vsel %vm302, %v286, 0
      %v334 = vsel %vm302, %v287, 0
      %v337 = vsel %vm302, %v288, 0
      %v340 = vsel %vm302, %v289, 0
      %v343 = vsel %vm302, %v290, 0
      %v346 = vsel %vm302, %v291, 0
      %v349 = vsel %vm302, %v292, 0
      %vm351 = vcmask 1043456
      %v353 = vsel %vm351, %v300, 0
      %355 = vmatprep.subr.bf16.mxu0 0
      %356 = vmatpush1.bf16.msra.mxu0 %v299
      %357 = vmatprep.subr.bf16.mxu0 0
      %358 = vmatpush1.bf16.msra.mxu0 %v353
      %359 = vmatprep.subr.bf16.mxu0 0
      %360 = vmatpush1.bf16.msra.mxu0 0
      %361 = vmatprep.subr.bf16.mxu0 0
      %362 = vmatpush1.bf16.msra.mxu0 0
      %363 = vmatprep.subr.bf16.mxu0 0
      %364 = vmatpush1.bf16.msra.mxu0 0
      %365 = vmatprep.subr.bf16.mxu0 0
      %366 = vmatpush1.bf16.msra.mxu0 0
      %367 = vmatprep.subr.bf16.mxu0 0
      %368 = vmatpush1.bf16.msra.mxu0 0
      %369 = vmatprep.subr.bf16.mxu0 0
      %370 = vmatpush1.bf16.msra.mxu0 0
      %371 = vmatprep.subr.bf16.mxu0 0
      %372 = vmatpush1.bf16.msra.mxu0 0
      %373 = vmatprep.subr.bf16.mxu0 0
      %374 = vmatpush1.bf16.msra.mxu0 0
      %375 = vmatprep.subr.bf16.mxu0 0
      %376 = vmatpush1.bf16.msra.mxu0 0
      %377 = vmatprep.subr.bf16.mxu0 0
      %378 = vmatpush1.bf16.msra.mxu0 0
      %379 = vmatprep.subr.bf16.mxu0 0
      %380 = vmatpush1.bf16.msra.mxu0 0
      %381 = vmatprep.subr.bf16.mxu0 0
      %382 = vmatpush1.bf16.msra.mxu0 0
      %383 = vmatprep.subr.bf16.mxu0 0
      %384 = vmatpush1.bf16.msra.mxu0 0
      %385 = vmatprep.subr.bf16.mxu0 0
      %386 = vmatpush1.bf16.msra.mxu0 0
      %387 = vmatprep.mubr.bf16.mxu0 0
      %388 = vmatmul.mubr.bf16.gmra.mrb[0].mxu0 %v304
      %v389 = vpop.f32.mrb[0].mxu0
      %v390 = vadd.f32 0.0, %v389
      %v391 = vpop.f32.mrb[0].mxu0
      %v392 = vpop.f32.mrb[0].mxu0
      %v393 = vadd.f32 0.0, %v392
      %v394 = vpop.f32.mrb[0].mxu0
      %395 = vmatprep.mubr.bf16.mxu0 0
      %396 = vmatmul.mubr.bf16.gmra.mrb[0].mxu0 %v307
      %v397 = vpop.f32.mrb[0].mxu0
      %v398 = vadd.f32 0.0, %v397
      %v399 = vpop.f32.mrb[0].mxu0
      %v400 = vpop.f32.mrb[0].mxu0
      %v401 = vadd.f32 0.0, %v400
      %v402 = vpop.f32.mrb[0].mxu0
      %403 = vmatprep.mubr.bf16.mxu0 0
      %404 = vmatmul.mubr.bf16.gmra.mrb[0].mxu0 %v310
      %v405 = vpop.f32.mrb[0].mxu0
      %v406 = vadd.f32 0.0, %v405
      %v407 = vpop.f32.mrb[0].mxu0
      %v408 = vpop.f32.mrb[0].mxu0
      %v409 = vadd.f32 0.0, %v408
      %v410 = vpop.f32.mrb[0].mxu0
      %411 = vmatprep.mubr.bf16.mxu0 0
      %412 = vmatmul.mubr.bf16.gmra.mrb[0].mxu0 %v313
      %v413 = vpop.f32.mrb[0].mxu0
      %v414 = vadd.f32 0.0, %v413
      %v415 = vpop.f32.mrb[0].mxu0
      %v416 = vpop.f32.mrb[0].mxu0
      %v417 = vadd.f32 0.0, %v416
      %v418 = vpop.f32.mrb[0].mxu0
      %419 = vmatprep.mubr.bf16.mxu0 0
      %420 = vmatmul.mubr.bf16.gmra.mrb[0].mxu0 %v316
      %v421 = vpop.f32.mrb[0].mxu0
      %v422 = vadd.f32 0.0, %v421
      %v423 = vpop.f32.mrb[0].mxu0
      %v424 = vpop.f32.mrb[0].mxu0
      %v425 = vadd.f32 0.0, %v424
      %v426 = vpop.f32.mrb[0].mxu0
      %427 = vmatprep.mubr.bf16.mxu0 0
      %428 = vmatmul.mubr.bf16.gmra.mrb[0].mxu0 %v319
      %v429 = vpop.f32.mrb[0].mxu0
      %v430 = vadd.f32 0.0, %v429
      %v431 = vpop.f32.mrb[0].mxu0
      %v432 = vpop.f32.mrb[0].mxu0
      %v433 = vadd.f32 0.0, %v432
      %v434 = vpop.f32.mrb[0].mxu0
      %435 = vmatprep.mubr.bf16.mxu0 0
      %436 = vmatmul.mubr.bf16.gmra.mrb[0].mxu0 %v322
      %v437 = vpop.f32.mrb[0].mxu0
      %v438 = vadd.f32 0.0, %v437
      %v439 = vpop.f32.mrb[0].mxu0
      %v440 = vpop.f32.mrb[0].mxu0
      %v441 = vadd.f32 0.0, %v440
      %v442 = vpop.f32.mrb[0].mxu0
      %443 = vmatprep.mubr.bf16.mxu0 0
      %444 = vmatmul.mubr.bf16.gmra.mrb[0].mxu0 %v325
      %v445 = vpop.f32.mrb[0].mxu0
      %v446 = vadd.f32 0.0, %v445
      %v447 = vpop.f32.mrb[0].mxu0
      %v448 = vpop.f32.mrb[0].mxu0
      %v449 = vadd.f32 0.0, %v448
      %v450 = vpop.f32.mrb[0].mxu0
      %451 = vmatprep.mubr.bf16.mxu0 0
      %452 = vmatmul.mubr.bf16.gmra.mrb[0].mxu0 %v328
      %v453 = vpop.f32.mrb[0].mxu0
      %v454 = vadd.f32 0.0, %v453
      %v455 = vpop.f32.mrb[0].mxu0
      %v456 = vpop.f32.mrb[0].mxu0
      %v457 = vadd.f32 0.0, %v456
      %v458 = vpop.f32.mrb[0].mxu0
      %459 = vmatprep.mubr.bf16.mxu0 0
      %460 = vmatmul.mubr.bf16.gmra.mrb[0].mxu0 %v331
      %v461 = vpop.f32.mrb[0].mxu0
      %v462 = vadd.f32 0.0, %v461
      %v463 = vpop.f32.mrb[0].mxu0
      %v464 = vpop.f32.mrb[0].mxu0
      %v465 = vadd.f32 0.0, %v464
      %v466 = vpop.f32.mrb[0].mxu0
      %467 = vmatprep.mubr.bf16.mxu0 0
      %468 = vmatmul.mubr.bf16.gmra.mrb[0].mxu0 %v334
      %v469 = vpop.f32.mrb[0].mxu0
      %v470 = vadd.f32 0.0, %v469
      %v471 = vpop.f32.mrb[0].mxu0
      %v472 = vpop.f32.mrb[0].mxu0
      %v473 = vadd.f32 0.0, %v472
      %v474 = vpop.f32.mrb[0].mxu0
      %475 = vmatprep.mubr.bf16.mxu0 0
      %476 = vmatmul.mubr.bf16.gmra.mrb[0].mxu0 %v337
      %v477 = vpop.f32.mrb[0].mxu0
      %v478 = vadd.f32 0.0, %v477
      %v479 = vpop.f32.mrb[0].mxu0
      %v480 = vpop.f32.mrb[0].mxu0
      %v481 = vadd.f32 0.0, %v480
      %v482 = vpop.f32.mrb[0].mxu0
      %483 = vmatprep.mubr.bf16.mxu0 0
      %484 = vmatmul.mubr.bf16.gmra.mrb[0].mxu0 %v340
      %v485 = vpop.f32.mrb[0].mxu0
      %v486 = vadd.f32 0.0, %v485
      %v487 = vpop.f32.mrb[0].mxu0
      %v488 = vpop.f32.mrb[0].mxu0
      %v489 = vadd.f32 0.0, %v488
      %v490 = vpop.f32.mrb[0].mxu0
      %491 = vmatprep.mubr.bf16.mxu0 0
      %492 = vmatmul.mubr.bf16.gmra.mrb[0].mxu0 %v343
      %v493 = vpop.f32.mrb[0].mxu0
      %v494 = vadd.f32 0.0, %v493
      %v495 = vpop.f32.mrb[0].mxu0
      %v496 = vpop.f32.mrb[0].mxu0
      %v497 = vadd.f32 0.0, %v496
      %v498 = vpop.f32.mrb[0].mxu0
      %499 = vmatprep.mubr.bf16.mxu0 0
      %500 = vmatmul.mubr.bf16.gmra.mrb[0].mxu0 %v346
      %v501 = vpop.f32.mrb[0].mxu0
      %v502 = vadd.f32 0.0, %v501
      %v503 = vpop.f32.mrb[0].mxu0
      %v504 = vpop.f32.mrb[0].mxu0
      %v505 = vadd.f32 0.0, %v504
      %v506 = vpop.f32.mrb[0].mxu0
      %507 = vmatprep.mubr.bf16.mxu0 0
      %508 = vmatmul.mubr.bf16.gmra.mrb[0].mxu0 %v349
      %v509 = vpop.f32.mrb[0].mxu0
      %v510 = vadd.f32 0.0, %v509
      %v511 = vpop.f32.mrb[0].mxu0
      %v512 = vpop.f32.mrb[0].mxu0
      %v513 = vadd.f32 0.0, %v512
      %v514 = vpop.f32.mrb[0].mxu0
      %515 = vdwg.mxu0
      %v518 = vunpack.c.l.b16 %v172
      %v519 = vunpack.c.l.b16 %v173
      %v520 = vpack.c.b16 %v519, %v518
      %v524 = vunpack.c.l.b16 %v206
      %v525 = vunpack.c.l.b16 %v207
      %v526 = vunpack.c.l.b16 %v208
      %v527 = vpack.c.b16 %v525, %v524
      %v528 = vpack.c.b16 %v526, %v526
      %v531 = vsel %vm302, %v520, 0
      %v534 = vsel %vm351, %v528, 0
      %536 = vmatprep.subr.bf16.mxu0 0
      %537 = vmatpush1.bf16.msra.mxu0 %v527
      %538 = vmatprep.subr.bf16.mxu0 0
      %539 = vmatpush1.bf16.msra.mxu0 %v534
      %540 = vmatprep.subr.bf16.mxu0 0
      %541 = vmatpush1.bf16.msra.mxu0 0
      %542 = vmatprep.subr.bf16.mxu0 0
      %543 = vmatpush1.bf16.msra.mxu0 0
      %544 = vmatprep.subr.bf16.mxu0 0
      %545 = vmatpush1.bf16.msra.mxu0 0
      %546 = vmatprep.subr.bf16.mxu0 0
      %547 = vmatpush1.bf16.msra.mxu0 0
      %548 = vmatprep.subr.bf16.mxu0 0
      %549 = vmatpush1.bf16.msra.mxu0 0
      %550 = vmatprep.subr.bf16.mxu0 0
      %551 = vmatpush1.bf16.msra.mxu0 0
      %552 = vmatprep.subr.bf16.mxu0 0
      %553 = vmatpush1.bf16.msra.mxu0 0
      %554 = vmatprep.subr.bf16.mxu0 0
      %555 = vmatpush1.bf16.msra.mxu0 0
      %556 = vmatprep.subr.bf16.mxu0 0
      %557 = vmatpush1.bf16.msra.mxu0 0
      %558 = vmatprep.subr.bf16.mxu0 0
      %559 = vmatpush1.bf16.msra.mxu0 0
      %560 = vmatprep.subr.bf16.mxu0 0
      %561 = vmatpush1.bf16.msra.mxu0 0
      %562 = vmatprep.subr.bf16.mxu0 0
      %563 = vmatpush1.bf16.msra.mxu0 0
      %564 = vmatprep.subr.bf16.mxu0 0
      %565 = vmatpush1.bf16.msra.mxu0 0
      %566 = vmatprep.subr.bf16.mxu0 0
      %567 = vmatpush1.bf16.msra.mxu0 0
      %568 = vmatprep.mubr.bf16.mxu0 0
      %569 = vmatmul.mubr.bf16.gmra.mrb[0].mxu0 %v531
      %v570 = vpop.f32.mrb[0].mxu0
      %v571 = vadd.f32 %v390, %v570
      %v572 = vpop.f32.mrb[0].mxu0
      %v573 = vpop.f32.mrb[0].mxu0
      %v574 = vadd.f32 %v393, %v573
      %v575 = vpop.f32.mrb[0].mxu0
      %576 = vmatprep.mubr.bf16.mxu0 0
      %577 = vmatmul.mubr.bf16.gmra.mrb[0].mxu0 %v304
      %v578 = vpop.f32.mrb[0].mxu0
      %v579 = vadd.f32 %v398, %v578
      %v580 = vpop.f32.mrb[0].mxu0
      %v581 = vpop.f32.mrb[0].mxu0
      %v582 = vadd.f32 %v401, %v581
      %v583 = vpop.f32.mrb[0].mxu0
      %584 = vmatprep.mubr.bf16.mxu0 0
      %585 = vmatmul.mubr.bf16.gmra.mrb[0].mxu0 %v307
      %v586 = vpop.f32.mrb[0].mxu0
      %v587 = vadd.f32 %v406, %v586
      %v588 = vpop.f32.mrb[0].mxu0
      %v589 = vpop.f32.mrb[0].mxu0
      %v590 = vadd.f32 %v409, %v589
      %v591 = vpop.f32.mrb[0].mxu0
      %592 = vmatprep.mubr.bf16.mxu0 0
      %593 = vmatmul.mubr.bf16.gmra.mrb[0].mxu0 %v310
      %v594 = vpop.f32.mrb[0].mxu0
      %v595 = vadd.f32 %v414, %v594
      %v596 = vpop.f32.mrb[0].mxu0
      %v597 = vpop.f32.mrb[0].mxu0
      %v598 = vadd.f32 %v417, %v597
      %v599 = vpop.f32.mrb[0].mxu0
      %600 = vmatprep.mubr.bf16.mxu0 0
      %601 = vmatmul.mubr.bf16.gmra.mrb[0].mxu0 %v313
      %v602 = vpop.f32.mrb[0].mxu0
      %v603 = vadd.f32 %v422, %v602
      %v604 = vpop.f32.mrb[0].mxu0
      %v605 = vpop.f32.mrb[0].mxu0
      %v606 = vadd.f32 %v425, %v605
      %v607 = vpop.f32.mrb[0].mxu0
      %608 = vmatprep.mubr.bf16.mxu0 0
      %609 = vmatmul.mubr.bf16.gmra.mrb[0].mxu0 %v316
      %v610 = vpop.f32.mrb[0].mxu0
      %v611 = vadd.f32 %v430, %v610
      %v612 = vpop.f32.mrb[0].mxu0
      %v613 = vpop.f32.mrb[0].mxu0
      %v614 = vadd.f32 %v433, %v613
      %v615 = vpop.f32.mrb[0].mxu0
      %616 = vmatprep.mubr.bf16.mxu0 0
      %617 = vmatmul.mubr.bf16.gmra.mrb[0].mxu0 %v319
      %v618 = vpop.f32.mrb[0].mxu0
      %v619 = vadd.f32 %v438, %v618
      %v620 = vpop.f32.mrb[0].mxu0
      %v621 = vpop.f32.mrb[0].mxu0
      %v622 = vadd.f32 %v441, %v621
      %v623 = vpop.f32.mrb[0].mxu0
      %624 = vmatprep.mubr.bf16.mxu0 0
      %625 = vmatmul.mubr.bf16.gmra.mrb[0].mxu0 %v322
      %v626 = vpop.f32.mrb[0].mxu0
      %v627 = vadd.f32 %v446, %v626
      %v628 = vpop.f32.mrb[0].mxu0
      %v629 = vpop.f32.mrb[0].mxu0
      %v630 = vadd.f32 %v449, %v629
      %v631 = vpop.f32.mrb[0].mxu0
      %632 = vmatprep.mubr.bf16.mxu0 0
      %633 = vmatmul.mubr.bf16.gmra.mrb[0].mxu0 %v325
      %v634 = vpop.f32.mrb[0].mxu0
      %v635 = vadd.f32 %v454, %v634
      %v636 = vpop.f32.mrb[0].mxu0
      %v637 = vpop.f32.mrb[0].mxu0
      %v638 = vadd.f32 %v457, %v637
      %v639 = vpop.f32.mrb[0].mxu0
      %640 = vmatprep.mubr.bf16.mxu0 0
      %641 = vmatmul.mubr.bf16.gmra.mrb[0].mxu0 %v328
      %v642 = vpop.f32.mrb[0].mxu0
      %v643 = vadd.f32 %v462, %v642
      %v644 = vpop.f32.mrb[0].mxu0
      %v645 = vpop.f32.mrb[0].mxu0
      %v646 = vadd.f32 %v465, %v645
      %v647 = vpop.f32.mrb[0].mxu0
      %648 = vmatprep.mubr.bf16.mxu0 0
      %649 = vmatmul.mubr.bf16.gmra.mrb[0].mxu0 %v331
      %v650 = vpop.f32.mrb[0].mxu0
      %v651 = vadd.f32 %v470, %v650
      %v652 = vpop.f32.mrb[0].mxu0
      %v653 = vpop.f32.mrb[0].mxu0
      %v654 = vadd.f32 %v473, %v653
      %v655 = vpop.f32.mrb[0].mxu0
      %656 = vmatprep.mubr.bf16.mxu0 0
      %657 = vmatmul.mubr.bf16.gmra.mrb[0].mxu0 %v334
      %v658 = vpop.f32.mrb[0].mxu0
      %v659 = vadd.f32 %v478, %v658
      %v660 = vpop.f32.mrb[0].mxu0
      %v661 = vpop.f32.mrb[0].mxu0
      %v662 = vadd.f32 %v481, %v661
      %v663 = vpop.f32.mrb[0].mxu0
      %664 = vmatprep.mubr.bf16.mxu0 0
      %665 = vmatmul.mubr.bf16.gmra.mrb[0].mxu0 %v337
      %v666 = vpop.f32.mrb[0].mxu0
      %v667 = vadd.f32 %v486, %v666
      %v668 = vpop.f32.mrb[0].mxu0
      %v669 = vpop.f32.mrb[0].mxu0
      %v670 = vadd.f32 %v489, %v669
      %v671 = vpop.f32.mrb[0].mxu0
      %672 = vmatprep.mubr.bf16.mxu0 0
      %673 = vmatmul.mubr.bf16.gmra.mrb[0].mxu0 %v340
      %v674 = vpop.f32.mrb[0].mxu0
      %v675 = vadd.f32 %v494, %v674
      %v676 = vpop.f32.mrb[0].mxu0
      %v677 = vpop.f32.mrb[0].mxu0
      %v678 = vadd.f32 %v497, %v677
      %v679 = vpop.f32.mrb[0].mxu0
      %680 = vmatprep.mubr.bf16.mxu0 0
      %681 = vmatmul.mubr.bf16.gmra.mrb[0].mxu0 %v343
      %v682 = vpop.f32.mrb[0].mxu0
      %v683 = vadd.f32 %v502, %v682
      %v684 = vpop.f32.mrb[0].mxu0
      %v685 = vpop.f32.mrb[0].mxu0
      %v686 = vadd.f32 %v505, %v685
      %v687 = vpop.f32.mrb[0].mxu0
      %688 = vmatprep.mubr.bf16.mxu0 0
      %689 = vmatmul.mubr.bf16.gmra.mrb[0].mxu0 %v346
      %v690 = vpop.f32.mrb[0].mxu0
      %v691 = vadd.f32 %v510, %v690
      %v692 = vpop.f32.mrb[0].mxu0
      %v693 = vpop.f32.mrb[0].mxu0
      %v694 = vadd.f32 %v513, %v693
      %v695 = vpop.f32.mrb[0].mxu0
      %696 = vdwg.mxu0
      %v697 = vld [vmem:[%s2] sm:$0x1]
      %v699 = vlaneseq
      %v700 = vshrl.u32 %v699, 7
      %v701 = vsub.s32 0, %v700
      %v702 = vrot.slane %v697, %v701
      %v704 = vadd.f32 %v571, %v702
      %v705 = vadd.f32 %v574, %v702
      %v706 = vadd.f32 %v579, %v702
      %v707 = vadd.f32 %v582, %v702
      %v708 = vadd.f32 %v587, %v702
      %v709 = vadd.f32 %v590, %v702
      %v710 = vadd.f32 %v595, %v702
      %v711 = vadd.f32 %v598, %v702
      %v712 = vadd.f32 %v603, %v702
      %v713 = vadd.f32 %v606, %v702
      %v714 = vadd.f32 %v611, %v702
      %v715 = vadd.f32 %v614, %v702
      %v716 = vadd.f32 %v619, %v702
      %v717 = vadd.f32 %v622, %v702
      %v718 = vadd.f32 %v627, %v702
      %v719 = vadd.f32 %v630, %v702
      %v720 = vadd.f32 %v635, %v702
      %v721 = vadd.f32 %v638, %v702
      %v722 = vadd.f32 %v643, %v702
      %v723 = vadd.f32 %v646, %v702
      %v724 = vadd.f32 %v651, %v702
      %v725 = vadd.f32 %v654, %v702
      %v726 = vadd.f32 %v659, %v702
      %v727 = vadd.f32 %v662, %v702
      %v728 = vadd.f32 %v667, %v702
      %v729 = vadd.f32 %v670, %v702
      %v730 = vadd.f32 %v675, %v702
      %v731 = vadd.f32 %v678, %v702
      %v732 = vadd.f32 %v683, %v702
      %v733 = vadd.f32 %v686, %v702
      %v734 = vadd.f32 %v691, %v702
      %v735 = vadd.f32 %v694, %v702
      %v736 = vmax.f32 %v704, 0.0
      %v737 = vmax.f32 %v705, 0.0
      %v738 = vmax.f32 %v706, 0.0
      %v739 = vmax.f32 %v707, 0.0
      %v740 = vmax.f32 %v708, 0.0
      %v741 = vmax.f32 %v709, 0.0
      %v742 = vmax.f32 %v710, 0.0
      %v743 = vmax.f32 %v711, 0.0
      %v744 = vmax.f32 %v712, 0.0
      %v745 = vmax.f32 %v713, 0.0
      %v746 = vmax.f32 %v714, 0.0
      %v747 = vmax.f32 %v715, 0.0
      %v748 = vmax.f32 %v716, 0.0
      %v749 = vmax.f32 %v717, 0.0
      %v750 = vmax.f32 %v718, 0.0
      %v751 = vmax.f32 %v719, 0.0
      %v752 = vmax.f32 %v720, 0.0
      %v753 = vmax.f32 %v721, 0.0
      %v754 = vmax.f32 %v722, 0.0
      %v755 = vmax.f32 %v723, 0.0
      %v756 = vmax.f32 %v724, 0.0
      %v757 = vmax.f32 %v725, 0.0
      %v758 = vmax.f32 %v726, 0.0
      %v759 = vmax.f32 %v727, 0.0
      %v760 = vmax.f32 %v728, 0.0
      %v761 = vmax.f32 %v729, 0.0
      %v762 = vmax.f32 %v730, 0.0
      %v763 = vmax.f32 %v731, 0.0
      %v764 = vmax.f32 %v732, 0.0
      %v765 = vmax.f32 %v733, 0.0
      %v766 = vmax.f32 %v734, 0.0
      %v767 = vmax.f32 %v735, 0.0
      %v768 = vpack.c.bf16 %v737, %v736
      %v769 = vpack.c.bf16 %v739, %v738
      %v770 = vpack.c.bf16 %v741, %v740
      %v771 = vpack.c.bf16 %v743, %v742
      %v772 = vpack.c.bf16 %v745, %v744
      %v773 = vpack.c.bf16 %v747, %v746
      %v774 = vpack.c.bf16 %v749, %v748
      %v775 = vpack.c.bf16 %v751, %v750
      %v776 = vpack.c.bf16 %v753, %v752
      %v777 = vpack.c.bf16 %v755, %v754
      %v778 = vpack.c.bf16 %v757, %v756
      %v779 = vpack.c.bf16 %v759, %v758
      %v780 = vpack.c.bf16 %v761, %v760
      %v781 = vpack.c.bf16 %v763, %v762
      %v782 = vpack.c.bf16 %v765, %v764
      %v783 = vpack.c.bf16 %v767, %v766
      %v800 = vunpack.c.l.b16 %v768
      %v801 = vunpack.c.h.b16 %v768
      %v802 = vunpack.c.l.b16 %v769
      %v803 = vunpack.c.h.b16 %v769
      %v804 = vunpack.c.l.b16 %v770
      %v805 = vunpack.c.h.b16 %v770
      %v806 = vunpack.c.l.b16 %v771
      %v807 = vunpack.c.h.b16 %v771
      %v808 = vunpack.c.l.b16 %v772
      %v809 = vunpack.c.h.b16 %v772
      %v810 = vunpack.c.l.b16 %v773
      %v811 = vunpack.c.h.b16 %v773
      %v812 = vunpack.c.l.b16 %v774
      %v813 = vunpack.c.h.b16 %v774
      %v814 = vunpack.c.l.b16 %v775
      %v815 = vunpack.c.h.b16 %v775
      %v816 = vunpack.c.l.b16 %v776
      %v817 = vunpack.c.h.b16 %v776
      %v818 = vunpack.c.l.b16 %v777
      %v819 = vunpack.c.h.b16 %v777
      %v820 = vunpack.c.l.b16 %v778
      %v821 = vunpack.c.h.b16 %v778
      %v822 = vunpack.c.l.b16 %v779
      %v823 = vunpack.c.h.b16 %v779
      %v824 = vunpack.c.l.b16 %v780
      %v825 = vunpack.c.h.b16 %v780
      %v826 = vunpack.c.l.b16 %v781
      %v827 = vunpack.c.h.b16 %v781
      %v828 = vunpack.c.l.b16 %v782
      %v829 = vunpack.c.h.b16 %v782
      %v830 = vunpack.c.l.b16 %v783
      %v831 = vunpack.c.h.b16 %v783
      %v832 = vpack.c.b16 %v800, %v800
      %v833 = vpack.c.b16 %v801, %v801
      %v834 = vpack.c.b16 %v802, %v802
      %v835 = vpack.c.b16 %v803, %v803
      %v836 = vpack.c.b16 %v804, %v804
      %v837 = vpack.c.b16 %v805, %v805
      %v838 = vpack.c.b16 %v806, %v806
      %v839 = vpack.c.b16 %v807, %v807
      %v840 = vpack.c.b16 %v808, %v808
      %v841 = vpack.c.b16 %v809, %v809
      %v842 = vpack.c.b16 %v810, %v810
      %v843 = vpack.c.b16 %v811, %v811
      %v844 = vpack.c.b16 %v812, %v812
      %v845 = vpack.c.b16 %v813, %v813
      %v846 = vpack.c.b16 %v814, %v814
      %v847 = vpack.c.b16 %v815, %v815
      %v848 = vpack.c.b16 %v816, %v816
      %v849 = vpack.c.b16 %v817, %v817
      %v850 = vpack.c.b16 %v818, %v818
      %v851 = vpack.c.b16 %v819, %v819
      %v852 = vpack.c.b16 %v820, %v820
      %v853 = vpack.c.b16 %v821, %v821
      %v854 = vpack.c.b16 %v822, %v822
      %v855 = vpack.c.b16 %v823, %v823
      %v856 = vpack.c.b16 %v824, %v824
      %v857 = vpack.c.b16 %v825, %v825
      %v858 = vpack.c.b16 %v826, %v826
      %v859 = vpack.c.b16 %v827, %v827
      %v860 = vpack.c.b16 %v828, %v828
      %v861 = vpack.c.b16 %v829, %v829
      %v862 = vpack.c.b16 %v830, %v830
      %v863 = vpack.c.b16 %v831, %v831
      %vm896 = vcmask 257024
      %897 = vst.msk [vmem:[%s170] sm:$0xf] %vm896, %v832
      %898 = vst.msk [vmem:[%s170 + $0x4] sm:$0xf] %vm896, %v833
      %899 = vst.msk [vmem:[%s170 + $0x8] sm:$0xf] %vm896, %v834
      %900 = vst.msk [vmem:[%s170 + $0xc] sm:$0xf] %vm896, %v835
      %901 = vst.msk [vmem:[%s170 + $0x10] sm:$0xf] %vm896, %v836
      %902 = vst.msk [vmem:[%s170 + $0x14] sm:$0xf] %vm896, %v837
      %903 = vst.msk [vmem:[%s170 + $0x18] sm:$0xf] %vm896, %v838
      %904 = vst.msk [vmem:[%s170 + $0x1c] sm:$0xf] %vm896, %v839
      %905 = vst.msk [vmem:[%s170 + $0x20] sm:$0xf] %vm896, %v840
      %906 = vst.msk [vmem:[%s170 + $0x24] sm:$0xf] %vm896, %v841
      %907 = vst.msk [vmem:[%s170 + $0x28] sm:$0xf] %vm896, %v842
      %908 = vst.msk [vmem:[%s170 + $0x2c] sm:$0xf] %vm896, %v843
      %909 = vst.msk [vmem:[%s170 + $0x30] sm:$0xf] %vm896, %v844
      %910 = vst.msk [vmem:[%s170 + $0x34] sm:$0xf] %vm896, %v845
      %911 = vst.msk [vmem:[%s170 + $0x38] sm:$0xf] %vm896, %v846
      %912 = vst.msk [vmem:[%s170 + $0x3c] sm:$0xf] %vm896, %v847
      %913 = vst.msk [vmem:[%s170 + $0x40] sm:$0xf] %vm896, %v848
      %914 = vst.msk [vmem:[%s170 + $0x44] sm:$0xf] %vm896, %v849
      %915 = vst.msk [vmem:[%s170 + $0x48] sm:$0xf] %vm896, %v850
      %916 = vst.msk [vmem:[%s170 + $0x4c] sm:$0xf] %vm896, %v851
      %917 = vst.msk [vmem:[%s170 + $0x50] sm:$0xf] %vm896, %v852
      %918 = vst.msk [vmem:[%s170 + $0x54] sm:$0xf] %vm896, %v853
      %919 = vst.msk [vmem:[%s170 + $0x58] sm:$0xf] %vm896, %v854
      %920 = vst.msk [vmem:[%s170 + $0x5c] sm:$0xf] %vm896, %v855
      %921 = vst.msk [vmem:[%s170 + $0x60] sm:$0xf] %vm896, %v856
      %922 = vst.msk [vmem:[%s170 + $0x64] sm:$0xf] %vm896, %v857
      %923 = vst.msk [vmem:[%s170 + $0x68] sm:$0xf] %vm896, %v858
      %924 = vst.msk [vmem:[%s170 + $0x6c] sm:$0xf] %vm896, %v859
      %925 = vst.msk [vmem:[%s170 + $0x70] sm:$0xf] %vm896, %v860
      %926 = vst.msk [vmem:[%s170 + $0x74] sm:$0xf] %vm896, %v861
      %927 = vst.msk [vmem:[%s170 + $0x78] sm:$0xf] %vm896, %v862
      %928 = vst.msk [vmem:[%s170 + $0x7c] sm:$0xf] %vm896, %v863
      %p929 = scmp.lt.s32.totalorder %s14, 1
      %s930 = scalar_select %p929, %s14, 1
      %s931 = smul.addr %s930, 32
      %s932 = smul.addr %s931, 4
      %s933 = scalar_lea.vmem %s3, %s932
      // Predicated region
      $region33: #{teacher_forward.4} parent=31 // pred_check
        %p934 = pneg %p100
      $region34: #{teacher_forward.4} parent=31 // pred_check_branch
        %936 = sbr.rel (%p934) target = $region36
      $region35: #{teacher_forward.4} parent=31 // pred_region
        _
      $region36: #{teacher_forward.4} parent=31 // pred_fallthru
        _
    $region32: #{teacher_forward.4} parent=5 // pred_fallthru
      _
    %p937 = scmp.le.s32.totalorder 2, %s9
    // Predicated region
    $region37: #{teacher_forward.4} parent=5 // pred_check
      %p938 = pneg %p937
    $region38: #{teacher_forward.4} parent=5 // pred_check_branch
      %940 = sbr.rel (%p938) target = $region40
    $region39: #{teacher_forward.4} parent=5 // pred_region
      %s941 = ssub.s32 %s9, 2
      // Predicated region
      $region41: #{teacher_forward.4} parent=39 // pred_check
        %p942 = pneg %p106
      $region42: #{teacher_forward.4} parent=39 // pred_check_branch
        %944 = sbr.rel (%p942) target = $region44
      $region43: #{teacher_forward.4} parent=39 // pred_region
        %p945 = scmp.lt.s32.totalorder %s15, 1
        %s946 = scalar_select %p945, %s15, 1
        %s947 = smul.addr %s946, 32
        %s948 = smul.addr %s947, 4
        %s949 = scalar_lea.vmem %s3, %s948
      $region44: #{teacher_forward.4} parent=39 // pred_fallthru
        _
    $region40: #{teacher_forward.4} parent=5 // pred_fallthru
      _
  $region6: #{teacher_forward.4} parent=0 // loop_footer
    %s13 = sadd.s32 1, %s9
  $region7: #{teacher_forward.4} parent=0 // loop_footer_branch
    %8 = sbr.rel target = $region3
  $region8: #{teacher_forward.4} parent=0 // loop_exit
    _

// kernel: teacher_forward.5
$region0: #{teacher_forward.5}
  #allocation0 [shape = 'u32[]', space=smem, size = 0x4, offset = 0x4, fixed_abs, tag = 'smem constant byte address 0x4 - core index']
  #allocation1 [shape = 'u32[144,128]{1,0:T(1,128)}', space=vmem, size = 0x12000, scoped, tag = 'internal scratch']
  %s0 = inlined_call_operand.vmem [shape: bf16[2,18,16,96], index: 0, kind: input, shape index: {}]
  %s1 = inlined_call_operand.vmem [shape: bf16[3,96,32], index: 1, kind: input, shape index: {}]
  %s2 = inlined_call_operand.vmem [shape: f32[1,32], index: 2, kind: input, shape index: {}]
  %s3 = inlined_call_operand.vmem [shape: bf16[2,16,16,32], index: 3, kind: output, shape index: {}]
  %s4 = sld [smem:[#allocation0]]
  $region45: #{teacher_forward.5} parent=0
    _
  %s6 = ssub.s32 1, %s4
  %s7 = scalar_select 0, %s6, %s4
  loop: start=0, step=1, limit=4
  $region2: #{teacher_forward.5} parent=0 // loop_pre_header
    _
  $region3: #{teacher_forward.5} parent=0 // loop_header
    %s9 = sphi 0, %s13
    %p10 = scmp.ge.s32.totalorder %s9, 4
    %s19 = sphi 0, %s21
    %s22 = sphi 0, %s19
    %s23 = sphi 0, %s22
    %s39 = sphi 0, %s23
    %s43 = sphi 0, %s43
    %s45 = sphi 0, %s43
    %s46 = sphi 0, %s45
    %s60 = sphi 0, %s46
    %s64 = sphi 0, %s64
    %s66 = sphi 0, %s64
    %s67 = sphi 0, %s66
    %s81 = sphi 0, %s67
    %s87 = sphi 0, %s89
    %s90 = sphi 0, %s87
    %s91 = sphi 0, %s90
    %s107 = sphi 0, %s91
  $region4: #{teacher_forward.5} parent=0 // loop_header_branch
    %12 = sbr.rel (%p10) target = $region8
  $region5: #{teacher_forward.5} parent=0 // loop_body
    %s14 = ssub.s32 %s9, 1
    %s15 = ssub.s32 %s9, 2
    %s16 = sadd.s32 %s9, 1
    %s17 = ssub.s32 %s9, %s16
    %p18 = scmp.eq.s32.totalorder %s17, 0
    %s20 = sadd.s32 %s19, 1
    %s21 = scalar_select %p18, %s19, %s20
    %p24 = pneg %p18
    %p25 = scmp.eq.s32.totalorder %s9, 1
    %p26 = por %p24, %p25
    %p27 = scmp.ne.s32.totalorder %s19, %s22
    %p28 = scmp.eq.s32.totalorder %s9, 0
    %p29 = por %p27, %p28
    %p30 = scmp.ne.s32.totalorder %s19, %s22
    %p31 = scmp.eq.s32.totalorder %s14, 1
    %p32 = por %p30, %p31
    %p33 = scmp.ne.s32.totalorder %s22, %s23
    %p34 = scmp.eq.s32.totalorder %s14, 0
    %p35 = por %p33, %p34
    %p36 = scmp.ne.s32.totalorder %s22, %s23
    %p37 = scmp.eq.s32.totalorder %s15, 1
    %p38 = por %p36, %p37
    %p40 = scmp.ne.s32.totalorder %s23, %s39
    %p41 = scmp.eq.s32.totalorder %s15, 0
    %p42 = por %p40, %p41
    %s44 = sadd.s32 %s43, 1
    %p47 = scmp.eq.s32.totalorder %s9, 1
    %p48 = scmp.ne.s32.totalorder %s43, %s45
    %p49 = scmp.eq.s32.totalorder %s9, 0
    %p50 = por %p48, %p49
    %p51 = scmp.ne.s32.totalorder %s43, %s45
    %p52 = scmp.eq.s32.totalorder %s14, 1
    %p53 = por %p51, %p52
    %p54 = scmp.ne.s32.totalorder %s45, %s46
    %p55 = scmp.eq.s32.totalorder %s14, 0
    %p56 = por %p54, %p55
    %p57 = scmp.ne.s32.totalorder %s45, %s46
    %p58 = scmp.eq.s32.totalorder %s15, 1
    %p59 = por %p57, %p58
    %p61 = scmp.ne.s32.totalorder %s46, %s60
    %p62 = scmp.eq.s32.totalorder %s15, 0
    %p63 = por %p61, %p62
    %s65 = sadd.s32 %s64, 1
    %p68 = scmp.eq.s32.totalorder %s9, 1
    %p69 = scmp.ne.s32.totalorder %s64, %s66
    %p70 = scmp.eq.s32.totalorder %s9, 0
    %p71 = por %p69, %p70
    %p72 = scmp.ne.s32.totalorder %s64, %s66
    %p73 = scmp.eq.s32.totalorder %s14, 1
    %p74 = por %p72, %p73
    %p75 = scmp.ne.s32.totalorder %s66, %s67
    %p76 = scmp.eq.s32.totalorder %s14, 0
    %p77 = por %p75, %p76
    %p78 = scmp.ne.s32.totalorder %s66, %s67
    %p79 = scmp.eq.s32.totalorder %s15, 1
    %p80 = por %p78, %p79
    %p82 = scmp.ne.s32.totalorder %s67, %s81
    %p83 = scmp.eq.s32.totalorder %s15, 0
    %p84 = por %p82, %p83
    %s85 = ssub.s32 %s9, %s16
    %p86 = scmp.eq.s32.totalorder %s85, 0
    %s88 = sadd.s32 %s87, 1
    %s89 = scalar_select %p86, %s87, %s88
    %p92 = pneg %p86
    %p93 = scmp.eq.s32.totalorder %s9, 1
    %p94 = por %p92, %p93
    %p95 = scmp.ne.s32.totalorder %s87, %s90
    %p96 = scmp.eq.s32.totalorder %s9, 0
    %p97 = por %p95, %p96
    %p98 = scmp.ne.s32.totalorder %s87, %s90
    %p99 = scmp.eq.s32.totalorder %s14, 1
    %p100 = por %p98, %p99
    %p101 = scmp.ne.s32.totalorder %s90, %s91
    %p102 = scmp.eq.s32.totalorder %s14, 0
    %p103 = por %p101, %p102
    %p104 = scmp.ne.s32.totalorder %s90, %s91
    %p105 = scmp.eq.s32.totalorder %s15, 1
    %p106 = por %p104, %p105
    %p108 = scmp.ne.s32.totalorder %s91, %s107
    %p109 = scmp.eq.s32.totalorder %s15, 0
    %p110 = por %p108, %p109
    %p111 = scmp.le.s32.totalorder 1, %s9
    %p112 = scmp.lt.s32.totalorder %s9, 3
    %p113 = pnand %p111, %p112
    %p114 = pneg %p113
    // Predicated region
    $region9: #{teacher_forward.5} parent=5 // pred_check
      _
    $region10: #{teacher_forward.5} parent=5 // pred_check_branch
      %116 = sbr.rel (%p113) target = $region12
    $region11: #{teacher_forward.5} parent=5 // pred_region
      %s117 = ssub.s32 %s9, 1
      // Predicated region
      $region13: #{teacher_forward.5} parent=11 // pred_check
        %p118 = pneg %p56
      $region14: #{teacher_forward.5} parent=11 // pred_check_branch
        %120 = sbr.rel (%p118) target = $region16
      $region15: #{teacher_forward.5} parent=11 // pred_region
        _
      $region16: #{teacher_forward.5} parent=11 // pred_fallthru
        _
      // Predicated region
      $region17: #{teacher_forward.5} parent=11 // pred_check
        %p121 = pneg %p77
      $region18: #{teacher_forward.5} parent=11 // pred_check_branch
        %123 = sbr.rel (%p121) target = $region20
      $region19: #{teacher_forward.5} parent=11 // pred_region
        _
      $region20: #{teacher_forward.5} parent=11 // pred_fallthru
        _
    $region12: #{teacher_forward.5} parent=5 // pred_fallthru
      _
    %p124 = scmp.lt.s32.totalorder %s9, 2
    // Predicated region
    $region21: #{teacher_forward.5} parent=5 // pred_check
      %p125 = pneg %p124
    $region22: #{teacher_forward.5} parent=5 // pred_check_branch
      %127 = sbr.rel (%p125) target = $region24
    $region23: #{teacher_forward.5} parent=5 // pred_region
      // Predicated region
      $region25: #{teacher_forward.5} parent=23 // pred_check
        %p128 = pneg %p29
      $region26: #{teacher_forward.5} parent=23 // pred_check_branch
        %130 = sbr.rel (%p128) target = $region28
      $region27: #{teacher_forward.5} parent=23 // pred_region
        %p131 = scmp.lt.s32.totalorder %s9, 1
        %s132 = scalar_select %p131, %s9, 1
        %s133 = smul.addr %s132, 36
        %s134 = smul.addr %s133, 4
        %s135 = scalar_lea.vmem %s0, %s134
      $region28: #{teacher_forward.5} parent=23 // pred_fallthru
        _
    $region24: #{teacher_forward.5} parent=5 // pred_fallthru
      _
    %p136 = scmp.le.s32.totalorder 1, %s9
    %p137 = scmp.lt.s32.totalorder %s9, 3
    %p138 = pnand %p136, %p137
    %p139 = pneg %p138
    // Predicated region
    $region29: #{teacher_forward.5} parent=5 // pred_check
      _
    $region30: #{teacher_forward.5} parent=5 // pred_check_branch
      %141 = sbr.rel (%p138) target = $region32
    $region31: #{teacher_forward.5} parent=5 // pred_region
      %s142 = ssub.s32 %s9, 1
      %p143 = scmp.lt.s32.totalorder %s14, 1
      %s144 = scalar_select %p143, %s14, 1
      %s145 = smul.addr %s144, 36
      %s146 = smul.addr %s145, 4
      %s147 = scalar_lea.vmem %s0, %s146
      %p148 = pneg %p35
      %p149 = pneg %p32
      %p150 = pneg %p56
      %p151 = pneg %p53
      %p152 = pneg %p77
      %p153 = pneg %p74
      %p154 = pneg %p103
      %p155 = pneg %p100
      %p156 = scmp.lt.s32.totalorder %s14, 1
      %s157 = scalar_select %p156, %s14, 1
      %s158 = smul.addr %s157, 32
      %s159 = smul.addr %s158, 4
      %s160 = scalar_lea.vmem %s3, %s159
      %p161 = scmp.lt.s32.totalorder %s14, 1
      %s162 = scalar_select %p161, %s14, 1
      %s163 = smul.addr %s162, 36
      %s164 = smul.addr %s163, 4
      %s165 = scalar_lea.vmem %s0, %s164
      %p166 = scmp.lt.s32.totalorder %s14, 1
      %s167 = scalar_select %p166, %s14, 1
      %s168 = smul.addr %s167, 32
      %s169 = smul.addr %s168, 4
      %s170 = scalar_lea.vmem %s3, %s169
      %v172 = vld [vmem:[%s165] sm:$0xf]
      %v173 = vld [vmem:[%s165 + $0x4] sm:$0xf]
      %v174 = vld [vmem:[%s165 + $0x8] sm:$0xf]
      %v175 = vld [vmem:[%s165 + $0xc] sm:$0xf]
      %v176 = vld [vmem:[%s165 + $0x10] sm:$0xf]
      %v177 = vld [vmem:[%s165 + $0x14] sm:$0xf]
      %v178 = vld [vmem:[%s165 + $0x18] sm:$0xf]
      %v179 = vld [vmem:[%s165 + $0x1c] sm:$0xf]
      %v180 = vld [vmem:[%s165 + $0x20] sm:$0xf]
      %v181 = vld [vmem:[%s165 + $0x24] sm:$0xf]
      %v182 = vld [vmem:[%s165 + $0x28] sm:$0xf]
      %v183 = vld [vmem:[%s165 + $0x2c] sm:$0xf]
      %v184 = vld [vmem:[%s165 + $0x30] sm:$0xf]
      %v185 = vld [vmem:[%s165 + $0x34] sm:$0xf]
      %v186 = vld [vmem:[%s165 + $0x38] sm:$0xf]
      %v187 = vld [vmem:[%s165 + $0x3c] sm:$0xf]
      %v188 = vld [vmem:[%s165 + $0x40] sm:$0xf]
      %v189 = vld [vmem:[%s165 + $0x44] sm:$0xf]
      %v190 = vld [vmem:[%s165 + $0x48] sm:$0xf]
      %v191 = vld [vmem:[%s165 + $0x4c] sm:$0xf]
      %v192 = vld [vmem:[%s165 + $0x50] sm:$0xf]
      %v193 = vld [vmem:[%s165 + $0x54] sm:$0xf]
      %v194 = vld [vmem:[%s165 + $0x58] sm:$0xf]
      %v195 = vld [vmem:[%s165 + $0x5c] sm:$0xf]
      %v196 = vld [vmem:[%s165 + $0x60] sm:$0xf]
      %v197 = vld [vmem:[%s165 + $0x64] sm:$0xf]
      %v198 = vld [vmem:[%s165 + $0x68] sm:$0xf]
      %v199 = vld [vmem:[%s165 + $0x6c] sm:$0xf]
      %v200 = vld [vmem:[%s165 + $0x70] sm:$0xf]
      %v201 = vld [vmem:[%s165 + $0x74] sm:$0xf]
      %v202 = vld [vmem:[%s165 + $0x78] sm:$0xf]
      %v203 = vld [vmem:[%s165 + $0x7c] sm:$0xf]
      %v204 = vld [vmem:[%s165 + $0x80] sm:$0xf]
      %v205 = vld [vmem:[%s165 + $0x84] sm:$0xf]
      %v206 = vld [vmem:[%s165 + $0x88] sm:$0xf]
      %v207 = vld [vmem:[%s165 + $0x8c] sm:$0xf]
      %v208 = vld [vmem:[%s1] sm:$0xf]
      %v209 = vld [vmem:[%s1 + $0x4] sm:$0xf]
      %v210 = vld [vmem:[%s1 + $0x8] sm:$0xf]
      %v211 = vld [vmem:[%s1 + $0xc] sm:$0xf]
      %v212 = vld [vmem:[%s1 + $0x10] sm:$0xf]
      %v213 = vld [vmem:[%s1 + $0x14] sm:$0xf]
      %v214 = vld [vmem:[%s1 + $0x18] sm:$0xf]
      %v215 = vld [vmem:[%s1 + $0x1c] sm:$0xf]
      %v216 = vld [vmem:[%s1 + $0x20] sm:$0xf]
      %v217 = vld [vmem:[%s1 + $0x24] sm:$0xf]
      %v218 = vld [vmem:[%s1 + $0x28] sm:$0xf]
      %v219 = vld [vmem:[%s1 + $0x2c] sm:$0xf]
      %s220 = scalar_lea.vmem %s1, 48
      %v221 = vld [vmem:[%s220] sm:$0xf]
      %v222 = vld [vmem:[%s220 + $0x4] sm:$0xf]
      %v223 = vld [vmem:[%s220 + $0x8] sm:$0xf]
      %v224 = vld [vmem:[%s220 + $0xc] sm:$0xf]
      %v225 = vld [vmem:[%s220 + $0x10] sm:$0xf]
      %v226 = vld [vmem:[%s220 + $0x14] sm:$0xf]
      %v227 = vld [vmem:[%s220 + $0x18] sm:$0xf]
      %v228 = vld [vmem:[%s220 + $0x1c] sm:$0xf]
      %v229 = vld [vmem:[%s220 + $0x20] sm:$0xf]
      %v230 = vld [vmem:[%s220 + $0x24] sm:$0xf]
      %v231 = vld [vmem:[%s220 + $0x28] sm:$0xf]
      %v232 = vld [vmem:[%s220 + $0x2c] sm:$0xf]
      %v265 = vunpack.c.l.b16 %v174
      %v266 = vunpack.c.l.b16 %v175
      %v267 = vunpack.c.l.b16 %v176
      %v268 = vunpack.c.l.b16 %v177
      %v269 = vunpack.c.l.b16 %v178
      %v270 = vunpack.c.l.b16 %v179
      %v271 = vunpack.c.l.b16 %v180
      %v272 = vunpack.c.l.b16 %v181
      %v273 = vunpack.c.l.b16 %v182
      %v274 = vunpack.c.l.b16 %v183
      %v275 = vunpack.c.l.b16 %v184
      %v276 = vunpack.c.l.b16 %v185
      %v277 = vunpack.c.l.b16 %v186
      %v278 = vunpack.c.l.b16 %v187
      %v279 = vunpack.c.l.b16 %v188
      %v280 = vunpack.c.l.b16 %v189
      %v281 = vunpack.c.l.b16 %v190
      %v282 = vunpack.c.l.b16 %v191
      %v283 = vunpack.c.l.b16 %v192
      %v284 = vunpack.c.l.b16 %v193
      %v285 = vunpack.c.l.b16 %v194
      %v286 = vunpack.c.l.b16 %v195
      %v287 = vunpack.c.l.b16 %v196
      %v288 = vunpack.c.l.b16 %v197
      %v289 = vunpack.c.l.b16 %v198
      %v290 = vunpack.c.l.b16 %v199
      %v291 = vunpack.c.l.b16 %v200
      %v292 = vunpack.c.l.b16 %v201
      %v293 = vunpack.c.l.b16 %v202
      %v294 = vunpack.c.l.b16 %v203
      %v295 = vunpack.c.l.b16 %v204
      %v296 = vunpack.c.l.b16 %v205
      %v297 = vpack.c.b16 %v266, %v265
      %v298 = vpack.c.b16 %v268, %v267
      %v299 = vpack.c.b16 %v270, %v269
      %v300 = vpack.c.b16 %v272, %v271
      %v301 = vpack.c.b16 %v274, %v273
      %v302 = vpack.c.b16 %v276, %v275
      %v303 = vpack.c.b16 %v278, %v277
      %v304 = vpack.c.b16 %v280, %v279
      %v305 = vpack.c.b16 %v282, %v281
      %v306 = vpack.c.b16 %v284, %v283
      %v307 = vpack.c.b16 %v286, %v285
      %v308 = vpack.c.b16 %v288, %v287
      %v309 = vpack.c.b16 %v290, %v289
      %v310 = vpack.c.b16 %v292, %v291
      %v311 = vpack.c.b16 %v294, %v293
      %v312 = vpack.c.b16 %v296, %v295
      %v325 = vunpack.c.l.b16 %v221
      %v326 = vunpack.c.l.b16 %v222
      %v327 = vunpack.c.l.b16 %v223
      %v328 = vunpack.c.l.b16 %v224
      %v329 = vunpack.c.l.b16 %v225
      %v330 = vunpack.c.l.b16 %v226
      %v331 = vunpack.c.l.b16 %v227
      %v332 = vunpack.c.l.b16 %v228
      %v333 = vunpack.c.l.b16 %v229
      %v334 = vunpack.c.l.b16 %v230
      %v335 = vunpack.c.l.b16 %v231
      %v336 = vunpack.c.l.b16 %v232
      %v337 = vpack.c.b16 %v326, %v325
      %v338 = vpack.c.b16 %v328, %v327
      %v339 = vpack.c.b16 %v330, %v329
      %v340 = vpack.c.b16 %v332, %v331
      %v341 = vpack.c.b16 %v334, %v333
      %v342 = vpack.c.b16 %v336, %v335
      %vm349 = vcmask 785408
      %v351 = vsel %vm349, %v297, 0
      %v354 = vsel %vm349, %v298, 0
      %v357 = vsel %vm349, %v299, 0
      %v360 = vsel %vm349, %v300, 0
      %v363 = vsel %vm349, %v301, 0
      %v366 = vsel %vm349, %v302, 0
      %v369 = vsel %vm349, %v303, 0
      %v372 = vsel %vm349, %v304, 0
      %v375 = vsel %vm349, %v305, 0
      %v378 = vsel %vm349, %v306, 0
      %v381 = vsel %vm349, %v307, 0
      %v384 = vsel %vm349, %v308, 0
      %v387 = vsel %vm349, %v309, 0
      %v390 = vsel %vm349, %v310, 0
      %v393 = vsel %vm349, %v311, 0
      %v396 = vsel %vm349, %v312, 0
      %398 = vmatprep.subr.bf16.mxu0 0
      %399 = vmatpush1.bf16.msra.mxu0 %v337
      %400 = vmatprep.subr.bf16.mxu0 0
      %401 = vmatpush1.bf16.msra.mxu0 %v338
      %402 = vmatprep.subr.bf16.mxu0 0
      %403 = vmatpush1.bf16.msra.mxu0 %v339
      %404 = vmatprep.subr.bf16.mxu0 0
      %405 = vmatpush1.bf16.msra.mxu0 %v340
      %406 = vmatprep.subr.bf16.mxu0 0
      %407 = vmatpush1.bf16.msra.mxu0 %v341
      %408 = vmatprep.subr.bf16.mxu0 0
      %409 = vmatpush1.bf16.msra.mxu0 %v342
      %410 = vmatprep.subr.bf16.mxu0 0
      %411 = vmatpush1.bf16.msra.mxu0 0
      %412 = vmatprep.subr.bf16.mxu0 0
      %413 = vmatpush1.bf16.msra.mxu0 0
      %414 = vmatprep.subr.bf16.mxu0 0
      %415 = vmatpush1.bf16.msra.mxu0 0
      %416 = vmatprep.subr.bf16.mxu0 0
      %417 = vmatpush1.bf16.msra.mxu0 0
      %418 = vmatprep.subr.bf16.mxu0 0
      %419 = vmatpush1.bf16.msra.mxu0 0
      %420 = vmatprep.subr.bf16.mxu0 0
      %421 = vmatpush1.bf16.msra.mxu0 0
      %422 = vmatprep.subr.bf16.mxu0 0
      %423 = vmatpush1.bf16.msra.mxu0 0
      %424 = vmatprep.subr.bf16.mxu0 0
      %425 = vmatpush1.bf16.msra.mxu0 0
      %426 = vmatprep.subr.bf16.mxu0 0
      %427 = vmatpush1.bf16.msra.mxu0 0
      %428 = vmatprep.subr.bf16.mxu0 0
      %429 = vmatpush1.bf16.msra.mxu0 0
      %430 = vmatprep.mubr.bf16.mxu0 0
      %431 = vmatmul.mubr.bf16.gmra.mrb[0].mxu0 %v351
      %v432 = vpop.f32.mrb[0].mxu0
      %v433 = vadd.f32 0.0, %v432
      %v434 = vpop.f32.mrb[0].mxu0
      %v435 = vpop.f32.mrb[0].mxu0
      %v436 = vadd.f32 0.0, %v435
      %v437 = vpop.f32.mrb[0].mxu0
      %438 = vmatprep.mubr.bf16.mxu0 0
      %439 = vmatmul.mubr.bf16.gmra.mrb[0].mxu0 %v354
      %v440 = vpop.f32.mrb[0].mxu0
      %v441 = vadd.f32 0.0, %v440
      %v442 = vpop.f32.mrb[0].mxu0
      %v443 = vpop.f32.mrb[0].mxu0
      %v444 = vadd.f32 0.0, %v443
      %v445 = vpop.f32.mrb[0].mxu0
      %446 = vmatprep.mubr.bf16.mxu0 0
      %447 = vmatmul.mubr.bf16.gmra.mrb[0].mxu0 %v357
      %v448 = vpop.f32.mrb[0].mxu0
      %v449 = vadd.f32 0.0, %v448
      %v450 = vpop.f32.mrb[0].mxu0
      %v451 = vpop.f32.mrb[0].mxu0
      %v452 = vadd.f32 0.0, %v451
      %v453 = vpop.f32.mrb[0].mxu0
      %454 = vmatprep.mubr.bf16.mxu0 0
      %455 = vmatmul.mubr.bf16.gmra.mrb[0].mxu0 %v360
      %v456 = vpop.f32.mrb[0].mxu0
      %v457 = vadd.f32 0.0, %v456
      %v458 = vpop.f32.mrb[0].mxu0
      %v459 = vpop.f32.mrb[0].mxu0
      %v460 = vadd.f32 0.0, %v459
      %v461 = vpop.f32.mrb[0].mxu0
      %462 = vmatprep.mubr.bf16.mxu0 0
      %463 = vmatmul.mubr.bf16.gmra.mrb[0].mxu0 %v363
      %v464 = vpop.f32.mrb[0].mxu0
      %v465 = vadd.f32 0.0, %v464
      %v466 = vpop.f32.mrb[0].mxu0
      %v467 = vpop.f32.mrb[0].mxu0
      %v468 = vadd.f32 0.0, %v467
      %v469 = vpop.f32.mrb[0].mxu0
      %470 = vmatprep.mubr.bf16.mxu0 0
      %471 = vmatmul.mubr.bf16.gmra.mrb[0].mxu0 %v366
      %v472 = vpop.f32.mrb[0].mxu0
      %v473 = vadd.f32 0.0, %v472
      %v474 = vpop.f32.mrb[0].mxu0
      %v475 = vpop.f32.mrb[0].mxu0
      %v476 = vadd.f32 0.0, %v475
      %v477 = vpop.f32.mrb[0].mxu0
      %478 = vmatprep.mubr.bf16.mxu0 0
      %479 = vmatmul.mubr.bf16.gmra.mrb[0].mxu0 %v369
      %v480 = vpop.f32.mrb[0].mxu0
      %v481 = vadd.f32 0.0, %v480
      %v482 = vpop.f32.mrb[0].mxu0
      %v483 = vpop.f32.mrb[0].mxu0
      %v484 = vadd.f32 0.0, %v483
      %v485 = vpop.f32.mrb[0].mxu0
      %486 = vmatprep.mubr.bf16.mxu0 0
      %487 = vmatmul.mubr.bf16.gmra.mrb[0].mxu0 %v372
      %v488 = vpop.f32.mrb[0].mxu0
      %v489 = vadd.f32 0.0, %v488
      %v490 = vpop.f32.mrb[0].mxu0
      %v491 = vpop.f32.mrb[0].mxu0
      %v492 = vadd.f32 0.0, %v491
      %v493 = vpop.f32.mrb[0].mxu0
      %494 = vmatprep.mubr.bf16.mxu0 0
      %495 = vmatmul.mubr.bf16.gmra.mrb[0].mxu0 %v375
      %v496 = vpop.f32.mrb[0].mxu0
      %v497 = vadd.f32 0.0, %v496
      %v498 = vpop.f32.mrb[0].mxu0
      %v499 = vpop.f32.mrb[0].mxu0
      %v500 = vadd.f32 0.0, %v499
      %v501 = vpop.f32.mrb[0].mxu0
      %502 = vmatprep.mubr.bf16.mxu0 0
      %503 = vmatmul.mubr.bf16.gmra.mrb[0].mxu0 %v378
      %v504 = vpop.f32.mrb[0].mxu0
      %v505 = vadd.f32 0.0, %v504
      %v506 = vpop.f32.mrb[0].mxu0
      %v507 = vpop.f32.mrb[0].mxu0
      %v508 = vadd.f32 0.0, %v507
      %v509 = vpop.f32.mrb[0].mxu0
      %510 = vmatprep.mubr.bf16.mxu0 0
      %511 = vmatmul.mubr.bf16.gmra.mrb[0].mxu0 %v381
      %v512 = vpop.f32.mrb[0].mxu0
      %v513 = vadd.f32 0.0, %v512
      %v514 = vpop.f32.mrb[0].mxu0
      %v515 = vpop.f32.mrb[0].mxu0
      %v516 = vadd.f32 0.0, %v515
      %v517 = vpop.f32.mrb[0].mxu0
      %518 = vmatprep.mubr.bf16.mxu0 0
      %519 = vmatmul.mubr.bf16.gmra.mrb[0].mxu0 %v384
      %v520 = vpop.f32.mrb[0].mxu0
      %v521 = vadd.f32 0.0, %v520
      %v522 = vpop.f32.mrb[0].mxu0
      %v523 = vpop.f32.mrb[0].mxu0
      %v524 = vadd.f32 0.0, %v523
      %v525 = vpop.f32.mrb[0].mxu0
      %526 = vmatprep.mubr.bf16.mxu0 0
      %527 = vmatmul.mubr.bf16.gmra.mrb[0].mxu0 %v387
      %v528 = vpop.f32.mrb[0].mxu0
      %v529 = vadd.f32 0.0, %v528
      %v530 = vpop.f32.mrb[0].mxu0
      %v531 = vpop.f32.mrb[0].mxu0
      %v532 = vadd.f32 0.0, %v531
      %v533 = vpop.f32.mrb[0].mxu0
      %534 = vmatprep.mubr.bf16.mxu0 0
      %535 = vmatmul.mubr.bf16.gmra.mrb[0].mxu0 %v390
      %v536 = vpop.f32.mrb[0].mxu0
      %v537 = vadd.f32 0.0, %v536
      %v538 = vpop.f32.mrb[0].mxu0
      %v539 = vpop.f32.mrb[0].mxu0
      %v540 = vadd.f32 0.0, %v539
      %v541 = vpop.f32.mrb[0].mxu0
      %542 = vmatprep.mubr.bf16.mxu0 0
      %543 = vmatmul.mubr.bf16.gmra.mrb[0].mxu0 %v393
      %v544 = vpop.f32.mrb[0].mxu0
      %v545 = vadd.f32 0.0, %v544
      %v546 = vpop.f32.mrb[0].mxu0
      %v547 = vpop.f32.mrb[0].mxu0
      %v548 = vadd.f32 0.0, %v547
      %v549 = vpop.f32.mrb[0].mxu0
      %550 = vmatprep.mubr.bf16.mxu0 0
      %551 = vmatmul.mubr.bf16.gmra.mrb[0].mxu0 %v396
      %v552 = vpop.f32.mrb[0].mxu0
      %v553 = vadd.f32 0.0, %v552
      %v554 = vpop.f32.mrb[0].mxu0
      %v555 = vpop.f32.mrb[0].mxu0
      %v556 = vadd.f32 0.0, %v555
      %v557 = vpop.f32.mrb[0].mxu0
      %558 = vdwg.mxu0
      %v561 = vunpack.c.l.b16 %v172
      %v562 = vunpack.c.l.b16 %v173
      %v563 = vpack.c.b16 %v562, %v561
      %v576 = vunpack.c.l.b16 %v208
      %v577 = vunpack.c.l.b16 %v209
      %v578 = vunpack.c.l.b16 %v210
      %v579 = vunpack.c.l.b16 %v211
      %v580 = vunpack.c.l.b16 %v212
      %v581 = vunpack.c.l.b16 %v213
      %v582 = vunpack.c.l.b16 %v214
      %v583 = vunpack.c.l.b16 %v215
      %v584 = vunpack.c.l.b16 %v216
      %v585 = vunpack.c.l.b16 %v217
      %v586 = vunpack.c.l.b16 %v218
      %v587 = vunpack.c.l.b16 %v219
      %v588 = vpack.c.b16 %v577, %v576
      %v589 = vpack.c.b16 %v579, %v578
      %v590 = vpack.c.b16 %v581, %v580
      %v591 = vpack.c.b16 %v583, %v582
      %v592 = vpack.c.b16 %v585, %v584
      %v593 = vpack.c.b16 %v587, %v586
      %v601 = vsel %vm349, %v563, 0
      %603 = vmatprep.subr.bf16.mxu0 0
      %604 = vmatpush1.bf16.msra.mxu0 %v588
      %605 = vmatprep.subr.bf16.mxu0 0
      %606 = vmatpush1.bf16.msra.mxu0 %v589
      %607 = vmatprep.subr.bf16.mxu0 0
      %608 = vmatpush1.bf16.msra.mxu0 %v590
      %609 = vmatprep.subr.bf16.mxu0 0
      %610 = vmatpush1.bf16.msra.mxu0 %v591
      %611 = vmatprep.subr.bf16.mxu0 0
      %612 = vmatpush1.bf16.msra.mxu0 %v592
      %613 = vmatprep.subr.bf16.mxu0 0
      %614 = vmatpush1.bf16.msra.mxu0 %v593
      %615 = vmatprep.subr.bf16.mxu0 0
      %616 = vmatpush1.bf16.msra.mxu0 0
      %617 = vmatprep.subr.bf16.mxu0 0
      %618 = vmatpush1.bf16.msra.mxu0 0
      %619 = vmatprep.subr.bf16.mxu0 0
      %620 = vmatpush1.bf16.msra.mxu0 0
      %621 = vmatprep.subr.bf16.mxu0 0
      %622 = vmatpush1.bf16.msra.mxu0 0
      %623 = vmatprep.subr.bf16.mxu0 0
      %624 = vmatpush1.bf16.msra.mxu0 0
      %625 = vmatprep.subr.bf16.mxu0 0
      %626 = vmatpush1.bf16.msra.mxu0 0
      %627 = vmatprep.subr.bf16.mxu0 0
      %628 = vmatpush1.bf16.msra.mxu0 0
      %629 = vmatprep.subr.bf16.mxu0 0
      %630 = vmatpush1.bf16.msra.mxu0 0
      %631 = vmatprep.subr.bf16.mxu0 0
      %632 = vmatpush1.bf16.msra.mxu0 0
      %633 = vmatprep.subr.bf16.mxu0 0
      %634 = vmatpush1.bf16.msra.mxu0 0
      %635 = vmatprep.mubr.bf16.mxu0 0
      %636 = vmatmul.mubr.bf16.gmra.mrb[0].mxu0 %v601
      %v637 = vpop.f32.mrb[0].mxu0
      %v638 = vadd.f32 %v433, %v637
      %v639 = vpop.f32.mrb[0].mxu0
      %v640 = vpop.f32.mrb[0].mxu0
      %v641 = vadd.f32 %v436, %v640
      %v642 = vpop.f32.mrb[0].mxu0
      %643 = vmatprep.mubr.bf16.mxu0 0
      %644 = vmatmul.mubr.bf16.gmra.mrb[0].mxu0 %v351
      %v645 = vpop.f32.mrb[0].mxu0
      %v646 = vadd.f32 %v441, %v645
      %v647 = vpop.f32.mrb[0].mxu0
      %v648 = vpop.f32.mrb[0].mxu0
      %v649 = vadd.f32 %v444, %v648
      %v650 = vpop.f32.mrb[0].mxu0
      %651 = vmatprep.mubr.bf16.mxu0 0
      %652 = vmatmul.mubr.bf16.gmra.mrb[0].mxu0 %v354
      %v653 = vpop.f32.mrb[0].mxu0
      %v654 = vadd.f32 %v449, %v653
      %v655 = vpop.f32.mrb[0].mxu0
      %v656 = vpop.f32.mrb[0].mxu0
      %v657 = vadd.f32 %v452, %v656
      %v658 = vpop.f32.mrb[0].mxu0
      %659 = vmatprep.mubr.bf16.mxu0 0
      %660 = vmatmul.mubr.bf16.gmra.mrb[0].mxu0 %v357
      %v661 = vpop.f32.mrb[0].mxu0
      %v662 = vadd.f32 %v457, %v661
      %v663 = vpop.f32.mrb[0].mxu0
      %v664 = vpop.f32.mrb[0].mxu0
      %v665 = vadd.f32 %v460, %v664
      %v666 = vpop.f32.mrb[0].mxu0
      %667 = vmatprep.mubr.bf16.mxu0 0
      %668 = vmatmul.mubr.bf16.gmra.mrb[0].mxu0 %v360
      %v669 = vpop.f32.mrb[0].mxu0
      %v670 = vadd.f32 %v465, %v669
      %v671 = vpop.f32.mrb[0].mxu0
      %v672 = vpop.f32.mrb[0].mxu0
      %v673 = vadd.f32 %v468, %v672
      %v674 = vpop.f32.mrb[0].mxu0
      %675 = vmatprep.mubr.bf16.mxu0 0
      %676 = vmatmul.mubr.bf16.gmra.mrb[0].mxu0 %v363
      %v677 = vpop.f32.mrb[0].mxu0
      %v678 = vadd.f32 %v473, %v677
      %v679 = vpop.f32.mrb[0].mxu0
      %v680 = vpop.f32.mrb[0].mxu0
      %v681 = vadd.f32 %v476, %v680
      %v682 = vpop.f32.mrb[0].mxu0
      %683 = vmatprep.mubr.bf16.mxu0 0
      %684 = vmatmul.mubr.bf16.gmra.mrb[0].mxu0 %v366
      %v685 = vpop.f32.mrb[0].mxu0
      %v686 = vadd.f32 %v481, %v685
      %v687 = vpop.f32.mrb[0].mxu0
      %v688 = vpop.f32.mrb[0].mxu0
      %v689 = vadd.f32 %v484, %v688
      %v690 = vpop.f32.mrb[0].mxu0
      %691 = vmatprep.mubr.bf16.mxu0 0
      %692 = vmatmul.mubr.bf16.gmra.mrb[0].mxu0 %v369
      %v693 = vpop.f32.mrb[0].mxu0
      %v694 = vadd.f32 %v489, %v693
      %v695 = vpop.f32.mrb[0].mxu0
      %v696 = vpop.f32.mrb[0].mxu0
      %v697 = vadd.f32 %v492, %v696
      %v698 = vpop.f32.mrb[0].mxu0
      %699 = vmatprep.mubr.bf16.mxu0 0
      %700 = vmatmul.mubr.bf16.gmra.mrb[0].mxu0 %v372
      %v701 = vpop.f32.mrb[0].mxu0
      %v702 = vadd.f32 %v497, %v701
      %v703 = vpop.f32.mrb[0].mxu0
      %v704 = vpop.f32.mrb[0].mxu0
      %v705 = vadd.f32 %v500, %v704
      %v706 = vpop.f32.mrb[0].mxu0
      %707 = vmatprep.mubr.bf16.mxu0 0
      %708 = vmatmul.mubr.bf16.gmra.mrb[0].mxu0 %v375
      %v709 = vpop.f32.mrb[0].mxu0
      %v710 = vadd.f32 %v505, %v709
      %v711 = vpop.f32.mrb[0].mxu0
      %v712 = vpop.f32.mrb[0].mxu0
      %v713 = vadd.f32 %v508, %v712
      %v714 = vpop.f32.mrb[0].mxu0
      %715 = vmatprep.mubr.bf16.mxu0 0
      %716 = vmatmul.mubr.bf16.gmra.mrb[0].mxu0 %v378
      %v717 = vpop.f32.mrb[0].mxu0
      %v718 = vadd.f32 %v513, %v717
      %v719 = vpop.f32.mrb[0].mxu0
      %v720 = vpop.f32.mrb[0].mxu0
      %v721 = vadd.f32 %v516, %v720
      %v722 = vpop.f32.mrb[0].mxu0
      %723 = vmatprep.mubr.bf16.mxu0 0
      %724 = vmatmul.mubr.bf16.gmra.mrb[0].mxu0 %v381
      %v725 = vpop.f32.mrb[0].mxu0
      %v726 = vadd.f32 %v521, %v725
      %v727 = vpop.f32.mrb[0].mxu0
      %v728 = vpop.f32.mrb[0].mxu0
      %v729 = vadd.f32 %v524, %v728
      %v730 = vpop.f32.mrb[0].mxu0
      %731 = vmatprep.mubr.bf16.mxu0 0
      %732 = vmatmul.mubr.bf16.gmra.mrb[0].mxu0 %v384
      %v733 = vpop.f32.mrb[0].mxu0
      %v734 = vadd.f32 %v529, %v733
      %v735 = vpop.f32.mrb[0].mxu0
      %v736 = vpop.f32.mrb[0].mxu0
      %v737 = vadd.f32 %v532, %v736
      %v738 = vpop.f32.mrb[0].mxu0
      %739 = vmatprep.mubr.bf16.mxu0 0
      %740 = vmatmul.mubr.bf16.gmra.mrb[0].mxu0 %v387
      %v741 = vpop.f32.mrb[0].mxu0
      %v742 = vadd.f32 %v537, %v741
      %v743 = vpop.f32.mrb[0].mxu0
      %v744 = vpop.f32.mrb[0].mxu0
      %v745 = vadd.f32 %v540, %v744
      %v746 = vpop.f32.mrb[0].mxu0
      %747 = vmatprep.mubr.bf16.mxu0 0
      %748 = vmatmul.mubr.bf16.gmra.mrb[0].mxu0 %v390
      %v749 = vpop.f32.mrb[0].mxu0
      %v750 = vadd.f32 %v545, %v749
      %v751 = vpop.f32.mrb[0].mxu0
      %v752 = vpop.f32.mrb[0].mxu0
      %v753 = vadd.f32 %v548, %v752
      %v754 = vpop.f32.mrb[0].mxu0
      %755 = vmatprep.mubr.bf16.mxu0 0
      %756 = vmatmul.mubr.bf16.gmra.mrb[0].mxu0 %v393
      %v757 = vpop.f32.mrb[0].mxu0
      %v758 = vadd.f32 %v553, %v757
      %v759 = vpop.f32.mrb[0].mxu0
      %v760 = vpop.f32.mrb[0].mxu0
      %v761 = vadd.f32 %v556, %v760
      %v762 = vpop.f32.mrb[0].mxu0
      %763 = vdwg.mxu0
      %s764 = scalar_lea.vmem %s1, 96
      %v765 = vld [vmem:[%s764] sm:$0xf]
      %v766 = vld [vmem:[%s764 + $0x4] sm:$0xf]
      %v767 = vld [vmem:[%s764 + $0x8] sm:$0xf]
      %v768 = vld [vmem:[%s764 + $0xc] sm:$0xf]
      %v769 = vld [vmem:[%s764 + $0x10] sm:$0xf]
      %v770 = vld [vmem:[%s764 + $0x14] sm:$0xf]
      %v771 = vld [vmem:[%s764 + $0x18] sm:$0xf]
      %v772 = vld [vmem:[%s764 + $0x1c] sm:$0xf]
      %v773 = vld [vmem:[%s764 + $0x20] sm:$0xf]
      %v774 = vld [vmem:[%s764 + $0x24] sm:$0xf]
      %v775 = vld [vmem:[%s764 + $0x28] sm:$0xf]
      %v776 = vld [vmem:[%s764 + $0x2c] sm:$0xf]
      %v779 = vunpack.c.l.b16 %v206
      %v780 = vunpack.c.l.b16 %v207
      %v781 = vpack.c.b16 %v780, %v779
      %v794 = vunpack.c.l.b16 %v765
      %v795 = vunpack.c.l.b16 %v766
      %v796 = vunpack.c.l.b16 %v767
      %v797 = vunpack.c.l.b16 %v768
      %v798 = vunpack.c.l.b16 %v769
      %v799 = vunpack.c.l.b16 %v770
      %v800 = vunpack.c.l.b16 %v771
      %v801 = vunpack.c.l.b16 %v772
      %v802 = vunpack.c.l.b16 %v773
      %v803 = vunpack.c.l.b16 %v774
      %v804 = vunpack.c.l.b16 %v775
      %v805 = vunpack.c.l.b16 %v776
      %v806 = vpack.c.b16 %v795, %v794
      %v807 = vpack.c.b16 %v797, %v796
      %v808 = vpack.c.b16 %v799, %v798
      %v809 = vpack.c.b16 %v801, %v800
      %v810 = vpack.c.b16 %v803, %v802
      %v811 = vpack.c.b16 %v805, %v804
      %v819 = vsel %vm349, %v781, 0
      %821 = vmatprep.subr.bf16.mxu0 0
      %822 = vmatpush1.bf16.msra.mxu0 %v806
      %823 = vmatprep.subr.bf16.mxu0 0
      %824 = vmatpush1.bf16.msra.mxu0 %v807
      %825 = vmatprep.subr.bf16.mxu0 0
      %826 = vmatpush1.bf16.msra.mxu0 %v808
      %827 = vmatprep.subr.bf16.mxu0 0
      %828 = vmatpush1.bf16.msra.mxu0 %v809
      %829 = vmatprep.subr.bf16.mxu0 0
      %830 = vmatpush1.bf16.msra.mxu0 %v810
      %831 = vmatprep.subr.bf16.mxu0 0
      %832 = vmatpush1.bf16.msra.mxu0 %v811
      %833 = vmatprep.subr.bf16.mxu0 0
      %834 = vmatpush1.bf16.msra.mxu0 0
      %835 = vmatprep.subr.bf16.mxu0 0
      %836 = vmatpush1.bf16.msra.mxu0 0
      %837 = vmatprep.subr.bf16.mxu0 0
      %838 = vmatpush1.bf16.msra.mxu0 0
      %839 = vmatprep.subr.bf16.mxu0 0
      %840 = vmatpush1.bf16.msra.mxu0 0
      %841 = vmatprep.subr.bf16.mxu0 0
      %842 = vmatpush1.bf16.msra.mxu0 0
      %843 = vmatprep.subr.bf16.mxu0 0
      %844 = vmatpush1.bf16.msra.mxu0 0
      %845 = vmatprep.subr.bf16.mxu0 0
      %846 = vmatpush1.bf16.msra.mxu0 0
      %847 = vmatprep.subr.bf16.mxu0 0
      %848 = vmatpush1.bf16.msra.mxu0 0
      %849 = vmatprep.subr.bf16.mxu0 0
      %850 = vmatpush1.bf16.msra.mxu0 0
      %851 = vmatprep.subr.bf16.mxu0 0
      %852 = vmatpush1.bf16.msra.mxu0 0
      %853 = vmatprep.mubr.bf16.mxu0 0
      %854 = vmatmul.mubr.bf16.gmra.mrb[0].mxu0 %v354
      %v855 = vpop.f32.mrb[0].mxu0
      %v856 = vadd.f32 0.0, %v855
      %v857 = vpop.f32.mrb[0].mxu0
      %v858 = vpop.f32.mrb[0].mxu0
      %v859 = vadd.f32 0.0, %v858
      %v860 = vpop.f32.mrb[0].mxu0
      %861 = vmatprep.mubr.bf16.mxu0 0
      %862 = vmatmul.mubr.bf16.gmra.mrb[0].mxu0 %v357
      %v863 = vpop.f32.mrb[0].mxu0
      %v864 = vadd.f32 0.0, %v863
      %v865 = vpop.f32.mrb[0].mxu0
      %v866 = vpop.f32.mrb[0].mxu0
      %v867 = vadd.f32 0.0, %v866
      %v868 = vpop.f32.mrb[0].mxu0
      %869 = vmatprep.mubr.bf16.mxu0 0
      %870 = vmatmul.mubr.bf16.gmra.mrb[0].mxu0 %v360
      %v871 = vpop.f32.mrb[0].mxu0
      %v872 = vadd.f32 0.0, %v871
      %v873 = vpop.f32.mrb[0].mxu0
      %v874 = vpop.f32.mrb[0].mxu0
      %v875 = vadd.f32 0.0, %v874
      %v876 = vpop.f32.mrb[0].mxu0
      %877 = vmatprep.mubr.bf16.mxu0 0
      %878 = vmatmul.mubr.bf16.gmra.mrb[0].mxu0 %v363
      %v879 = vpop.f32.mrb[0].mxu0
      %v880 = vadd.f32 0.0, %v879
      %v881 = vpop.f32.mrb[0].mxu0
      %v882 = vpop.f32.mrb[0].mxu0
      %v883 = vadd.f32 0.0, %v882
      %v884 = vpop.f32.mrb[0].mxu0
      %885 = vmatprep.mubr.bf16.mxu0 0
      %886 = vmatmul.mubr.bf16.gmra.mrb[0].mxu0 %v366
      %v887 = vpop.f32.mrb[0].mxu0
      %v888 = vadd.f32 0.0, %v887
      %v889 = vpop.f32.mrb[0].mxu0
      %v890 = vpop.f32.mrb[0].mxu0
      %v891 = vadd.f32 0.0, %v890
      %v892 = vpop.f32.mrb[0].mxu0
      %893 = vmatprep.mubr.bf16.mxu0 0
      %894 = vmatmul.mubr.bf16.gmra.mrb[0].mxu0 %v369
      %v895 = vpop.f32.mrb[0].mxu0
      %v896 = vadd.f32 0.0, %v895
      %v897 = vpop.f32.mrb[0].mxu0
      %v898 = vpop.f32.mrb[0].mxu0
      %v899 = vadd.f32 0.0, %v898
      %v900 = vpop.f32.mrb[0].mxu0
      %901 = vmatprep.mubr.bf16.mxu0 0
      %902 = vmatmul.mubr.bf16.gmra.mrb[0].mxu0 %v372
      %v903 = vpop.f32.mrb[0].mxu0
      %v904 = vadd.f32 0.0, %v903
      %v905 = vpop.f32.mrb[0].mxu0
      %v906 = vpop.f32.mrb[0].mxu0
      %v907 = vadd.f32 0.0, %v906
      %v908 = vpop.f32.mrb[0].mxu0
      %909 = vmatprep.mubr.bf16.mxu0 0
      %910 = vmatmul.mubr.bf16.gmra.mrb[0].mxu0 %v375
      %v911 = vpop.f32.mrb[0].mxu0
      %v912 = vadd.f32 0.0, %v911
      %v913 = vpop.f32.mrb[0].mxu0
      %v914 = vpop.f32.mrb[0].mxu0
      %v915 = vadd.f32 0.0, %v914
      %v916 = vpop.f32.mrb[0].mxu0
      %917 = vmatprep.mubr.bf16.mxu0 0
      %918 = vmatmul.mubr.bf16.gmra.mrb[0].mxu0 %v378
      %v919 = vpop.f32.mrb[0].mxu0
      %v920 = vadd.f32 0.0, %v919
      %v921 = vpop.f32.mrb[0].mxu0
      %v922 = vpop.f32.mrb[0].mxu0
      %v923 = vadd.f32 0.0, %v922
      %v924 = vpop.f32.mrb[0].mxu0
      %925 = vmatprep.mubr.bf16.mxu0 0
      %926 = vmatmul.mubr.bf16.gmra.mrb[0].mxu0 %v381
      %v927 = vpop.f32.mrb[0].mxu0
      %v928 = vadd.f32 0.0, %v927
      %v929 = vpop.f32.mrb[0].mxu0
      %v930 = vpop.f32.mrb[0].mxu0
      %v931 = vadd.f32 0.0, %v930
      %v932 = vpop.f32.mrb[0].mxu0
      %933 = vmatprep.mubr.bf16.mxu0 0
      %934 = vmatmul.mubr.bf16.gmra.mrb[0].mxu0 %v384
      %v935 = vpop.f32.mrb[0].mxu0
      %v936 = vadd.f32 0.0, %v935
      %v937 = vpop.f32.mrb[0].mxu0
      %v938 = vpop.f32.mrb[0].mxu0
      %v939 = vadd.f32 0.0, %v938
      %v940 = vpop.f32.mrb[0].mxu0
      %941 = vmatprep.mubr.bf16.mxu0 0
      %942 = vmatmul.mubr.bf16.gmra.mrb[0].mxu0 %v387
      %v943 = vpop.f32.mrb[0].mxu0
      %v944 = vadd.f32 0.0, %v943
      %v945 = vpop.f32.mrb[0].mxu0
      %v946 = vpop.f32.mrb[0].mxu0
      %v947 = vadd.f32 0.0, %v946
      %v948 = vpop.f32.mrb[0].mxu0
      %949 = vmatprep.mubr.bf16.mxu0 0
      %950 = vmatmul.mubr.bf16.gmra.mrb[0].mxu0 %v390
      %v951 = vpop.f32.mrb[0].mxu0
      %v952 = vadd.f32 0.0, %v951
      %v953 = vpop.f32.mrb[0].mxu0
      %v954 = vpop.f32.mrb[0].mxu0
      %v955 = vadd.f32 0.0, %v954
      %v956 = vpop.f32.mrb[0].mxu0
      %957 = vmatprep.mubr.bf16.mxu0 0
      %958 = vmatmul.mubr.bf16.gmra.mrb[0].mxu0 %v393
      %v959 = vpop.f32.mrb[0].mxu0
      %v960 = vadd.f32 0.0, %v959
      %v961 = vpop.f32.mrb[0].mxu0
      %v962 = vpop.f32.mrb[0].mxu0
      %v963 = vadd.f32 0.0, %v962
      %v964 = vpop.f32.mrb[0].mxu0
      %965 = vmatprep.mubr.bf16.mxu0 0
      %966 = vmatmul.mubr.bf16.gmra.mrb[0].mxu0 %v396
      %v967 = vpop.f32.mrb[0].mxu0
      %v968 = vadd.f32 0.0, %v967
      %v969 = vpop.f32.mrb[0].mxu0
      %v970 = vpop.f32.mrb[0].mxu0
      %v971 = vadd.f32 0.0, %v970
      %v972 = vpop.f32.mrb[0].mxu0
      %973 = vmatprep.mubr.bf16.mxu0 0
      %974 = vmatmul.mubr.bf16.gmra.mrb[0].mxu0 %v819
      %v975 = vpop.f32.mrb[0].mxu0
      %v976 = vadd.f32 0.0, %v975
      %v977 = vpop.f32.mrb[0].mxu0
      %v978 = vpop.f32.mrb[0].mxu0
      %v979 = vadd.f32 0.0, %v978
      %v980 = vpop.f32.mrb[0].mxu0
      %981 = vdwg.mxu0
      %v982 = vadd.f32 %v638, %v856
      %v983 = vadd.f32 %v641, %v859
      %v984 = vadd.f32 %v646, %v864
      %v985 = vadd.f32 %v649, %v867
      %v986 = vadd.f32 %v654, %v872
      %v987 = vadd.f32 %v657, %v875
      %v988 = vadd.f32 %v662, %v880
      %v989 = vadd.f32 %v665, %v883
      %v990 = vadd.f32 %v670, %v888
      %v991 = vadd.f32 %v673, %v891
      %v992 = vadd.f32 %v678, %v896
      %v993 = vadd.f32 %v681, %v899
      %v994 = vadd.f32 %v686, %v904
      %v995 = vadd.f32 %v689, %v907
      %v996 = vadd.f32 %v694, %v912
      %v997 = vadd.f32 %v697, %v915
      %v998 = vadd.f32 %v702, %v920
      %v999 = vadd.f32 %v705, %v923
      %v1000 = vadd.f32 %v710, %v928
      %v1001 = vadd.f32 %v713, %v931
      %v1002 = vadd.f32 %v718, %v936
      %v1003 = vadd.f32 %v721, %v939
      %v1004 = vadd.f32 %v726, %v944
      %v1005 = vadd.f32 %v729, %v947
      %v1006 = vadd.f32 %v734, %v952
      %v1007 = vadd.f32 %v737, %v955
      %v1008 = vadd.f32 %v742, %v960
      %v1009 = vadd.f32 %v745, %v963
      %v1010 = vadd.f32 %v750, %v968
      %v1011 = vadd.f32 %v753, %v971
      %v1012 = vadd.f32 %v758, %v976
      %v1013 = vadd.f32 %v761, %v979
      %v1014 = vld [vmem:[%s2] sm:$0x1]
      %v1016 = vlaneseq
      %v1017 = vshrl.u32 %v1016, 7
      %v1018 = vsub.s32 0, %v1017
      %v1019 = vrot.slane %v1014, %v1018
      %v1021 = vadd.f32 %v982, %v1019
      %v1022 = vadd.f32 %v983, %v1019
      %v1023 = vadd.f32 %v984, %v1019
      %v1024 = vadd.f32 %v985, %v1019
      %v1025 = vadd.f32 %v986, %v1019
      %v1026 = vadd.f32 %v987, %v1019
      %v1027 = vadd.f32 %v988, %v1019
      %v1028 = vadd.f32 %v989, %v1019
      %v1029 = vadd.f32 %v990, %v1019
      %v1030 = vadd.f32 %v991, %v1019
      %v1031 = vadd.f32 %v992, %v1019
      %v1032 = vadd.f32 %v993, %v1019
      %v1033 = vadd.f32 %v994, %v1019
      %v1034 = vadd.f32 %v995, %v1019
      %v1035 = vadd.f32 %v996, %v1019
      %v1036 = vadd.f32 %v997, %v1019
      %v1037 = vadd.f32 %v998, %v1019
      %v1038 = vadd.f32 %v999, %v1019
      %v1039 = vadd.f32 %v1000, %v1019
      %v1040 = vadd.f32 %v1001, %v1019
      %v1041 = vadd.f32 %v1002, %v1019
      %v1042 = vadd.f32 %v1003, %v1019
      %v1043 = vadd.f32 %v1004, %v1019
      %v1044 = vadd.f32 %v1005, %v1019
      %v1045 = vadd.f32 %v1006, %v1019
      %v1046 = vadd.f32 %v1007, %v1019
      %v1047 = vadd.f32 %v1008, %v1019
      %v1048 = vadd.f32 %v1009, %v1019
      %v1049 = vadd.f32 %v1010, %v1019
      %v1050 = vadd.f32 %v1011, %v1019
      %v1051 = vadd.f32 %v1012, %v1019
      %v1052 = vadd.f32 %v1013, %v1019
      %v1053 = vmax.f32 %v1021, 0.0
      %v1054 = vmax.f32 %v1022, 0.0
      %v1055 = vmax.f32 %v1023, 0.0
      %v1056 = vmax.f32 %v1024, 0.0
      %v1057 = vmax.f32 %v1025, 0.0
      %v1058 = vmax.f32 %v1026, 0.0
      %v1059 = vmax.f32 %v1027, 0.0
      %v1060 = vmax.f32 %v1028, 0.0
      %v1061 = vmax.f32 %v1029, 0.0
      %v1062 = vmax.f32 %v1030, 0.0
      %v1063 = vmax.f32 %v1031, 0.0
      %v1064 = vmax.f32 %v1032, 0.0
      %v1065 = vmax.f32 %v1033, 0.0
      %v1066 = vmax.f32 %v1034, 0.0
      %v1067 = vmax.f32 %v1035, 0.0
      %v1068 = vmax.f32 %v1036, 0.0
      %v1069 = vmax.f32 %v1037, 0.0
      %v1070 = vmax.f32 %v1038, 0.0
      %v1071 = vmax.f32 %v1039, 0.0
      %v1072 = vmax.f32 %v1040, 0.0
      %v1073 = vmax.f32 %v1041, 0.0
      %v1074 = vmax.f32 %v1042, 0.0
      %v1075 = vmax.f32 %v1043, 0.0
      %v1076 = vmax.f32 %v1044, 0.0
      %v1077 = vmax.f32 %v1045, 0.0
      %v1078 = vmax.f32 %v1046, 0.0
      %v1079 = vmax.f32 %v1047, 0.0
      %v1080 = vmax.f32 %v1048, 0.0
      %v1081 = vmax.f32 %v1049, 0.0
      %v1082 = vmax.f32 %v1050, 0.0
      %v1083 = vmax.f32 %v1051, 0.0
      %v1084 = vmax.f32 %v1052, 0.0
      %v1085 = vpack.c.bf16 %v1054, %v1053
      %v1086 = vpack.c.bf16 %v1056, %v1055
      %v1087 = vpack.c.bf16 %v1058, %v1057
      %v1088 = vpack.c.bf16 %v1060, %v1059
      %v1089 = vpack.c.bf16 %v1062, %v1061
      %v1090 = vpack.c.bf16 %v1064, %v1063
      %v1091 = vpack.c.bf16 %v1066, %v1065
      %v1092 = vpack.c.bf16 %v1068, %v1067
      %v1093 = vpack.c.bf16 %v1070, %v1069
      %v1094 = vpack.c.bf16 %v1072, %v1071
      %v1095 = vpack.c.bf16 %v1074, %v1073
      %v1096 = vpack.c.bf16 %v1076, %v1075
      %v1097 = vpack.c.bf16 %v1078, %v1077
      %v1098 = vpack.c.bf16 %v1080, %v1079
      %v1099 = vpack.c.bf16 %v1082, %v1081
      %v1100 = vpack.c.bf16 %v1084, %v1083
      %v1117 = vunpack.c.l.b16 %v1085
      %v1118 = vunpack.c.h.b16 %v1085
      %v1119 = vunpack.c.l.b16 %v1086
      %v1120 = vunpack.c.h.b16 %v1086
      %v1121 = vunpack.c.l.b16 %v1087
      %v1122 = vunpack.c.h.b16 %v1087
      %v1123 = vunpack.c.l.b16 %v1088
      %v1124 = vunpack.c.h.b16 %v1088
      %v1125 = vunpack.c.l.b16 %v1089
      %v1126 = vunpack.c.h.b16 %v1089
      %v1127 = vunpack.c.l.b16 %v1090
      %v1128 = vunpack.c.h.b16 %v1090
      %v1129 = vunpack.c.l.b16 %v1091
      %v1130 = vunpack.c.h.b16 %v1091
      %v1131 = vunpack.c.l.b16 %v1092
      %v1132 = vunpack.c.h.b16 %v1092
      %v1133 = vunpack.c.l.b16 %v1093
      %v1134 = vunpack.c.h.b16 %v1093
      %v1135 = vunpack.c.l.b16 %v1094
      %v1136 = vunpack.c.h.b16 %v1094
      %v1137 = vunpack.c.l.b16 %v1095
      %v1138 = vunpack.c.h.b16 %v1095
      %v1139 = vunpack.c.l.b16 %v1096
      %v1140 = vunpack.c.h.b16 %v1096
      %v1141 = vunpack.c.l.b16 %v1097
      %v1142 = vunpack.c.h.b16 %v1097
      %v1143 = vunpack.c.l.b16 %v1098
      %v1144 = vunpack.c.h.b16 %v1098
      %v1145 = vunpack.c.l.b16 %v1099
      %v1146 = vunpack.c.h.b16 %v1099
      %v1147 = vunpack.c.l.b16 %v1100
      %v1148 = vunpack.c.h.b16 %v1100
      %v1149 = vpack.c.b16 %v1117, %v1117
      %v1150 = vpack.c.b16 %v1118, %v1118
      %v1151 = vpack.c.b16 %v1119, %v1119
      %v1152 = vpack.c.b16 %v1120, %v1120
      %v1153 = vpack.c.b16 %v1121, %v1121
      %v1154 = vpack.c.b16 %v1122, %v1122
      %v1155 = vpack.c.b16 %v1123, %v1123
      %v1156 = vpack.c.b16 %v1124, %v1124
      %v1157 = vpack.c.b16 %v1125, %v1125
      %v1158 = vpack.c.b16 %v1126, %v1126
      %v1159 = vpack.c.b16 %v1127, %v1127
      %v1160 = vpack.c.b16 %v1128, %v1128
      %v1161 = vpack.c.b16 %v1129, %v1129
      %v1162 = vpack.c.b16 %v1130, %v1130
      %v1163 = vpack.c.b16 %v1131, %v1131
      %v1164 = vpack.c.b16 %v1132, %v1132
      %v1165 = vpack.c.b16 %v1133, %v1133
      %v1166 = vpack.c.b16 %v1134, %v1134
      %v1167 = vpack.c.b16 %v1135, %v1135
      %v1168 = vpack.c.b16 %v1136, %v1136
      %v1169 = vpack.c.b16 %v1137, %v1137
      %v1170 = vpack.c.b16 %v1138, %v1138
      %v1171 = vpack.c.b16 %v1139, %v1139
      %v1172 = vpack.c.b16 %v1140, %v1140
      %v1173 = vpack.c.b16 %v1141, %v1141
      %v1174 = vpack.c.b16 %v1142, %v1142
      %v1175 = vpack.c.b16 %v1143, %v1143
      %v1176 = vpack.c.b16 %v1144, %v1144
      %v1177 = vpack.c.b16 %v1145, %v1145
      %v1178 = vpack.c.b16 %v1146, %v1146
      %v1179 = vpack.c.b16 %v1147, %v1147
      %v1180 = vpack.c.b16 %v1148, %v1148
      %vm1213 = vcmask 257024
      %1214 = vst.msk [vmem:[%s170] sm:$0xf] %vm1213, %v1149
      %1215 = vst.msk [vmem:[%s170 + $0x4] sm:$0xf] %vm1213, %v1150
      %1216 = vst.msk [vmem:[%s170 + $0x8] sm:$0xf] %vm1213, %v1151
      %1217 = vst.msk [vmem:[%s170 + $0xc] sm:$0xf] %vm1213, %v1152
      %1218 = vst.msk [vmem:[%s170 + $0x10] sm:$0xf] %vm1213, %v1153
      %1219 = vst.msk [vmem:[%s170 + $0x14] sm:$0xf] %vm1213, %v1154
      %1220 = vst.msk [vmem:[%s170 + $0x18] sm:$0xf] %vm1213, %v1155
      %1221 = vst.msk [vmem:[%s170 + $0x1c] sm:$0xf] %vm1213, %v1156
      %1222 = vst.msk [vmem:[%s170 + $0x20] sm:$0xf] %vm1213, %v1157
      %1223 = vst.msk [vmem:[%s170 + $0x24] sm:$0xf] %vm1213, %v1158
      %1224 = vst.msk [vmem:[%s170 + $0x28] sm:$0xf] %vm1213, %v1159
      %1225 = vst.msk [vmem:[%s170 + $0x2c] sm:$0xf] %vm1213, %v1160
      %1226 = vst.msk [vmem:[%s170 + $0x30] sm:$0xf] %vm1213, %v1161
      %1227 = vst.msk [vmem:[%s170 + $0x34] sm:$0xf] %vm1213, %v1162
      %1228 = vst.msk [vmem:[%s170 + $0x38] sm:$0xf] %vm1213, %v1163
      %1229 = vst.msk [vmem:[%s170 + $0x3c] sm:$0xf] %vm1213, %v1164
      %1230 = vst.msk [vmem:[%s170 + $0x40] sm:$0xf] %vm1213, %v1165
      %1231 = vst.msk [vmem:[%s170 + $0x44] sm:$0xf] %vm1213, %v1166
      %1232 = vst.msk [vmem:[%s170 + $0x48] sm:$0xf] %vm1213, %v1167
      %1233 = vst.msk [vmem:[%s170 + $0x4c] sm:$0xf] %vm1213, %v1168
      %1234 = vst.msk [vmem:[%s170 + $0x50] sm:$0xf] %vm1213, %v1169
      %1235 = vst.msk [vmem:[%s170 + $0x54] sm:$0xf] %vm1213, %v1170
      %1236 = vst.msk [vmem:[%s170 + $0x58] sm:$0xf] %vm1213, %v1171
      %1237 = vst.msk [vmem:[%s170 + $0x5c] sm:$0xf] %vm1213, %v1172
      %1238 = vst.msk [vmem:[%s170 + $0x60] sm:$0xf] %vm1213, %v1173
      %1239 = vst.msk [vmem:[%s170 + $0x64] sm:$0xf] %vm1213, %v1174
      %1240 = vst.msk [vmem:[%s170 + $0x68] sm:$0xf] %vm1213, %v1175
      %1241 = vst.msk [vmem:[%s170 + $0x6c] sm:$0xf] %vm1213, %v1176
      %1242 = vst.msk [vmem:[%s170 + $0x70] sm:$0xf] %vm1213, %v1177
      %1243 = vst.msk [vmem:[%s170 + $0x74] sm:$0xf] %vm1213, %v1178
      %1244 = vst.msk [vmem:[%s170 + $0x78] sm:$0xf] %vm1213, %v1179
      %1245 = vst.msk [vmem:[%s170 + $0x7c] sm:$0xf] %vm1213, %v1180
      %p1246 = scmp.lt.s32.totalorder %s14, 1
      %s1247 = scalar_select %p1246, %s14, 1
      %s1248 = smul.addr %s1247, 32
      %s1249 = smul.addr %s1248, 4
      %s1250 = scalar_lea.vmem %s3, %s1249
      // Predicated region
      $region33: #{teacher_forward.5} parent=31 // pred_check
        %p1251 = pneg %p100
      $region34: #{teacher_forward.5} parent=31 // pred_check_branch
        %1253 = sbr.rel (%p1251) target = $region36
      $region35: #{teacher_forward.5} parent=31 // pred_region
        _
      $region36: #{teacher_forward.5} parent=31 // pred_fallthru
        _
    $region32: #{teacher_forward.5} parent=5 // pred_fallthru
      _
    %p1254 = scmp.le.s32.totalorder 2, %s9
    // Predicated region
    $region37: #{teacher_forward.5} parent=5 // pred_check
      %p1255 = pneg %p1254
    $region38: #{teacher_forward.5} parent=5 // pred_check_branch
      %1257 = sbr.rel (%p1255) target = $region40
    $region39: #{teacher_forward.5} parent=5 // pred_region
      %s1258 = ssub.s32 %s9, 2
      // Predicated region
      $region41: #{teacher_forward.5} parent=39 // pred_check
        %p1259 = pneg %p106
      $region42: #{teacher_forward.5} parent=39 // pred_check_branch
        %1261 = sbr.rel (%p1259) target = $region44
      $region43: #{teacher_forward.5} parent=39 // pred_region
        %p1262 = scmp.lt.s32.totalorder %s15, 1
        %s1263 = scalar_select %p1262, %s15, 1
        %s1264 = smul.addr %s1263, 32
        %s1265 = smul.addr %s1264, 4
        %s1266 = scalar_lea.vmem %s3, %s1265
      $region44: #{teacher_forward.5} parent=39 // pred_fallthru
        _
    $region40: #{teacher_forward.5} parent=5 // pred_fallthru
      _
  $region6: #{teacher_forward.5} parent=0 // loop_footer
    %s13 = sadd.s32 1, %s9
  $region7: #{teacher_forward.5} parent=0 // loop_footer_branch
    %8 = sbr.rel target = $region3
  $region8: #{teacher_forward.5} parent=0 // loop_exit
    _

// kernel: custom-call
$region0: #{custom-call}
  #allocation0 [shape = 'u32[8,128]{1,0}', space=vmem, size = 0x1000, scoped, tag = 'scratch']
  #allocation1 [shape = 'u32[8,128]{1,0}', space=vmem, size = 0x1000, scoped, tag = 'scratch']
  #allocation2 [shape = 'u32[8,128]{1,0}', space=vmem, size = 0x1000, scoped, tag = 'scratch']
  #allocation3 [shape = 'u32[8,128]{1,0}', space=vmem, size = 0x1000, scoped, tag = 'scratch']
  #allocation4 [shape = 'u32[8,128]{1,0}', space=vmem, size = 0x1000, scoped, tag = 'scratch']
  #allocation5 [shape = 'u32[8,128]{1,0}', space=vmem, size = 0x1000, scoped, tag = 'scratch']
  #allocation6 [shape = 'u32[8,128]{1,0}', space=vmem, size = 0x1000, scoped, tag = 'scratch']
  %s0 = inlined_call_operand.vmem [shape: f32[2,768], index: 0, kind: input, shape index: {}]
  %s1 = inlined_call_operand.vmem [shape: f32[2,8], index: 1, kind: output, shape index: {0}]
  %s2 = inlined_call_operand.vmem [shape: s32[2,8], index: 2, kind: output, shape index: {1}]
  %3 = xla_tuple %s1, %s2
  %4 = xla_tuple 2147483648, 2147483647
  $region1: #{custom-call} parent=0
    #allocation7 [shape = 'u8[4096]{0}', space=vmem, size = 0x1000, scoped, tag = 'operand span for operand 1']
    #allocation8 [shape = 'u8[1024]{0}', space=vmem, size = 0x400, scoped, tag = 'packed  for operand 1']
    #allocation9 [shape = 'u8[4096]{0}', space=vmem, size = 0x1000, scoped, tag = 'operand span for operand 2']
    #allocation10 [shape = 'u8[1024]{0}', space=vmem, size = 0x400, scoped, tag = 'packed  for operand 2']
    #allocation11 [shape = 'f32[8,2]{1,0:T(8,128)}', space=vmem, size = 0x1000, scoped, tag = 'scoped memory for custom-call']
    #allocation12 [shape = 'f32[8,2]{1,0:T(8,128)}', space=vmem, size = 0x1000, scoped, tag = 'scoped memory for custom-call']
    #allocation13 [shape = 's32[8,2]{1,0:T(8,128)}', space=vmem, size = 0x1000, scoped, tag = 'scoped memory for custom-call']
    #allocation14 [shape = 's32[8,2]{1,0:T(8,128)}', space=vmem, size = 0x1000, scoped, tag = 'scoped memory for custom-call']
    %5 = xla_tuple [#allocation7], [#allocation9]
    %6 = vst [vmem:[#allocation11] sm:$0xff] 2147483648
    %7 = vst [vmem:[#allocation13] sm:$0xff] 2147483647
    %8 = xla_tuple [#allocation11], [#allocation13]
    %9 = xla_tuple [#allocation12], [#allocation14]
    $region2: #{custom-call} parent=1
      #allocation15 [shape = 'u8[8192]{0}', space=vmem, size = 0x2000, scoped, tag = 'operand span for operand 0']
      #allocation16 [shape = 's32[2048]{0}', space=vmem, size = 0x2000, scoped, tag = 'scoped memory for custom-call']
      // Predicated region
      $region3: #{custom-call} parent=2 // pred_check
        _
      $region4: #{custom-call} parent=2 // pred_check_branch
        %11 = sbr.rel (0) target = $region6
      $region5: #{custom-call} parent=2 // pred_region
        // Predicated region
        $region7: #{custom-call} parent=5 // pred_check
          _
        $region8: #{custom-call} parent=5 // pred_check_branch
          %13 = sbr.rel (0) target = $region10
        $region9: #{custom-call} parent=5 // pred_region
          // Predicated region
          $region11: #{custom-call} parent=9 // pred_check
            _
          $region12: #{custom-call} parent=9 // pred_check_branch
            %15 = sbr.rel (0) target = $region14
          $region13: #{custom-call} parent=9 // pred_region
            %s16 = scalar_lea.vmem %s0, 8
            %s17 = scalar_lea.vmem [#allocation15], 8
            loop: start=0, step=1, limit=1
            $region15: #{custom-call} parent=13 // loop_pre_header
              _
            $region16: #{custom-call} parent=13 // loop_header
              %s19 = sphi 0, %s23
              %p20 = scmp.ge.s32.totalorder %s19, 1
              %s24 = sphi %s0, %s0
              %s25 = sphi [#allocation15], [#allocation15]
            $region17: #{custom-call} parent=13 // loop_header_branch
              %22 = sbr.rel (%p20) target = $region21
            $region18: #{custom-call} parent=13 // loop_body
              %v26 = vld [vmem:[%s24] sm:$0xff]
              %27 = vst [vmem:[%s25] sm:$0xff] %v26
            $region19: #{custom-call} parent=13 // loop_footer
              %s23 = sadd.s32 1, %s19
            $region20: #{custom-call} parent=13 // loop_footer_branch
              %18 = sbr.rel target = $region16
            $region21: #{custom-call} parent=13 // loop_exit
              _
            loop: start=0, step=1, limit=1
            $region22: #{custom-call} parent=13 // loop_pre_header
              _
            $region23: #{custom-call} parent=13 // loop_header
              %s30 = sphi 0, %s34
              %p31 = scmp.ge.s32.totalorder %s30, 1
              %s35 = sphi %s16, %s16
              %s36 = sphi %s17, %s17
            $region24: #{custom-call} parent=13 // loop_header_branch
              %33 = sbr.rel (%p31) target = $region28
            $region25: #{custom-call} parent=13 // loop_body
              %v37 = vld [vmem:[%s35] sm:$0xf]
              %38 = vst [vmem:[%s36] sm:$0xf] %v37
            $region26: #{custom-call} parent=13 // loop_footer
              %s34 = sadd.s32 1, %s30
            $region27: #{custom-call} parent=13 // loop_footer_branch
              %29 = sbr.rel target = $region23
            $region28: #{custom-call} parent=13 // loop_exit
              _
          $region14: #{custom-call} parent=9 // pred_fallthru
            _
        $region10: #{custom-call} parent=5 // pred_fallthru
          _
        %39 = vnop
      $region6: #{custom-call} parent=2 // pred_fallthru
        _
      // Predicated region
      $region29: #{custom-call} parent=2 // pred_check
        _
      $region30: #{custom-call} parent=2 // pred_check_branch
        %41 = sbr.rel (0) target = $region32
      $region31: #{custom-call} parent=2 // pred_region
        _
      $region32: #{custom-call} parent=2 // pred_fallthru
        _
      %v42 = vlaneseq
      %v43 = vand.u32 %v42, 127
      %v44 = vlaneseq
      %v45 = vshrl.u32 %v44, 7
      %v46 = vshrl.u32 %v45, 1
      %v47 = vand.u32 %v45, 1
      %v48 = vmul.u32 %v46, 128
      %v49 = vadd.s32 %v43, %v48
      %v51 = vld [vmem:[#allocation15] sm:$0xff]
      %vm52 = vcmp.lt.s32.totalorder %v51, 0
      %v53 = vsub.s32 2147483647, %v51
      %v54 = vsel %vm52, %v53, %v51
      %vm56 = vcmp.lt.s32.totalorder %v49, 768
      %v57 = vsel %vm56, %v54, 2147483648
      %58 = vst [vmem:[#allocation15] sm:$0xff] %v57
      %s59 = scalar_lea.vmem [#allocation15], 8
      %v60 = vld [vmem:[%s59] sm:$0xff]
      %vm61 = vcmp.lt.s32.totalorder %v60, 0
      %v62 = vsub.s32 2147483647, %v60
      %v63 = vsel %vm61, %v62, %v60
      %v64 = vadd.s32 %v49, 512
      %vm65 = vcmp.lt.s32.totalorder %v64, 768
      %v66 = vsel %vm65, %v63, 2147483648
      %67 = vst [vmem:[%s59] sm:$0xff] %v66
      %v68 = vlaneseq
      %v69 = vand.u32 %v68, 127
      %v70 = vlaneseq
      %v71 = vshrl.u32 %v70, 7
      %v72 = vshrl.u32 %v71, 1
      %v73 = vand.u32 %v71, 1
      %v74 = vmul.u32 %v72, 128
      %v75 = vadd.s32 %v69, %v74
      %78 = vst [vmem:[#allocation16] sm:$0xff] %v75
      %v79 = vadd.s32 %v75, 512
      %s80 = scalar_lea.vmem [#allocation16], 8
      %81 = vst [vmem:[%s80] sm:$0xff] %v79
      %82 = xla_tuple [#allocation15], [#allocation16]
      %83 = vst [vmem:[#allocation12] sm:$0xff] 2147483648
      %84 = vst [vmem:[#allocation14] sm:$0xff] 2147483647
      %85 = xla_tuple [#allocation12], [#allocation14]
      loop: start=0, step=1, limit=8
      $region33: #{custom-call} parent=2 // loop_pre_header
        _
      $region34: #{custom-call} parent=2 // loop_header
        %s87 = sphi 0, %s91
        %p88 = scmp.ge.s32.totalorder %s87, 8
      $region35: #{custom-call} parent=2 // loop_header_branch
        %90 = sbr.rel (%p88) target = $region39
      $region36: #{custom-call} parent=2 // loop_body
        %v92 = vld [vmem:[#allocation15] sm:$0xff]
        %v93 = vld [vmem:[#allocation16] sm:$0xff]
        %94 = xla_tuple %v92, %v93
        %s95 = scalar_lea.vmem [#allocation15], 8
        %v96 = vld [vmem:[%s95] sm:$0xff]
        %s97 = scalar_lea.vmem [#allocation16], 8
        %v98 = vld [vmem:[%s97] sm:$0xff]
        %99 = xla_tuple %v96, %v98
        %vm100 = vcmp.gt.s32.totalorder %v96, %v92
        %vm101 = vcmp.eq.s32.totalorder %v96, %v92
        %vm102 = vcmp.lt.s32.totalorder %v98, %v93
        %vm103 = vmand %vm101, %vm102
        %vm104 = vmor %vm100, %vm103
        %v105 = vsel %vm104, %v96, %v92
        %v106 = vsel %vm104, %v98, %v93
        %107 = xla_tuple %v105, %v106
        %v108 = vrot.slane %v105, 2
        %v109 = vrot.slane %v106, 2
        %110 = xla_tuple %v108, %v109
        %vm111 = vcmp.gt.s32.totalorder %v108, %v105
        %vm112 = vcmp.eq.s32.totalorder %v108, %v105
        %vm113 = vcmp.lt.s32.totalorder %v109, %v106
        %vm114 = vmand %vm112, %vm113
        %vm115 = vmor %vm111, %vm114
        %v116 = vsel %vm115, %v108, %v105
        %v117 = vsel %vm115, %v109, %v106
        %118 = xla_tuple %v116, %v117
        %v119 = vrot.slane %v116, 2
        %v120 = vrot.slane %v117, 2
        %121 = xla_tuple %v119, %v120
        %vm122 = vcmp.gt.s32.totalorder %v119, %v116
        %vm123 = vcmp.eq.s32.totalorder %v119, %v116
        %vm124 = vcmp.lt.s32.totalorder %v120, %v117
        %vm125 = vmand %vm123, %vm124
        %vm126 = vmor %vm122, %vm125
        %v127 = vsel %vm126, %v119, %v116
        %v128 = vsel %vm126, %v120, %v117
        %129 = xla_tuple %v127, %v128
        %v130 = vrot.slane %v127, 2
        %v131 = vrot.slane %v128, 2
        %132 = xla_tuple %v130, %v131
        %vm133 = vcmp.gt.s32.totalorder %v130, %v127
        %vm134 = vcmp.eq.s32.totalorder %v130, %v127
        %vm135 = vcmp.lt.s32.totalorder %v131, %v128
        %vm136 = vmand %vm134, %vm135
        %vm137 = vmor %vm133, %vm136
        %v138 = vsel %vm137, %v130, %v127
        %v139 = vsel %vm137, %v131, %v128
        %140 = xla_tuple %v138, %v139
        %141 = vxpose.xlu0.b32.start [1/16] %v138, 128
        %142 = vxpose.xlu0.b32.cont [2/16] %v138, 128
        %143 = vxpose.xlu0.b32.cont [3/16] %v138, 128
        %144 = vxpose.xlu0.b32.cont [4/16] %v138, 128
        %145 = vxpose.xlu0.b32.cont [5/16] %v138, 128
        %146 = vxpose.xlu0.b32.cont [6/16] %v138, 128
        %147 = vxpose.xlu0.b32.cont [7/16] %v138, 128
        %148 = vxpose.xlu0.b32.cont [8/16] %v138, 128
        %149 = vxpose.xlu0.b32.cont [9/16] %v138, 128
        %150 = vxpose.xlu0.b32.cont [10/16] %v138, 128
        %151 = vxpose.xlu0.b32.cont [11/16] %v138, 128
        %152 = vxpose.xlu0.b32.cont [12/16] %v138, 128
        %153 = vxpose.xlu0.b32.cont [13/16] %v138, 128
        %154 = vxpose.xlu0.b32.cont [14/16] %v138, 128
        %155 = vxpose.xlu0.b32.cont [15/16] %v138, 128
        %156 = vxpose.xlu0.b32.end [16/16] %v138, 128
        %v157 = vpop.trf.xlu0
        %v158 = vpop.trf.xlu0
        %v159 = vpop.trf.xlu0
        %v160 = vpop.trf.xlu0
        %v161 = vpop.trf.xlu0
        %v162 = vpop.trf.xlu0
        %v163 = vpop.trf.xlu0
        %v164 = vpop.trf.xlu0
        %v165 = vpop.trf.xlu0
        %v166 = vpop.trf.xlu0
        %v167 = vpop.trf.xlu0
        %v168 = vpop.trf.xlu0
        %v169 = vpop.trf.xlu0
        %v170 = vpop.trf.xlu0
        %v171 = vpop.trf.xlu0
        %v172 = vpop.trf.xlu0
        %173 = vxpose.xlu0.b32.start [1/16] %v139, 128
        %174 = vxpose.xlu0.b32.cont [2/16] %v139, 128
        %175 = vxpose.xlu0.b32.cont [3/16] %v139, 128
        %176 = vxpose.xlu0.b32.cont [4/16] %v139, 128
        %177 = vxpose.xlu0.b32.cont [5/16] %v139, 128
        %178 = vxpose.xlu0.b32.cont [6/16] %v139, 128
        %179 = vxpose.xlu0.b32.cont [7/16] %v139, 128
        %180 = vxpose.xlu0.b32.cont [8/16] %v139, 128
        %181 = vxpose.xlu0.b32.cont [9/16] %v139, 128
        %182 = vxpose.xlu0.b32.cont [10/16] %v139, 128
        %183 = vxpose.xlu0.b32.cont [11/16] %v139, 128
        %184 = vxpose.xlu0.b32.cont [12/16] %v139, 128
        %185 = vxpose.xlu0.b32.cont [13/16] %v139, 128
        %186 = vxpose.xlu0.b32.cont [14/16] %v139, 128
        %187 = vxpose.xlu0.b32.cont [15/16] %v139, 128
        %188 = vxpose.xlu0.b32.end [16/16] %v139, 128
        %v189 = vpop.trf.xlu0
        %v190 = vpop.trf.xlu0
        %v191 = vpop.trf.xlu0
        %v192 = vpop.trf.xlu0
        %v193 = vpop.trf.xlu0
        %v194 = vpop.trf.xlu0
        %v195 = vpop.trf.xlu0
        %v196 = vpop.trf.xlu0
        %v197 = vpop.trf.xlu0
        %v198 = vpop.trf.xlu0
        %v199 = vpop.trf.xlu0
        %v200 = vpop.trf.xlu0
        %v201 = vpop.trf.xlu0
        %v202 = vpop.trf.xlu0
        %v203 = vpop.trf.xlu0
        %v204 = vpop.trf.xlu0
        %205 = xla_tuple %v157, %v189
        %206 = xla_tuple %v158, %v190
        %vm207 = vcmp.gt.s32.totalorder %v158, %v157
        %vm208 = vcmp.eq.s32.totalorder %v158, %v157
        %vm209 = vcmp.lt.s32.totalorder %v190, %v189
        %vm210 = vmand %vm208, %vm209
        %vm211 = vmor %vm207, %vm210
        %v212 = vsel %vm211, %v158, %v157
        %v213 = vsel %vm211, %v190, %v189
        %214 = xla_tuple %v212, %v213
        %215 = xla_tuple %v159, %v191
        %vm216 = vcmp.gt.s32.totalorder %v159, %v212
        %vm217 = vcmp.eq.s32.totalorder %v159, %v212
        %vm218 = vcmp.lt.s32.totalorder %v191, %v213
        %vm219 = vmand %vm217, %vm218
        %vm220 = vmor %vm216, %vm219
        %v221 = vsel %vm220, %v159, %v212
        %v222 = vsel %vm220, %v191, %v213
        %223 = xla_tuple %v221, %v222
        %224 = xla_tuple %v160, %v192
        %vm225 = vcmp.gt.s32.totalorder %v160, %v221
        %vm226 = vcmp.eq.s32.totalorder %v160, %v221
        %vm227 = vcmp.lt.s32.totalorder %v192, %v222
        %vm228 = vmand %vm226, %vm227
        %vm229 = vmor %vm225, %vm228
        %v230 = vsel %vm229, %v160, %v221
        %v231 = vsel %vm229, %v192, %v222
        %232 = xla_tuple %v230, %v231
        %233 = xla_tuple %v161, %v193
        %vm234 = vcmp.gt.s32.totalorder %v161, %v230
        %vm235 = vcmp.eq.s32.totalorder %v161, %v230
        %vm236 = vcmp.lt.s32.totalorder %v193, %v231
        %vm237 = vmand %vm235, %vm236
        %vm238 = vmor %vm234, %vm237
        %v239 = vsel %vm238, %v161, %v230
        %v240 = vsel %vm238, %v193, %v231
        %241 = xla_tuple %v239, %v240
        %242 = xla_tuple %v162, %v194
        %vm243 = vcmp.gt.s32.totalorder %v162, %v239
        %vm244 = vcmp.eq.s32.totalorder %v162, %v239
        %vm245 = vcmp.lt.s32.totalorder %v194, %v240
        %vm246 = vmand %vm244, %vm245
        %vm247 = vmor %vm243, %vm246
        %v248 = vsel %vm247, %v162, %v239
        %v249 = vsel %vm247, %v194, %v240
        %250 = xla_tuple %v248, %v249
        %251 = xla_tuple %v163, %v195
        %vm252 = vcmp.gt.s32.totalorder %v163, %v248
        %vm253 = vcmp.eq.s32.totalorder %v163, %v248
        %vm254 = vcmp.lt.s32.totalorder %v195, %v249
        %vm255 = vmand %vm253, %vm254
        %vm256 = vmor %vm252, %vm255
        %v257 = vsel %vm256, %v163, %v248
        %v258 = vsel %vm256, %v195, %v249
        %259 = xla_tuple %v257, %v258
        %260 = xla_tuple %v164, %v196
        %vm261 = vcmp.gt.s32.totalorder %v164, %v257
        %vm262 = vcmp.eq.s32.totalorder %v164, %v257
        %vm263 = vcmp.lt.s32.totalorder %v196, %v258
        %vm264 = vmand %vm262, %vm263
        %vm265 = vmor %vm261, %vm264
        %v266 = vsel %vm265, %v164, %v257
        %v267 = vsel %vm265, %v196, %v258
        %268 = xla_tuple %v266, %v267
        %269 = xla_tuple %v165, %v197
        %vm270 = vcmp.gt.s32.totalorder %v165, %v266
        %vm271 = vcmp.eq.s32.totalorder %v165, %v266
        %vm272 = vcmp.lt.s32.totalorder %v197, %v267
        %vm273 = vmand %vm271, %vm272
        %vm274 = vmor %vm270, %vm273
        %v275 = vsel %vm274, %v165, %v266
        %v276 = vsel %vm274, %v197, %v267
        %277 = xla_tuple %v275, %v276
        %278 = xla_tuple %v166, %v198
        %vm279 = vcmp.gt.s32.totalorder %v166, %v275
        %vm280 = vcmp.eq.s32.totalorder %v166, %v275
        %vm281 = vcmp.lt.s32.totalorder %v198, %v276
        %vm282 = vmand %vm280, %vm281
        %vm283 = vmor %vm279, %vm282
        %v284 = vsel %vm283, %v166, %v275
        %v285 = vsel %vm283, %v198, %v276
        %286 = xla_tuple %v284, %v285
        %287 = xla_tuple %v167, %v199
        %vm288 = vcmp.gt.s32.totalorder %v167, %v284
        %vm289 = vcmp.eq.s32.totalorder %v167, %v284
        %vm290 = vcmp.lt.s32.totalorder %v199, %v285
        %vm291 = vmand %vm289, %vm290
        %vm292 = vmor %vm288, %vm291
        %v293 = vsel %vm292, %v167, %v284
        %v294 = vsel %vm292, %v199, %v285
        %295 = xla_tuple %v293, %v294
        %296 = xla_tuple %v168, %v200
        %vm297 = vcmp.gt.s32.totalorder %v168, %v293
        %vm298 = vcmp.eq.s32.totalorder %v168, %v293
        %vm299 = vcmp.lt.s32.totalorder %v200, %v294
        %vm300 = vmand %vm298, %vm299
        %vm301 = vmor %vm297, %vm300
        %v302 = vsel %vm301, %v168, %v293
        %v303 = vsel %vm301, %v200, %v294
        %304 = xla_tuple %v302, %v303
        %305 = xla_tuple %v169, %v201
        %vm306 = vcmp.gt.s32.totalorder %v169, %v302
        %vm307 = vcmp.eq.s32.totalorder %v169, %v302
        %vm308 = vcmp.lt.s32.totalorder %v201, %v303
        %vm309 = vmand %vm307, %vm308
        %vm310 = vmor %vm306, %vm309
        %v311 = vsel %vm310, %v169, %v302
        %v312 = vsel %vm310, %v201, %v303
        %313 = xla_tuple %v311, %v312
        %314 = xla_tuple %v170, %v202
        %vm315 = vcmp.gt.s32.totalorder %v170, %v311
        %vm316 = vcmp.eq.s32.totalorder %v170, %v311
        %vm317 = vcmp.lt.s32.totalorder %v202, %v312
        %vm318 = vmand %vm316, %vm317
        %vm319 = vmor %vm315, %vm318
        %v320 = vsel %vm319, %v170, %v311
        %v321 = vsel %vm319, %v202, %v312
        %322 = xla_tuple %v320, %v321
        %323 = xla_tuple %v171, %v203
        %vm324 = vcmp.gt.s32.totalorder %v171, %v320
        %vm325 = vcmp.eq.s32.totalorder %v171, %v320
        %vm326 = vcmp.lt.s32.totalorder %v203, %v321
        %vm327 = vmand %vm325, %vm326
        %vm328 = vmor %vm324, %vm327
        %v329 = vsel %vm328, %v171, %v320
        %v330 = vsel %vm328, %v203, %v321
        %331 = xla_tuple %v329, %v330
        %332 = xla_tuple %v172, %v204
        %vm333 = vcmp.gt.s32.totalorder %v172, %v329
        %vm334 = vcmp.eq.s32.totalorder %v172, %v329
        %vm335 = vcmp.lt.s32.totalorder %v204, %v330
        %vm336 = vmand %vm334, %vm335
        %vm337 = vmor %vm333, %vm336
        %v338 = vsel %vm337, %v172, %v329
        %v339 = vsel %vm337, %v204, %v330
        %340 = xla_tuple %v338, %v339
        %v341 = vrot.slane %v338, 1
        %v342 = vrot.slane %v339, 1
        %343 = xla_tuple %v341, %v342
        %vm344 = vcmp.gt.s32.totalorder %v341, %v338
        %vm345 = vcmp.eq.s32.totalorder %v341, %v338
        %vm346 = vcmp.lt.s32.totalorder %v342, %v339
        %vm347 = vmand %vm345, %vm346
        %vm348 = vmor %vm344, %vm347
        %v349 = vsel %vm348, %v341, %v338
        %v350 = vsel %vm348, %v342, %v339
        %351 = xla_tuple %v349, %v350
        %v352 = vrot.slane %v349, 1
        %v353 = vrot.slane %v350, 1
        %354 = xla_tuple %v352, %v353
        %vm355 = vcmp.gt.s32.totalorder %v352, %v349
        %vm356 = vcmp.eq.s32.totalorder %v352, %v349
        %vm357 = vcmp.lt.s32.totalorder %v353, %v350
        %vm358 = vmand %vm356, %vm357
        %vm359 = vmor %vm355, %vm358
        %v360 = vsel %vm359, %v352, %v349
        %v361 = vsel %vm359, %v353, %v350
        %362 = xla_tuple %v360, %v361
        %v363 = vrot.slane %v360, 1
        %v364 = vrot.slane %v361, 1
        %365 = xla_tuple %v363, %v364
        %vm366 = vcmp.gt.s32.totalorder %v363, %v360
        %vm367 = vcmp.eq.s32.totalorder %v363, %v360
        %vm368 = vcmp.lt.s32.totalorder %v364, %v361
        %vm369 = vmand %vm367, %vm368
        %vm370 = vmor %vm366, %vm369
        %v371 = vsel %vm370, %v363, %v360
        %v372 = vsel %vm370, %v364, %v361
        %373 = xla_tuple %v371, %v372
        %v374 = vrot.slane %v371, 1
        %v375 = vrot.slane %v372, 1
        %376 = xla_tuple %v374, %v375
        %vm377 = vcmp.gt.s32.totalorder %v374, %v371
        %vm378 = vcmp.eq.s32.totalorder %v374, %v371
        %vm379 = vcmp.lt.s32.totalorder %v375, %v372
        %vm380 = vmand %vm378, %vm379
        %vm381 = vmor %vm377, %vm380
        %v382 = vsel %vm381, %v374, %v371
        %v383 = vsel %vm381, %v375, %v372
        %384 = xla_tuple %v382, %v383
        %v385 = vrot.slane %v382, 1
        %v386 = vrot.slane %v383, 1
        %387 = xla_tuple %v385, %v386
        %vm388 = vcmp.gt.s32.totalorder %v385, %v382
        %vm389 = vcmp.eq.s32.totalorder %v385, %v382
        %vm390 = vcmp.lt.s32.totalorder %v386, %v383
        %vm391 = vmand %vm389, %vm390
        %vm392 = vmor %vm388, %vm391
        %v393 = vsel %vm392, %v385, %v382
        %v394 = vsel %vm392, %v386, %v383
        %395 = xla_tuple %v393, %v394
        %v396 = vrot.slane %v393, 1
        %v397 = vrot.slane %v394, 1
        %398 = xla_tuple %v396, %v397
        %vm399 = vcmp.gt.s32.totalorder %v396, %v393
        %vm400 = vcmp.eq.s32.totalorder %v396, %v393
        %vm401 = vcmp.lt.s32.totalorder %v397, %v394
        %vm402 = vmand %vm400, %vm401
        %vm403 = vmor %vm399, %vm402
        %v404 = vsel %vm403, %v396, %v393
        %v405 = vsel %vm403, %v397, %v394
        %406 = xla_tuple %v404, %v405
        %v407 = vrot.slane %v404, 1
        %v408 = vrot.slane %v405, 1
        %409 = xla_tuple %v407, %v408
        %vm410 = vcmp.gt.s32.totalorder %v407, %v404
        %vm411 = vcmp.eq.s32.totalorder %v407, %v404
        %vm412 = vcmp.lt.s32.totalorder %v408, %v405
        %vm413 = vmand %vm411, %vm412
        %vm414 = vmor %vm410, %vm413
        %v415 = vsel %vm414, %v407, %v404
        %v416 = vsel %vm414, %v408, %v405
        %417 = xla_tuple %v415, %v416
        %s418 = scalar_lea.vmem [#allocation12], %s87
        %419 = vst [vmem:[%s418] sm:$0x1] %v415
        %s420 = scalar_lea.vmem [#allocation14], %s87
        %421 = vst [vmem:[%s420] sm:$0x1] %v416
        %422 = xla_tuple %419, %421
        %423 = vxpose.xlu0.b32.start [1/16] %v416, 128
        %424 = vxpose.xlu0.b32.cont [2/16] 0.0, 128
        %425 = vxpose.xlu0.b32.cont [3/16] 0.0, 128
        %426 = vxpose.xlu0.b32.cont [4/16] 0.0, 128
        %427 = vxpose.xlu0.b32.cont [5/16] 0.0, 128
        %428 = vxpose.xlu0.b32.cont [6/16] 0.0, 128
        %429 = vxpose.xlu0.b32.cont [7/16] 0.0, 128
        %430 = vxpose.xlu0.b32.cont [8/16] 0.0, 128
        %431 = vxpose.xlu0.b32.cont [9/16] 0.0, 128
        %432 = vxpose.xlu0.b32.cont [10/16] 0.0, 128
        %433 = vxpose.xlu0.b32.cont [11/16] 0.0, 128
        %434 = vxpose.xlu0.b32.cont [12/16] 0.0, 128
        %435 = vxpose.xlu0.b32.cont [13/16] 0.0, 128
        %436 = vxpose.xlu0.b32.cont [14/16] 0.0, 128
        %437 = vxpose.xlu0.b32.cont [15/16] 0.0, 128
        %438 = vxpose.xlu0.b32.end [16/16] 0.0, 128
        %v439 = vpop.trf.xlu0
        %v440 = vpop.trf.xlu0
        %v441 = vpop.trf.xlu0
        %v442 = vpop.trf.xlu0
        %v443 = vpop.trf.xlu0
        %v444 = vpop.trf.xlu0
        %v445 = vpop.trf.xlu0
        %v446 = vpop.trf.xlu0
        %v447 = vpop.trf.xlu0
        %v448 = vpop.trf.xlu0
        %v449 = vpop.trf.xlu0
        %v450 = vpop.trf.xlu0
        %v451 = vpop.trf.xlu0
        %v452 = vpop.trf.xlu0
        %v453 = vpop.trf.xlu0
        %v454 = vpop.trf.xlu0
        %s455 = vtos %v439
        %s456 = sshrl.u32 %s455, 9
        %p457 = scmp.lt.s32.totalorder %s455, 0
        %s458 = ssub.s32 0, %s455
        %s459 = scalar_select %p457, %s458, %s455
        %s460 = sand.u32 %s459, 511
        %s461 = ssub.s32 0, %s460
        %s462 = scalar_select %p457, %s461, %s460
        %s463 = sshrl.u32 %s462, 7
        %s464 = smul.u32 %s463, 256
        %s465 = sand.u32 %s462, 127
        %s466 = sadd.s32 %s464, %s465
        %v467 = vlaneseq
        %v468 = vstv %s466
        %vm470 = vcmp.eq.s32.totalorder %v467, %v468
        %s471 = smul.addr %s456, 8
        %s472 = scalar_lea.vmem [#allocation15], %s471
        %473 = vst.msk [vmem:[%s472] sm:$0xff] %vm470, 2147483648
        %s474 = smul.addr %s456, 8
        %s475 = scalar_lea.vmem [#allocation16], %s474
        %476 = vst.msk [vmem:[%s475] sm:$0xff] %vm470, 2147483647
        %477 = xla_tuple %473, %476
        %v478 = vrot.slane %v439, 1
        %s479 = vtos %v478
        %s480 = sshrl.u32 %s479, 9
        %p481 = scmp.lt.s32.totalorder %s479, 0
        %s482 = ssub.s32 0, %s479
        %s483 = scalar_select %p481, %s482, %s479
        %s484 = sand.u32 %s483, 511
        %s485 = ssub.s32 0, %s484
        %s486 = scalar_select %p481, %s485, %s484
        %s487 = sshrl.u32 %s486, 7
        %s488 = smul.u32 %s487, 256
        %s489 = sand.u32 %s486, 127
        %s490 = sadd.s32 %s488, %s489
        %v491 = vlaneseq
        %v492 = vstv %s490
        %v493 = vadd.s32 %v492, 128
        %vm494 = vcmp.eq.s32.totalorder %v491, %v493
        %s495 = smul.addr %s480, 8
        %s496 = scalar_lea.vmem [#allocation15], %s495
        %497 = vst.msk [vmem:[%s496] sm:$0xff] %vm494, 2147483648
        %s498 = smul.addr %s480, 8
        %s499 = scalar_lea.vmem [#allocation16], %s498
        %500 = vst.msk [vmem:[%s499] sm:$0xff] %vm494, 2147483647
        %501 = xla_tuple %497, %500
        %v502 = vrot.slane %v478, 1
      $region37: #{custom-call} parent=2 // loop_footer
        %s91 = sadd.s32 1, %s87
      $region38: #{custom-call} parent=2 // loop_footer_branch
        %86 = sbr.rel target = $region34
      $region39: #{custom-call} parent=2 // loop_exit
        _
      %s503 = scalar_lea.vmem [#allocation12], 7
      %v504 = vld [vmem:[%s503] ss:$-1 sm:$0xff]
      %s505 = scalar_lea.vmem [#allocation12], 7
      %v506 = vld [vmem:[%s505] ss:$-1 sm:$0xff]
      %507 = vst [vmem:[#allocation12] sm:$0xff] %v506
      %508 = vst [vmem:[#allocation12] sm:$0xff] %v504
      %s509 = scalar_lea.vmem [#allocation14], 7
      %v510 = vld [vmem:[%s509] ss:$-1 sm:$0xff]
      %s511 = scalar_lea.vmem [#allocation14], 7
      %v512 = vld [vmem:[%s511] ss:$-1 sm:$0xff]
      %513 = vst [vmem:[#allocation14] sm:$0xff] %v512
      %514 = vst [vmem:[#allocation14] sm:$0xff] %v510
      %515 = xla_tuple %508, %514
      %v516 = vld [vmem:[#allocation11] sm:$0xff]
      %v517 = vld [vmem:[#allocation13] sm:$0xff]
      %518 = xla_tuple %v516, %v517
      %v519 = vld [vmem:[#allocation12] sm:$0xff]
      %v520 = vld [vmem:[#allocation14] sm:$0xff]
      %521 = xla_tuple %v519, %v520
      %vm522 = vcmp.gt.s32.totalorder %v516, %v519
      %vm523 = vcmp.eq.s32.totalorder %v516, %v519
      %vm524 = vcmp.lt.s32.totalorder %v517, %v520
      %vm525 = vmand %vm523, %vm524
      %vm526 = vmor %vm522, %vm525
      %v527 = vsel %vm526, %v516, %v519
      %528 = vst [vmem:[#allocation11] sm:$0xff] %v527
      %v529 = vsel %vm526, %v519, %v516
      %530 = vst [vmem:[#allocation12] sm:$0xff] %v529
      %v531 = vsel %vm526, %v517, %v520
      %532 = vst [vmem:[#allocation13] sm:$0xff] %v531
      %v533 = vsel %vm526, %v520, %v517
      %534 = vst [vmem:[#allocation14] sm:$0xff] %v533
      %535 = xla_tuple %530, %534
      %536 = xla_tuple [#allocation11], [#allocation13]
      %v537 = vld [vmem:[#allocation11] sm:$0xff]
      %v538 = vld [vmem:[#allocation13] sm:$0xff]
      %539 = xla_tuple %v537, %v538
      %v541 = vunpack.c.l.s4 839939668
      %v542 = vunpack.c.0.s8 %v541
      %v543 = vlaneseq
      %v544 = vshrl.u32 %v543, 7
      %v545 = vsub.s32 %v542, %v544
      %v546 = vrot.slane %v537, %v545
      %v548 = vunpack.c.l.s4 839939668
      %v549 = vunpack.c.0.s8 %v548
      %v550 = vlaneseq
      %v551 = vshrl.u32 %v550, 7
      %v552 = vsub.s32 %v549, %v551
      %v553 = vrot.slane %v538, %v552
      %554 = xla_tuple %v546, %v553
      %vm555 = vcmp.gt.s32.totalorder %v537, %v546
      %vm556 = vcmp.eq.s32.totalorder %v537, %v546
      %vm557 = vcmp.lt.s32.totalorder %v538, %v553
      %vm558 = vmand %vm556, %vm557
      %vm559 = vmor %vm555, %vm558
      %v560 = vlaneseq
      %v561 = vshrl.u32 %v560, 7
      %v562 = vand.u32 %v561, 4
      %vm563 = vcmp.ne.s32.totalorder %v562, 0
      %vm564 = vmxor %vm559, %vm563
      %v565 = vsel %vm564, %v537, %v546
      %v566 = vsel %vm564, %v538, %v553
      %567 = xla_tuple %v565, %v566
      %v569 = vunpack.c.l.s4 1417023538
      %v570 = vunpack.c.0.s8 %v569
      %v571 = vlaneseq
      %v572 = vshrl.u32 %v571, 7
      %v573 = vsub.s32 %v570, %v572
      %v574 = vrot.slane %v565, %v573
      %v576 = vunpack.c.l.s4 1417023538
      %v577 = vunpack.c.0.s8 %v576
      %v578 = vlaneseq
      %v579 = vshrl.u32 %v578, 7
      %v580 = vsub.s32 %v577, %v579
      %v581 = vrot.slane %v566, %v580
      %582 = xla_tuple %v574, %v581
      %vm583 = vcmp.gt.s32.totalorder %v565, %v574
      %vm584 = vcmp.eq.s32.totalorder %v565, %v574
      %vm585 = vcmp.lt.s32.totalorder %v566, %v581
      %vm586 = vmand %vm584, %vm585
      %vm587 = vmor %vm583, %vm586
      %v588 = vlaneseq
      %v589 = vshrl.u32 %v588, 7
      %v590 = vand.u32 %v589, 2
      %vm591 = vcmp.ne.s32.totalorder %v590, 0
      %vm592 = vmxor %vm587, %vm591
      %v593 = vsel %vm592, %v565, %v574
      %v594 = vsel %vm592, %v566, %v581
      %595 = xla_tuple %v593, %v594
      %v597 = vunpack.c.l.s4 1732584193
      %v598 = vunpack.c.0.s8 %v597
      %v599 = vlaneseq
      %v600 = vshrl.u32 %v599, 7
      %v601 = vsub.s32 %v598, %v600
      %v602 = vrot.slane %v593, %v601
      %v604 = vunpack.c.l.s4 1732584193
      %v605 = vunpack.c.0.s8 %v604
      %v606 = vlaneseq
      %v607 = vshrl.u32 %v606, 7
      %v608 = vsub.s32 %v605, %v607
      %v609 = vrot.slane %v594, %v608
      %610 = xla_tuple %v602, %v609
      %vm611 = vcmp.gt.s32.totalorder %v593, %v602
      %vm612 = vcmp.eq.s32.totalorder %v593, %v602
      %vm613 = vcmp.lt.s32.totalorder %v594, %v609
      %vm614 = vmand %vm612, %vm613
      %vm615 = vmor %vm611, %vm614
      %v616 = vlaneseq
      %v617 = vshrl.u32 %v616, 7
      %v618 = vand.u32 %v617, 1
      %vm619 = vcmp.ne.s32.totalorder %v618, 0
      %vm620 = vmxor %vm615, %vm619
      %v621 = vsel %vm620, %v593, %v602
      %v622 = vsel %vm620, %v594, %v609
      %623 = xla_tuple %v621, %v622
      %624 = vst [vmem:[#allocation11] sm:$0xff] %v621
      %625 = vst [vmem:[#allocation13] sm:$0xff] %v622
      %626 = xla_tuple %624, %625
      %v627 = vld [vmem:[#allocation11] sm:$0xff]
      %v628 = vld [vmem:[#allocation13] sm:$0xff]
      %629 = xla_tuple %v627, %v628
      %v631 = vunpack.c.l.s4 839939668
      %v632 = vunpack.c.0.s8 %v631
      %v633 = vlaneseq
      %v634 = vshrl.u32 %v633, 7
      %v635 = vsub.s32 %v632, %v634
      %v636 = vrot.slane %v627, %v635
      %v638 = vunpack.c.l.s4 839939668
      %v639 = vunpack.c.0.s8 %v638
      %v640 = vlaneseq
      %v641 = vshrl.u32 %v640, 7
      %v642 = vsub.s32 %v639, %v641
      %v643 = vrot.slane %v628, %v642
      %644 = xla_tuple %v636, %v643
      %vm645 = vcmp.gt.s32.totalorder %v627, %v636
      %vm646 = vcmp.eq.s32.totalorder %v627, %v636
      %vm647 = vcmp.lt.s32.totalorder %v628, %v643
      %vm648 = vmand %vm646, %vm647
      %vm649 = vmor %vm645, %vm648
      %v650 = vlaneseq
      %v651 = vshrl.u32 %v650, 7
      %v652 = vand.u32 %v651, 4
      %vm653 = vcmp.ne.s32.totalorder %v652, 0
      %vm654 = vmxor %vm649, %vm653
      %v655 = vsel %vm654, %v627, %v636
      %v656 = vsel %vm654, %v628, %v643
      %657 = xla_tuple %v655, %v656
      %v659 = vunpack.c.l.s4 1417023538
      %v660 = vunpack.c.0.s8 %v659
      %v661 = vlaneseq
      %v662 = vshrl.u32 %v661, 7
      %v663 = vsub.s32 %v660, %v662
      %v664 = vrot.slane %v655, %v663
      %v666 = vunpack.c.l.s4 1417023538
      %v667 = vunpack.c.0.s8 %v666
      %v668 = vlaneseq
      %v669 = vshrl.u32 %v668, 7
      %v670 = vsub.s32 %v667, %v669
      %v671 = vrot.slane %v656, %v670
      %672 = xla_tuple %v664, %v671
      %vm673 = vcmp.gt.s32.totalorder %v655, %v664
      %vm674 = vcmp.eq.s32.totalorder %v655, %v664
      %vm675 = vcmp.lt.s32.totalorder %v656, %v671
      %vm676 = vmand %vm674, %vm675
      %vm677 = vmor %vm673, %vm676
      %v678 = vlaneseq
      %v679 = vshrl.u32 %v678, 7
      %v680 = vand.u32 %v679, 2
      %vm681 = vcmp.ne.s32.totalorder %v680, 0
      %vm682 = vmxor %vm677, %vm681
      %v683 = vsel %vm682, %v655, %v664
      %v684 = vsel %vm682, %v656, %v671
      %685 = xla_tuple %v683, %v684
      %v687 = vunpack.c.l.s4 1732584193
      %v688 = vunpack.c.0.s8 %v687
      %v689 = vlaneseq
      %v690 = vshrl.u32 %v689, 7
      %v691 = vsub.s32 %v688, %v690
      %v692 = vrot.slane %v683, %v691
      %v694 = vunpack.c.l.s4 1732584193
      %v695 = vunpack.c.0.s8 %v694
      %v696 = vlaneseq
      %v697 = vshrl.u32 %v696, 7
      %v698 = vsub.s32 %v695, %v697
      %v699 = vrot.slane %v684, %v698
      %700 = xla_tuple %v692, %v699
      %vm701 = vcmp.gt.s32.totalorder %v683, %v692
      %vm702 = vcmp.eq.s32.totalorder %v683, %v692
      %vm703 = vcmp.lt.s32.totalorder %v684, %v699
      %vm704 = vmand %vm702, %vm703
      %vm705 = vmor %vm701, %vm704
      %v706 = vlaneseq
      %v707 = vshrl.u32 %v706, 7
      %v708 = vand.u32 %v707, 1
      %vm709 = vcmp.ne.s32.totalorder %v708, 0
      %vm710 = vmxor %vm705, %vm709
      %v711 = vsel %vm710, %v683, %v692
      %v712 = vsel %vm710, %v684, %v699
      %713 = xla_tuple %v711, %v712
      %714 = vst [vmem:[#allocation11] sm:$0xff] %v711
      %715 = vst [vmem:[#allocation13] sm:$0xff] %v712
      %716 = xla_tuple %714, %715
      %717 = xla_tuple [#allocation12], [#allocation14]
      %v718 = vld [vmem:[#allocation12] sm:$0xff]
      %v719 = vld [vmem:[#allocation14] sm:$0xff]
      %720 = xla_tuple %v718, %v719
      %v722 = vunpack.c.l.s4 839939668
      %v723 = vunpack.c.0.s8 %v722
      %v724 = vlaneseq
      %v725 = vshrl.u32 %v724, 7
      %v726 = vsub.s32 %v723, %v725
      %v727 = vrot.slane %v718, %v726
      %v729 = vunpack.c.l.s4 839939668
      %v730 = vunpack.c.0.s8 %v729
      %v731 = vlaneseq
      %v732 = vshrl.u32 %v731, 7
      %v733 = vsub.s32 %v730, %v732
      %v734 = vrot.slane %v719, %v733
      %735 = xla_tuple %v727, %v734
      %vm736 = vcmp.gt.s32.totalorder %v718, %v727
      %vm737 = vcmp.eq.s32.totalorder %v718, %v727
      %vm738 = vcmp.lt.s32.totalorder %v719, %v734
      %vm739 = vmand %vm737, %vm738
      %vm740 = vmor %vm736, %vm739
      %v741 = vlaneseq
      %v742 = vshrl.u32 %v741, 7
      %v743 = vand.u32 %v742, 4
      %vm744 = vcmp.ne.s32.totalorder %v743, 0
      %vm745 = vmxor %vm740, %vm744
      %v746 = vsel %vm745, %v718, %v727
      %v747 = vsel %vm745, %v719, %v734
      %748 = xla_tuple %v746, %v747
      %v750 = vunpack.c.l.s4 1417023538
      %v751 = vunpack.c.0.s8 %v750
      %v752 = vlaneseq
      %v753 = vshrl.u32 %v752, 7
      %v754 = vsub.s32 %v751, %v753
      %v755 = vrot.slane %v746, %v754
      %v757 = vunpack.c.l.s4 1417023538
      %v758 = vunpack.c.0.s8 %v757
      %v759 = vlaneseq
      %v760 = vshrl.u32 %v759, 7
      %v761 = vsub.s32 %v758, %v760
      %v762 = vrot.slane %v747, %v761
      %763 = xla_tuple %v755, %v762
      %vm764 = vcmp.gt.s32.totalorder %v746, %v755
      %vm765 = vcmp.eq.s32.totalorder %v746, %v755
      %vm766 = vcmp.lt.s32.totalorder %v747, %v762
      %vm767 = vmand %vm765, %vm766
      %vm768 = vmor %vm764, %vm767
      %v769 = vlaneseq
      %v770 = vshrl.u32 %v769, 7
      %v771 = vand.u32 %v770, 2
      %vm772 = vcmp.ne.s32.totalorder %v771, 0
      %vm773 = vmxor %vm768, %vm772
      %v774 = vsel %vm773, %v746, %v755
      %v775 = vsel %vm773, %v747, %v762
      %776 = xla_tuple %v774, %v775
      %v778 = vunpack.c.l.s4 1732584193
      %v779 = vunpack.c.0.s8 %v778
      %v780 = vlaneseq
      %v781 = vshrl.u32 %v780, 7
      %v782 = vsub.s32 %v779, %v781
      %v783 = vrot.slane %v774, %v782
      %v785 = vunpack.c.l.s4 1732584193
      %v786 = vunpack.c.0.s8 %v785
      %v787 = vlaneseq
      %v788 = vshrl.u32 %v787, 7
      %v789 = vsub.s32 %v786, %v788
      %v790 = vrot.slane %v775, %v789
      %791 = xla_tuple %v783, %v790
      %vm792 = vcmp.gt.s32.totalorder %v774, %v783
      %vm793 = vcmp.eq.s32.totalorder %v774, %v783
      %vm794 = vcmp.lt.s32.totalorder %v775, %v790
      %vm795 = vmand %vm793, %vm794
      %vm796 = vmor %vm792, %vm795
      %v797 = vlaneseq
      %v798 = vshrl.u32 %v797, 7
      %v799 = vand.u32 %v798, 1
      %vm800 = vcmp.ne.s32.totalorder %v799, 0
      %vm801 = vmxor %vm796, %vm800
      %v802 = vsel %vm801, %v774, %v783
      %v803 = vsel %vm801, %v775, %v790
      %804 = xla_tuple %v802, %v803
      %805 = vst [vmem:[#allocation12] sm:$0xff] %v802
      %806 = vst [vmem:[#allocation14] sm:$0xff] %v803
      %807 = xla_tuple %805, %806
      %v808 = vld [vmem:[#allocation12] sm:$0xff]
      %v809 = vld [vmem:[#allocation14] sm:$0xff]
      %810 = xla_tuple %v808, %v809
      %v812 = vunpack.c.l.s4 839939668
      %v813 = vunpack.c.0.s8 %v812
      %v814 = vlaneseq
      %v815 = vshrl.u32 %v814, 7
      %v816 = vsub.s32 %v813, %v815
      %v817 = vrot.slane %v808, %v816
      %v819 = vunpack.c.l.s4 839939668
      %v820 = vunpack.c.0.s8 %v819
      %v821 = vlaneseq
      %v822 = vshrl.u32 %v821, 7
      %v823 = vsub.s32 %v820, %v822
      %v824 = vrot.slane %v809, %v823
      %825 = xla_tuple %v817, %v824
      %vm826 = vcmp.gt.s32.totalorder %v808, %v817
      %vm827 = vcmp.eq.s32.totalorder %v808, %v817
      %vm828 = vcmp.lt.s32.totalorder %v809, %v824
      %vm829 = vmand %vm827, %vm828
      %vm830 = vmor %vm826, %vm829
      %v831 = vlaneseq
      %v832 = vshrl.u32 %v831, 7
      %v833 = vand.u32 %v832, 4
      %vm834 = vcmp.ne.s32.totalorder %v833, 0
      %vm835 = vmxor %vm830, %vm834
      %v836 = vsel %vm835, %v808, %v817
      %v837 = vsel %vm835, %v809, %v824
      %838 = xla_tuple %v836, %v837
      %v840 = vunpack.c.l.s4 1417023538
      %v841 = vunpack.c.0.s8 %v840
      %v842 = vlaneseq
      %v843 = vshrl.u32 %v842, 7
      %v844 = vsub.s32 %v841, %v843
      %v845 = vrot.slane %v836, %v844
      %v847 = vunpack.c.l.s4 1417023538
      %v848 = vunpack.c.0.s8 %v847
      %v849 = vlaneseq
      %v850 = vshrl.u32 %v849, 7
      %v851 = vsub.s32 %v848, %v850
      %v852 = vrot.slane %v837, %v851
      %853 = xla_tuple %v845, %v852
      %vm854 = vcmp.gt.s32.totalorder %v836, %v845
      %vm855 = vcmp.eq.s32.totalorder %v836, %v845
      %vm856 = vcmp.lt.s32.totalorder %v837, %v852
      %vm857 = vmand %vm855, %vm856
      %vm858 = vmor %vm854, %vm857
      %v859 = vlaneseq
      %v860 = vshrl.u32 %v859, 7
      %v861 = vand.u32 %v860, 2
      %vm862 = vcmp.ne.s32.totalorder %v861, 0
      %vm863 = vmxor %vm858, %vm862
      %v864 = vsel %vm863, %v836, %v845
      %v865 = vsel %vm863, %v837, %v852
      %866 = xla_tuple %v864, %v865
      %v868 = vunpack.c.l.s4 1732584193
      %v869 = vunpack.c.0.s8 %v868
      %v870 = vlaneseq
      %v871 = vshrl.u32 %v870, 7
      %v872 = vsub.s32 %v869, %v871
      %v873 = vrot.slane %v864, %v872
      %v875 = vunpack.c.l.s4 1732584193
      %v876 = vunpack.c.0.s8 %v875
      %v877 = vlaneseq
      %v878 = vshrl.u32 %v877, 7
      %v879 = vsub.s32 %v876, %v878
      %v880 = vrot.slane %v865, %v879
      %881 = xla_tuple %v873, %v880
      %vm882 = vcmp.gt.s32.totalorder %v864, %v873
      %vm883 = vcmp.eq.s32.totalorder %v864, %v873
      %vm884 = vcmp.lt.s32.totalorder %v865, %v880
      %vm885 = vmand %vm883, %vm884
      %vm886 = vmor %vm882, %vm885
      %v887 = vlaneseq
      %v888 = vshrl.u32 %v887, 7
      %v889 = vand.u32 %v888, 1
      %vm890 = vcmp.ne.s32.totalorder %v889, 0
      %vm891 = vmxor %vm886, %vm890
      %v892 = vsel %vm891, %v864, %v873
      %v893 = vsel %vm891, %v865, %v880
      %894 = xla_tuple %v892, %v893
      %895 = vst [vmem:[#allocation12] sm:$0xff] %v892
      %896 = vst [vmem:[#allocation14] sm:$0xff] %v893
      %897 = xla_tuple %895, %896
    %v898 = vld [vmem:[#allocation11] sm:$0xff]
    %vm899 = vcmp.lt.s32.totalorder %v898, 0
    %v900 = vsub.s32 2147483647, %v898
    %v901 = vsel %vm899, %v900, %v898
    %902 = vst [vmem:[#allocation11] sm:$0xff] %v901
    %v903 = vld [vmem:[#allocation11] sm:$0xff]
    %904 = vxpose.xlu0.b32.start.end [1/1] (short) %v903, 128
    %v905 = vpop.trf.xlu0
    %v906 = vpop.trf.xlu0
    %v907 = vpop.trf.xlu0
    %v908 = vpop.trf.xlu0
    %v909 = vpop.trf.xlu0
    %v910 = vpop.trf.xlu0
    %v911 = vpop.trf.xlu0
    %v912 = vpop.trf.xlu0
    %v913 = vpop.trf.xlu0
    %v914 = vpop.trf.xlu0
    %v915 = vpop.trf.xlu0
    %v916 = vpop.trf.xlu0
    %v917 = vpop.trf.xlu0
    %v918 = vpop.trf.xlu0
    %v919 = vpop.trf.xlu0
    %v920 = vpop.trf.xlu0
    %921 = vst [vmem:[#allocation7] sm:$0xff] %v905
    %v922 = vld [vmem:[#allocation13] sm:$0xff]
    %923 = vxpose.xlu0.b32.start.end [1/1] (short) %v922, 128
    %v924 = vpop.trf.xlu0
    %v925 = vpop.trf.xlu0
    %v926 = vpop.trf.xlu0
    %v927 = vpop.trf.xlu0
    %v928 = vpop.trf.xlu0
    %v929 = vpop.trf.xlu0
    %v930 = vpop.trf.xlu0
    %v931 = vpop.trf.xlu0
    %v932 = vpop.trf.xlu0
    %v933 = vpop.trf.xlu0
    %v934 = vpop.trf.xlu0
    %v935 = vpop.trf.xlu0
    %v936 = vpop.trf.xlu0
    %v937 = vpop.trf.xlu0
    %v938 = vpop.trf.xlu0
    %v939 = vpop.trf.xlu0
    %940 = vst [vmem:[#allocation9] sm:$0xff] %v924
    %s942 = sshllo.u32 0, 2
    %v944 = vld [vmem:[#allocation7] sm:%s942]
    %s945 = sshllo.u32 0, 2
    %946 = vst [vmem:[#allocation8] sm:%s945] %v944
    %s948 = sshllo.u32 0, 2
    %v950 = vld [vmem:[#allocation9] sm:%s948]
    %s951 = sshllo.u32 0, 2
    %952 = vst [vmem:[#allocation10] sm:%s951] %v950
    // Predicated region
    $region40: #{custom-call} parent=1 // pred_check
      _
    $region41: #{custom-call} parent=1 // pred_check_branch
      %954 = sbr.rel (0) target = $region43
    $region42: #{custom-call} parent=1 // pred_region
      // Predicated region
      $region44: #{custom-call} parent=42 // pred_check
        _
      $region45: #{custom-call} parent=42 // pred_check_branch
        %956 = sbr.rel target = $region47
      $region46: #{custom-call} parent=42 // pred_region
        // Predicated region
        $region59: #{custom-call} parent=46 // pred_check
          _
        $region60: #{custom-call} parent=46 // pred_check_branch
          %971 = sbr.rel (0) target = $region62
        $region61: #{custom-call} parent=46 // pred_region
          loop: start=0, step=1, limit=1
          $region63: #{custom-call} parent=61 // loop_pre_header
            _
          $region64: #{custom-call} parent=61 // loop_header
            %s974 = sphi 0, %s978
            %p975 = scmp.ge.s32.totalorder %s974, 1
            %s979 = sphi [#allocation8], [#allocation8]
            %s980 = sphi %s1, %s1
          $region65: #{custom-call} parent=61 // loop_header_branch
            %977 = sbr.rel (%p975) target = $region69
          $region66: #{custom-call} parent=61 // loop_body
            %v981 = vld [vmem:[%s979] sm:$0x3]
            %982 = vst [vmem:[%s980] sm:$0x3] %v981
          $region67: #{custom-call} parent=61 // loop_footer
            %s978 = sadd.s32 1, %s974
          $region68: #{custom-call} parent=61 // loop_footer_branch
            %973 = sbr.rel target = $region64
          $region69: #{custom-call} parent=61 // loop_exit
            _
        $region62: #{custom-call} parent=46 // pred_fallthru
          _
      $region47: #{custom-call} parent=42 // pred_fallthru
        _
      // Predicated region
      $region48: #{custom-call} parent=42 // pred_check
        _
      $region49: #{custom-call} parent=42 // pred_check_branch
        %958 = sbr.rel (0) target = $region51
      $region50: #{custom-call} parent=42 // pred_region
        loop: start=0, step=1, limit=1
        $region52: #{custom-call} parent=50 // loop_pre_header
          _
        $region53: #{custom-call} parent=50 // loop_header
          %s961 = sphi 0, %s965
          %p962 = scmp.ge.s32.totalorder %s961, 1
          %s966 = sphi [#allocation8], [#allocation8]
          %s967 = sphi %s1, %s1
        $region54: #{custom-call} parent=50 // loop_header_branch
          %964 = sbr.rel (%p962) target = $region58
        $region55: #{custom-call} parent=50 // loop_body
          %v968 = vld [vmem:[%s966] sm:$0x3]
          %969 = vst [vmem:[%s967] sm:$0x3] %v968
        $region56: #{custom-call} parent=50 // loop_footer
          %s965 = sadd.s32 1, %s961
        $region57: #{custom-call} parent=50 // loop_footer_branch
          %960 = sbr.rel target = $region53
        $region58: #{custom-call} parent=50 // loop_exit
          _
      $region51: #{custom-call} parent=42 // pred_fallthru
        _
    $region43: #{custom-call} parent=1 // pred_fallthru
      _
    %983 = vnop
    // Predicated region
    $region70: #{custom-call} parent=1 // pred_check
      _
    $region71: #{custom-call} parent=1 // pred_check_branch
      %985 = sbr.rel (0) target = $region73
    $region72: #{custom-call} parent=1 // pred_region
      // Predicated region
      $region74: #{custom-call} parent=72 // pred_check
        _
      $region75: #{custom-call} parent=72 // pred_check_branch
        %987 = sbr.rel target = $region77
      $region76: #{custom-call} parent=72 // pred_region
        // Predicated region
        $region89: #{custom-call} parent=76 // pred_check
          _
        $region90: #{custom-call} parent=76 // pred_check_branch
          %1002 = sbr.rel (0) target = $region92
        $region91: #{custom-call} parent=76 // pred_region
          loop: start=0, step=1, limit=1
          $region93: #{custom-call} parent=91 // loop_pre_header
            _
          $region94: #{custom-call} parent=91 // loop_header
            %s1005 = sphi 0, %s1009
            %p1006 = scmp.ge.s32.totalorder %s1005, 1
            %s1010 = sphi [#allocation10], [#allocation10]
            %s1011 = sphi %s2, %s2
          $region95: #{custom-call} parent=91 // loop_header_branch
            %1008 = sbr.rel (%p1006) target = $region99
          $region96: #{custom-call} parent=91 // loop_body
            %v1012 = vld [vmem:[%s1010] sm:$0x3]
            %1013 = vst [vmem:[%s1011] sm:$0x3] %v1012
          $region97: #{custom-call} parent=91 // loop_footer
            %s1009 = sadd.s32 1, %s1005
          $region98: #{custom-call} parent=91 // loop_footer_branch
            %1004 = sbr.rel target = $region94
          $region99: #{custom-call} parent=91 // loop_exit
            _
        $region92: #{custom-call} parent=76 // pred_fallthru
          _
      $region77: #{custom-call} parent=72 // pred_fallthru
        _
      // Predicated region
      $region78: #{custom-call} parent=72 // pred_check
        _
      $region79: #{custom-call} parent=72 // pred_check_branch
        %989 = sbr.rel (0) target = $region81
      $region80: #{custom-call} parent=72 // pred_region
        loop: start=0, step=1, limit=1
        $region82: #{custom-call} parent=80 // loop_pre_header
          _
        $region83: #{custom-call} parent=80 // loop_header
          %s992 = sphi 0, %s996
          %p993 = scmp.ge.s32.totalorder %s992, 1
          %s997 = sphi [#allocation10], [#allocation10]
          %s998 = sphi %s2, %s2
        $region84: #{custom-call} parent=80 // loop_header_branch
          %995 = sbr.rel (%p993) target = $region88
        $region85: #{custom-call} parent=80 // loop_body
          %v999 = vld [vmem:[%s997] sm:$0x3]
          %1000 = vst [vmem:[%s998] sm:$0x3] %v999
        $region86: #{custom-call} parent=80 // loop_footer
          %s996 = sadd.s32 1, %s992
        $region87: #{custom-call} parent=80 // loop_footer_branch
          %991 = sbr.rel target = $region83
        $region88: #{custom-call} parent=80 // loop_exit
          _
      $region81: #{custom-call} parent=72 // pred_fallthru
        _
    $region73: #{custom-call} parent=1 // pred_fallthru
      _
    %1014 = vnop

// kernel: teacher_forward.6
$region0: #{teacher_forward.6}
  #allocation0 [shape = 'u32[]', space=smem, size = 0x4, offset = 0x4, fixed_abs, tag = 'smem constant byte address 0x4 - core index']
  #allocation1 [shape = 'u32[144,128]{1,0:T(1,128)}', space=vmem, size = 0x12000, scoped, tag = 'internal scratch']
  %s0 = inlined_call_operand.vmem [shape: bf16[2,18,16,96], index: 0, kind: input, shape index: {}]
  %s1 = inlined_call_operand.vmem [shape: bf16[3,96,32], index: 1, kind: input, shape index: {}]
  %s2 = inlined_call_operand.vmem [shape: f32[1,32], index: 2, kind: input, shape index: {}]
  %s3 = inlined_call_operand.vmem [shape: bf16[32,16], index: 3, kind: input, shape index: {}]
  %s4 = inlined_call_operand.vmem [shape: f32[1,16], index: 4, kind: input, shape index: {}]
  %s5 = inlined_call_operand.vmem [shape: f32[2,16,16,16], index: 5, kind: output, shape index: {}]
  %s6 = sld [smem:[#allocation0]]
  $region53: #{teacher_forward.6} parent=0
    _
  %s8 = ssub.s32 1, %s6
  %s9 = scalar_select 0, %s8, %s6
  loop: start=0, step=1, limit=4
  $region2: #{teacher_forward.6} parent=0 // loop_pre_header
    _
  $region3: #{teacher_forward.6} parent=0 // loop_header
    %s11 = sphi 0, %s15
    %p12 = scmp.ge.s32.totalorder %s11, 4
    %s21 = sphi 0, %s23
    %s24 = sphi 0, %s21
    %s25 = sphi 0, %s24
    %s41 = sphi 0, %s25
    %s45 = sphi 0, %s45
    %s47 = sphi 0, %s45
    %s48 = sphi 0, %s47
    %s62 = sphi 0, %s48
    %s66 = sphi 0, %s66
    %s68 = sphi 0, %s66
    %s69 = sphi 0, %s68
    %s83 = sphi 0, %s69
    %s87 = sphi 0, %s87
    %s89 = sphi 0, %s87
    %s90 = sphi 0, %s89
    %s104 = sphi 0, %s90
    %s108 = sphi 0, %s108
    %s110 = sphi 0, %s108
    %s111 = sphi 0, %s110
    %s125 = sphi 0, %s111
    %s131 = sphi 0, %s133
    %s134 = sphi 0, %s131
    %s135 = sphi 0, %s134
    %s151 = sphi 0, %s135
  $region4: #{teacher_forward.6} parent=0 // loop_header_branch
    %14 = sbr.rel (%p12) target = $region8
  $region5: #{teacher_forward.6} parent=0 // loop_body
    %s16 = ssub.s32 %s11, 1
    %s17 = ssub.s32 %s11, 2
    %s18 = sadd.s32 %s11, 1
    %s19 = ssub.s32 %s11, %s18
    %p20 = scmp.eq.s32.totalorder %s19, 0
    %s22 = sadd.s32 %s21, 1
    %s23 = scalar_select %p20, %s21, %s22
    %p26 = pneg %p20
    %p27 = scmp.eq.s32.totalorder %s11, 1
    %p28 = por %p26, %p27
    %p29 = scmp.ne.s32.totalorder %s21, %s24
    %p30 = scmp.eq.s32.totalorder %s11, 0
    %p31 = por %p29, %p30
    %p32 = scmp.ne.s32.totalorder %s21, %s24
    %p33 = scmp.eq.s32.totalorder %s16, 1
    %p34 = por %p32, %p33
    %p35 = scmp.ne.s32.totalorder %s24, %s25
    %p36 = scmp.eq.s32.totalorder %s16, 0
    %p37 = por %p35, %p36
    %p38 = scmp.ne.s32.totalorder %s24, %s25
    %p39 = scmp.eq.s32.totalorder %s17, 1
    %p40 = por %p38, %p39
    %p42 = scmp.ne.s32.totalorder %s25, %s41
    %p43 = scmp.eq.s32.totalorder %s17, 0
    %p44 = por %p42, %p43
    %s46 = sadd.s32 %s45, 1
    %p49 = scmp.eq.s32.totalorder %s11, 1
    %p50 = scmp.ne.s32.totalorder %s45, %s47
    %p51 = scmp.eq.s32.totalorder %s11, 0
    %p52 = por %p50, %p51
    %p53 = scmp.ne.s32.totalorder %s45, %s47
    %p54 = scmp.eq.s32.totalorder %s16, 1
    %p55 = por %p53, %p54
    %p56 = scmp.ne.s32.totalorder %s47, %s48
    %p57 = scmp.eq.s32.totalorder %s16, 0
    %p58 = por %p56, %p57
    %p59 = scmp.ne.s32.totalorder %s47, %s48
    %p60 = scmp.eq.s32.totalorder %s17, 1
    %p61 = por %p59, %p60
    %p63 = scmp.ne.s32.totalorder %s48, %s62
    %p64 = scmp.eq.s32.totalorder %s17, 0
    %p65 = por %p63, %p64
    %s67 = sadd.s32 %s66, 1
    %p70 = scmp.eq.s32.totalorder %s11, 1
    %p71 = scmp.ne.s32.totalorder %s66, %s68
    %p72 = scmp.eq.s32.totalorder %s11, 0
    %p73 = por %p71, %p72
    %p74 = scmp.ne.s32.totalorder %s66, %s68
    %p75 = scmp.eq.s32.totalorder %s16, 1
    %p76 = por %p74, %p75
    %p77 = scmp.ne.s32.totalorder %s68, %s69
    %p78 = scmp.eq.s32.totalorder %s16, 0
    %p79 = por %p77, %p78
    %p80 = scmp.ne.s32.totalorder %s68, %s69
    %p81 = scmp.eq.s32.totalorder %s17, 1
    %p82 = por %p80, %p81
    %p84 = scmp.ne.s32.totalorder %s69, %s83
    %p85 = scmp.eq.s32.totalorder %s17, 0
    %p86 = por %p84, %p85
    %s88 = sadd.s32 %s87, 1
    %p91 = scmp.eq.s32.totalorder %s11, 1
    %p92 = scmp.ne.s32.totalorder %s87, %s89
    %p93 = scmp.eq.s32.totalorder %s11, 0
    %p94 = por %p92, %p93
    %p95 = scmp.ne.s32.totalorder %s87, %s89
    %p96 = scmp.eq.s32.totalorder %s16, 1
    %p97 = por %p95, %p96
    %p98 = scmp.ne.s32.totalorder %s89, %s90
    %p99 = scmp.eq.s32.totalorder %s16, 0
    %p100 = por %p98, %p99
    %p101 = scmp.ne.s32.totalorder %s89, %s90
    %p102 = scmp.eq.s32.totalorder %s17, 1
    %p103 = por %p101, %p102
    %p105 = scmp.ne.s32.totalorder %s90, %s104
    %p106 = scmp.eq.s32.totalorder %s17, 0
    %p107 = por %p105, %p106
    %s109 = sadd.s32 %s108, 1
    %p112 = scmp.eq.s32.totalorder %s11, 1
    %p113 = scmp.ne.s32.totalorder %s108, %s110
    %p114 = scmp.eq.s32.totalorder %s11, 0
    %p115 = por %p113, %p114
    %p116 = scmp.ne.s32.totalorder %s108, %s110
    %p117 = scmp.eq.s32.totalorder %s16, 1
    %p118 = por %p116, %p117
    %p119 = scmp.ne.s32.totalorder %s110, %s111
    %p120 = scmp.eq.s32.totalorder %s16, 0
    %p121 = por %p119, %p120
    %p122 = scmp.ne.s32.totalorder %s110, %s111
    %p123 = scmp.eq.s32.totalorder %s17, 1
    %p124 = por %p122, %p123
    %p126 = scmp.ne.s32.totalorder %s111, %s125
    %p127 = scmp.eq.s32.totalorder %s17, 0
    %p128 = por %p126, %p127
    %s129 = ssub.s32 %s11, %s18
    %p130 = scmp.eq.s32.totalorder %s129, 0
    %s132 = sadd.s32 %s131, 1
    %s133 = scalar_select %p130, %s131, %s132
    %p136 = pneg %p130
    %p137 = scmp.eq.s32.totalorder %s11, 1
    %p138 = por %p136, %p137
    %p139 = scmp.ne.s32.totalorder %s131, %s134
    %p140 = scmp.eq.s32.totalorder %s11, 0
    %p141 = por %p139, %p140
    %p142 = scmp.ne.s32.totalorder %s131, %s134
    %p143 = scmp.eq.s32.totalorder %s16, 1
    %p144 = por %p142, %p143
    %p145 = scmp.ne.s32.totalorder %s134, %s135
    %p146 = scmp.eq.s32.totalorder %s16, 0
    %p147 = por %p145, %p146
    %p148 = scmp.ne.s32.totalorder %s134, %s135
    %p149 = scmp.eq.s32.totalorder %s17, 1
    %p150 = por %p148, %p149
    %p152 = scmp.ne.s32.totalorder %s135, %s151
    %p153 = scmp.eq.s32.totalorder %s17, 0
    %p154 = por %p152, %p153
    %p155 = scmp.le.s32.totalorder 1, %s11
    %p156 = scmp.lt.s32.totalorder %s11, 3
    %p157 = pnand %p155, %p156
    %p158 = pneg %p157
    // Predicated region
    $region9: #{teacher_forward.6} parent=5 // pred_check
      _
    $region10: #{teacher_forward.6} parent=5 // pred_check_branch
      %160 = sbr.rel (%p157) target = $region12
    $region11: #{teacher_forward.6} parent=5 // pred_region
      %s161 = ssub.s32 %s11, 1
      // Predicated region
      $region13: #{teacher_forward.6} parent=11 // pred_check
        %p162 = pneg %p58
      $region14: #{teacher_forward.6} parent=11 // pred_check_branch
        %164 = sbr.rel (%p162) target = $region16
      $region15: #{teacher_forward.6} parent=11 // pred_region
        _
      $region16: #{teacher_forward.6} parent=11 // pred_fallthru
        _
      // Predicated region
      $region17: #{teacher_forward.6} parent=11 // pred_check
        %p165 = pneg %p79
      $region18: #{teacher_forward.6} parent=11 // pred_check_branch
        %167 = sbr.rel (%p165) target = $region20
      $region19: #{teacher_forward.6} parent=11 // pred_region
        _
      $region20: #{teacher_forward.6} parent=11 // pred_fallthru
        _
      // Predicated region
      $region21: #{teacher_forward.6} parent=11 // pred_check
        %p168 = pneg %p100
      $region22: #{teacher_forward.6} parent=11 // pred_check_branch
        %170 = sbr.rel (%p168) target = $region24
      $region23: #{teacher_forward.6} parent=11 // pred_region
        _
      $region24: #{teacher_forward.6} parent=11 // pred_fallthru
        _
      // Predicated region
      $region25: #{teacher_forward.6} parent=11 // pred_check
        %p171 = pneg %p121
      $region26: #{teacher_forward.6} parent=11 // pred_check_branch
        %173 = sbr.rel (%p171) target = $region28
      $region27: #{teacher_forward.6} parent=11 // pred_region
        _
      $region28: #{teacher_forward.6} parent=11 // pred_fallthru
        _
    $region12: #{teacher_forward.6} parent=5 // pred_fallthru
      _
    %p174 = scmp.lt.s32.totalorder %s11, 2
    // Predicated region
    $region29: #{teacher_forward.6} parent=5 // pred_check
      %p175 = pneg %p174
    $region30: #{teacher_forward.6} parent=5 // pred_check_branch
      %177 = sbr.rel (%p175) target = $region32
    $region31: #{teacher_forward.6} parent=5 // pred_region
      // Predicated region
      $region33: #{teacher_forward.6} parent=31 // pred_check
        %p178 = pneg %p31
      $region34: #{teacher_forward.6} parent=31 // pred_check_branch
        %180 = sbr.rel (%p178) target = $region36
      $region35: #{teacher_forward.6} parent=31 // pred_region
        %p181 = scmp.lt.s32.totalorder %s11, 1
        %s182 = scalar_select %p181, %s11, 1
        %s183 = smul.addr %s182, 36
        %s184 = smul.addr %s183, 4
        %s185 = scalar_lea.vmem %s0, %s184
      $region36: #{teacher_forward.6} parent=31 // pred_fallthru
        _
    $region32: #{teacher_forward.6} parent=5 // pred_fallthru
      _
    %p186 = scmp.le.s32.totalorder 1, %s11
    %p187 = scmp.lt.s32.totalorder %s11, 3
    %p188 = pnand %p186, %p187
    %p189 = pneg %p188
    // Predicated region
    $region37: #{teacher_forward.6} parent=5 // pred_check
      _
    $region38: #{teacher_forward.6} parent=5 // pred_check_branch
      %191 = sbr.rel (%p188) target = $region40
    $region39: #{teacher_forward.6} parent=5 // pred_region
      %s192 = ssub.s32 %s11, 1
      %p193 = scmp.lt.s32.totalorder %s16, 1
      %s194 = scalar_select %p193, %s16, 1
      %s195 = smul.addr %s194, 36
      %s196 = smul.addr %s195, 4
      %s197 = scalar_lea.vmem %s0, %s196
      %p198 = pneg %p37
      %p199 = pneg %p34
      %p200 = pneg %p58
      %p201 = pneg %p55
      %p202 = pneg %p79
      %p203 = pneg %p76
      %p204 = pneg %p100
      %p205 = pneg %p97
      %p206 = pneg %p121
      %p207 = pneg %p118
      %p208 = pneg %p147
      %p209 = pneg %p144
      %p210 = scmp.lt.s32.totalorder %s16, 1
      %s211 = scalar_select %p210, %s16, 1
      %s212 = smul.addr %s211, 32
      %s213 = smul.addr %s212, 8
      %s214 = scalar_lea.vmem %s5, %s213
      %p215 = scmp.lt.s32.totalorder %s16, 1
      %s216 = scalar_select %p215, %s16, 1
      %s217 = smul.addr %s216, 36
      %s218 = smul.addr %s217, 4
      %s219 = scalar_lea.vmem %s0, %s218
      %p220 = scmp.lt.s32.totalorder %s16, 1
      %s221 = scalar_select %p220, %s16, 1
      %s222 = smul.addr %s221, 32
      %s223 = smul.addr %s222, 8
      %s224 = scalar_lea.vmem %s5, %s223
      %v226 = vld [vmem:[%s219] sm:$0xf]
      %v227 = vld [vmem:[%s219 + $0x4] sm:$0xf]
      %v228 = vld [vmem:[%s219 + $0x8] sm:$0xf]
      %v229 = vld [vmem:[%s219 + $0xc] sm:$0xf]
      %v230 = vld [vmem:[%s219 + $0x10] sm:$0xf]
      %v231 = vld [vmem:[%s219 + $0x14] sm:$0xf]
      %v232 = vld [vmem:[%s219 + $0x18] sm:$0xf]
      %v233 = vld [vmem:[%s219 + $0x1c] sm:$0xf]
      %v234 = vld [vmem:[%s219 + $0x20] sm:$0xf]
      %v235 = vld [vmem:[%s219 + $0x24] sm:$0xf]
      %v236 = vld [vmem:[%s219 + $0x28] sm:$0xf]
      %v237 = vld [vmem:[%s219 + $0x2c] sm:$0xf]
      %v238 = vld [vmem:[%s219 + $0x30] sm:$0xf]
      %v239 = vld [vmem:[%s219 + $0x34] sm:$0xf]
      %v240 = vld [vmem:[%s219 + $0x38] sm:$0xf]
      %v241 = vld [vmem:[%s219 + $0x3c] sm:$0xf]
      %v242 = vld [vmem:[%s219 + $0x40] sm:$0xf]
      %v243 = vld [vmem:[%s219 + $0x44] sm:$0xf]
      %v244 = vld [vmem:[%s219 + $0x48] sm:$0xf]
      %v245 = vld [vmem:[%s219 + $0x4c] sm:$0xf]
      %v246 = vld [vmem:[%s219 + $0x50] sm:$0xf]
      %v247 = vld [vmem:[%s219 + $0x54] sm:$0xf]
      %v248 = vld [vmem:[%s219 + $0x58] sm:$0xf]
      %v249 = vld [vmem:[%s219 + $0x5c] sm:$0xf]
      %v250 = vld [vmem:[%s219 + $0x60] sm:$0xf]
      %v251 = vld [vmem:[%s219 + $0x64] sm:$0xf]
      %v252 = vld [vmem:[%s219 + $0x68] sm:$0xf]
      %v253 = vld [vmem:[%s219 + $0x6c] sm:$0xf]
      %v254 = vld [vmem:[%s219 + $0x70] sm:$0xf]
      %v255 = vld [vmem:[%s219 + $0x74] sm:$0xf]
      %v256 = vld [vmem:[%s219 + $0x78] sm:$0xf]
      %v257 = vld [vmem:[%s219 + $0x7c] sm:$0xf]
      %v258 = vld [vmem:[%s219 + $0x80] sm:$0xf]
      %v259 = vld [vmem:[%s219 + $0x84] sm:$0xf]
      %v260 = vld [vmem:[%s219 + $0x88] sm:$0xf]
      %v261 = vld [vmem:[%s219 + $0x8c] sm:$0xf]
      %v262 = vld [vmem:[%s1] sm:$0xf]
      %v263 = vld [vmem:[%s1 + $0x4] sm:$0xf]
      %v264 = vld [vmem:[%s1 + $0x8] sm:$0xf]
      %v265 = vld [vmem:[%s1 + $0xc] sm:$0xf]
      %v266 = vld [vmem:[%s1 + $0x10] sm:$0xf]
      %v267 = vld [vmem:[%s1 + $0x14] sm:$0xf]
      %v268 = vld [vmem:[%s1 + $0x18] sm:$0xf]
      %v269 = vld [vmem:[%s1 + $0x1c] sm:$0xf]
      %v270 = vld [vmem:[%s1 + $0x20] sm:$0xf]
      %v271 = vld [vmem:[%s1 + $0x24] sm:$0xf]
      %v272 = vld [vmem:[%s1 + $0x28] sm:$0xf]
      %v273 = vld [vmem:[%s1 + $0x2c] sm:$0xf]
      %s274 = scalar_lea.vmem %s1, 48
      %v275 = vld [vmem:[%s274] sm:$0xf]
      %v276 = vld [vmem:[%s274 + $0x4] sm:$0xf]
      %v277 = vld [vmem:[%s274 + $0x8] sm:$0xf]
      %v278 = vld [vmem:[%s274 + $0xc] sm:$0xf]
      %v279 = vld [vmem:[%s274 + $0x10] sm:$0xf]
      %v280 = vld [vmem:[%s274 + $0x14] sm:$0xf]
      %v281 = vld [vmem:[%s274 + $0x18] sm:$0xf]
      %v282 = vld [vmem:[%s274 + $0x1c] sm:$0xf]
      %v283 = vld [vmem:[%s274 + $0x20] sm:$0xf]
      %v284 = vld [vmem:[%s274 + $0x24] sm:$0xf]
      %v285 = vld [vmem:[%s274 + $0x28] sm:$0xf]
      %v286 = vld [vmem:[%s274 + $0x2c] sm:$0xf]
      %v319 = vunpack.c.l.b16 %v228
      %v320 = vunpack.c.l.b16 %v229
      %v321 = vunpack.c.l.b16 %v230
      %v322 = vunpack.c.l.b16 %v231
      %v323 = vunpack.c.l.b16 %v232
      %v324 = vunpack.c.l.b16 %v233
      %v325 = vunpack.c.l.b16 %v234
      %v326 = vunpack.c.l.b16 %v235
      %v327 = vunpack.c.l.b16 %v236
      %v328 = vunpack.c.l.b16 %v237
      %v329 = vunpack.c.l.b16 %v238
      %v330 = vunpack.c.l.b16 %v239
      %v331 = vunpack.c.l.b16 %v240
      %v332 = vunpack.c.l.b16 %v241
      %v333 = vunpack.c.l.b16 %v242
      %v334 = vunpack.c.l.b16 %v243
      %v335 = vunpack.c.l.b16 %v244
      %v336 = vunpack.c.l.b16 %v245
      %v337 = vunpack.c.l.b16 %v246
      %v338 = vunpack.c.l.b16 %v247
      %v339 = vunpack.c.l.b16 %v248
      %v340 = vunpack.c.l.b16 %v249
      %v341 = vunpack.c.l.b16 %v250
      %v342 = vunpack.c.l.b16 %v251
      %v343 = vunpack.c.l.b16 %v252
      %v344 = vunpack.c.l.b16 %v253
      %v345 = vunpack.c.l.b16 %v254
      %v346 = vunpack.c.l.b16 %v255
      %v347 = vunpack.c.l.b16 %v256
      %v348 = vunpack.c.l.b16 %v257
      %v349 = vunpack.c.l.b16 %v258
      %v350 = vunpack.c.l.b16 %v259
      %v351 = vpack.c.b16 %v320, %v319
      %v352 = vpack.c.b16 %v322, %v321
      %v353 = vpack.c.b16 %v324, %v323
      %v354 = vpack.c.b16 %v326, %v325
      %v355 = vpack.c.b16 %v328, %v327
      %v356 = vpack.c.b16 %v330, %v329
      %v357 = vpack.c.b16 %v332, %v331
      %v358 = vpack.c.b16 %v334, %v333
      %v359 = vpack.c.b16 %v336, %v335
      %v360 = vpack.c.b16 %v338, %v337
      %v361 = vpack.c.b16 %v340, %v339
      %v362 = vpack.c.b16 %v342, %v341
      %v363 = vpack.c.b16 %v344, %v343
      %v364 = vpack.c.b16 %v346, %v345
      %v365 = vpack.c.b16 %v348, %v347
      %v366 = vpack.c.b16 %v350, %v349
      %v379 = vunpack.c.l.b16 %v275
      %v380 = vunpack.c.l.b16 %v276
      %v381 = vunpack.c.l.b16 %v277
      %v382 = vunpack.c.l.b16 %v278
      %v383 = vunpack.c.l.b16 %v279
      %v384 = vunpack.c.l.b16 %v280
      %v385 = vunpack.c.l.b16 %v281
      %v386 = vunpack.c.l.b16 %v282
      %v387 = vunpack.c.l.b16 %v283
      %v388 = vunpack.c.l.b16 %v284
      %v389 = vunpack.c.l.b16 %v285
      %v390 = vunpack.c.l.b16 %v286
      %v391 = vpack.c.b16 %v380, %v379
      %v392 = vpack.c.b16 %v382, %v381
      %v393 = vpack.c.b16 %v384, %v383
      %v394 = vpack.c.b16 %v386, %v385
      %v395 = vpack.c.b16 %v388, %v387
      %v396 = vpack.c.b16 %v390, %v389
      %vm403 = vcmask 785408
      %v405 = vsel %vm403, %v351, 0
      %v408 = vsel %vm403, %v352, 0
      %v411 = vsel %vm403, %v353, 0
      %v414 = vsel %vm403, %v354, 0
      %v417 = vsel %vm403, %v355, 0
      %v420 = vsel %vm403, %v356, 0
      %v423 = vsel %vm403, %v357, 0
      %v426 = vsel %vm403, %v358, 0
      %v429 = vsel %vm403, %v359, 0
      %v432 = vsel %vm403, %v360, 0
      %v435 = vsel %vm403, %v361, 0
      %v438 = vsel %vm403, %v362, 0
      %v441 = vsel %vm403, %v363, 0
      %v444 = vsel %vm403, %v364, 0
      %v447 = vsel %vm403, %v365, 0
      %v450 = vsel %vm403, %v366, 0
      %452 = vmatprep.subr.bf16.mxu0 0
      %453 = vmatpush1.bf16.msra.mxu0 %v391
      %454 = vmatprep.subr.bf16.mxu0 0
      %455 = vmatpush1.bf16.msra.mxu0 %v392
      %456 = vmatprep.subr.bf16.mxu0 0
      %457 = vmatpush1.bf16.msra.mxu0 %v393
      %458 = vmatprep.subr.bf16.mxu0 0
      %459 = vmatpush1.bf16.msra.mxu0 %v394
      %460 = vmatprep.subr.bf16.mxu0 0
      %461 = vmatpush1.bf16.msra.mxu0 %v395
      %462 = vmatprep.subr.bf16.mxu0 0
      %463 = vmatpush1.bf16.msra.mxu0 %v396
      %464 = vmatprep.subr.bf16.mxu0 0
      %465 = vmatpush1.bf16.msra.mxu0 0
      %466 = vmatprep.subr.bf16.mxu0 0
      %467 = vmatpush1.bf16.msra.mxu0 0
      %468 = vmatprep.subr.bf16.mxu0 0
      %469 = vmatpush1.bf16.msra.mxu0 0
      %470 = vmatprep.subr.bf16.mxu0 0
      %471 = vmatpush1.bf16.msra.mxu0 0
      %472 = vmatprep.subr.bf16.mxu0 0
      %473 = vmatpush1.bf16.msra.mxu0 0
      %474 = vmatprep.subr.bf16.mxu0 0
      %475 = vmatpush1.bf16.msra.mxu0 0
      %476 = vmatprep.subr.bf16.mxu0 0
      %477 = vmatpush1.bf16.msra.mxu0 0
      %478 = vmatprep.subr.bf16.mxu0 0
      %479 = vmatpush1.bf16.msra.mxu0 0
      %480 = vmatprep.subr.bf16.mxu0 0
      %481 = vmatpush1.bf16.msra.mxu0 0
      %482 = vmatprep.subr.bf16.mxu0 0
      %483 = vmatpush1.bf16.msra.mxu0 0
      %484 = vmatprep.mubr.bf16.mxu0 0
      %485 = vmatmul.mubr.bf16.gmra.mrb[0].mxu0 %v405
      %v486 = vpop.f32.mrb[0].mxu0
      %v487 = vadd.f32 0.0, %v486
      %v488 = vpop.f32.mrb[0].mxu0
      %v489 = vpop.f32.mrb[0].mxu0
      %v490 = vadd.f32 0.0, %v489
      %v491 = vpop.f32.mrb[0].mxu0
      %492 = vmatprep.mubr.bf16.mxu0 0
      %493 = vmatmul.mubr.bf16.gmra.mrb[0].mxu0 %v408
      %v494 = vpop.f32.mrb[0].mxu0
      %v495 = vadd.f32 0.0, %v494
      %v496 = vpop.f32.mrb[0].mxu0
      %v497 = vpop.f32.mrb[0].mxu0
      %v498 = vadd.f32 0.0, %v497
      %v499 = vpop.f32.mrb[0].mxu0
      %500 = vmatprep.mubr.bf16.mxu0 0
      %501 = vmatmul.mubr.bf16.gmra.mrb[0].mxu0 %v411
      %v502 = vpop.f32.mrb[0].mxu0
      %v503 = vadd.f32 0.0, %v502
      %v504 = vpop.f32.mrb[0].mxu0
      %v505 = vpop.f32.mrb[0].mxu0
      %v506 = vadd.f32 0.0, %v505
      %v507 = vpop.f32.mrb[0].mxu0
      %508 = vmatprep.mubr.bf16.mxu0 0
      %509 = vmatmul.mubr.bf16.gmra.mrb[0].mxu0 %v414
      %v510 = vpop.f32.mrb[0].mxu0
      %v511 = vadd.f32 0.0, %v510
      %v512 = vpop.f32.mrb[0].mxu0
      %v513 = vpop.f32.mrb[0].mxu0
      %v514 = vadd.f32 0.0, %v513
      %v515 = vpop.f32.mrb[0].mxu0
      %516 = vmatprep.mubr.bf16.mxu0 0
      %517 = vmatmul.mubr.bf16.gmra.mrb[0].mxu0 %v417
      %v518 = vpop.f32.mrb[0].mxu0
      %v519 = vadd.f32 0.0, %v518
      %v520 = vpop.f32.mrb[0].mxu0
      %v521 = vpop.f32.mrb[0].mxu0
      %v522 = vadd.f32 0.0, %v521
      %v523 = vpop.f32.mrb[0].mxu0
      %524 = vmatprep.mubr.bf16.mxu0 0
      %525 = vmatmul.mubr.bf16.gmra.mrb[0].mxu0 %v420
      %v526 = vpop.f32.mrb[0].mxu0
      %v527 = vadd.f32 0.0, %v526
      %v528 = vpop.f32.mrb[0].mxu0
      %v529 = vpop.f32.mrb[0].mxu0
      %v530 = vadd.f32 0.0, %v529
      %v531 = vpop.f32.mrb[0].mxu0
      %532 = vmatprep.mubr.bf16.mxu0 0
      %533 = vmatmul.mubr.bf16.gmra.mrb[0].mxu0 %v423
      %v534 = vpop.f32.mrb[0].mxu0
      %v535 = vadd.f32 0.0, %v534
      %v536 = vpop.f32.mrb[0].mxu0
      %v537 = vpop.f32.mrb[0].mxu0
      %v538 = vadd.f32 0.0, %v537
      %v539 = vpop.f32.mrb[0].mxu0
      %540 = vmatprep.mubr.bf16.mxu0 0
      %541 = vmatmul.mubr.bf16.gmra.mrb[0].mxu0 %v426
      %v542 = vpop.f32.mrb[0].mxu0
      %v543 = vadd.f32 0.0, %v542
      %v544 = vpop.f32.mrb[0].mxu0
      %v545 = vpop.f32.mrb[0].mxu0
      %v546 = vadd.f32 0.0, %v545
      %v547 = vpop.f32.mrb[0].mxu0
      %548 = vmatprep.mubr.bf16.mxu0 0
      %549 = vmatmul.mubr.bf16.gmra.mrb[0].mxu0 %v429
      %v550 = vpop.f32.mrb[0].mxu0
      %v551 = vadd.f32 0.0, %v550
      %v552 = vpop.f32.mrb[0].mxu0
      %v553 = vpop.f32.mrb[0].mxu0
      %v554 = vadd.f32 0.0, %v553
      %v555 = vpop.f32.mrb[0].mxu0
      %556 = vmatprep.mubr.bf16.mxu0 0
      %557 = vmatmul.mubr.bf16.gmra.mrb[0].mxu0 %v432
      %v558 = vpop.f32.mrb[0].mxu0
      %v559 = vadd.f32 0.0, %v558
      %v560 = vpop.f32.mrb[0].mxu0
      %v561 = vpop.f32.mrb[0].mxu0
      %v562 = vadd.f32 0.0, %v561
      %v563 = vpop.f32.mrb[0].mxu0
      %564 = vmatprep.mubr.bf16.mxu0 0
      %565 = vmatmul.mubr.bf16.gmra.mrb[0].mxu0 %v435
      %v566 = vpop.f32.mrb[0].mxu0
      %v567 = vadd.f32 0.0, %v566
      %v568 = vpop.f32.mrb[0].mxu0
      %v569 = vpop.f32.mrb[0].mxu0
      %v570 = vadd.f32 0.0, %v569
      %v571 = vpop.f32.mrb[0].mxu0
      %572 = vmatprep.mubr.bf16.mxu0 0
      %573 = vmatmul.mubr.bf16.gmra.mrb[0].mxu0 %v438
      %v574 = vpop.f32.mrb[0].mxu0
      %v575 = vadd.f32 0.0, %v574
      %v576 = vpop.f32.mrb[0].mxu0
      %v577 = vpop.f32.mrb[0].mxu0
      %v578 = vadd.f32 0.0, %v577
      %v579 = vpop.f32.mrb[0].mxu0
      %580 = vmatprep.mubr.bf16.mxu0 0
      %581 = vmatmul.mubr.bf16.gmra.mrb[0].mxu0 %v441
      %v582 = vpop.f32.mrb[0].mxu0
      %v583 = vadd.f32 0.0, %v582
      %v584 = vpop.f32.mrb[0].mxu0
      %v585 = vpop.f32.mrb[0].mxu0
      %v586 = vadd.f32 0.0, %v585
      %v587 = vpop.f32.mrb[0].mxu0
      %588 = vmatprep.mubr.bf16.mxu0 0
      %589 = vmatmul.mubr.bf16.gmra.mrb[0].mxu0 %v444
      %v590 = vpop.f32.mrb[0].mxu0
      %v591 = vadd.f32 0.0, %v590
      %v592 = vpop.f32.mrb[0].mxu0
      %v593 = vpop.f32.mrb[0].mxu0
      %v594 = vadd.f32 0.0, %v593
      %v595 = vpop.f32.mrb[0].mxu0
      %596 = vmatprep.mubr.bf16.mxu0 0
      %597 = vmatmul.mubr.bf16.gmra.mrb[0].mxu0 %v447
      %v598 = vpop.f32.mrb[0].mxu0
      %v599 = vadd.f32 0.0, %v598
      %v600 = vpop.f32.mrb[0].mxu0
      %v601 = vpop.f32.mrb[0].mxu0
      %v602 = vadd.f32 0.0, %v601
      %v603 = vpop.f32.mrb[0].mxu0
      %604 = vmatprep.mubr.bf16.mxu0 0
      %605 = vmatmul.mubr.bf16.gmra.mrb[0].mxu0 %v450
      %v606 = vpop.f32.mrb[0].mxu0
      %v607 = vadd.f32 0.0, %v606
      %v608 = vpop.f32.mrb[0].mxu0
      %v609 = vpop.f32.mrb[0].mxu0
      %v610 = vadd.f32 0.0, %v609
      %v611 = vpop.f32.mrb[0].mxu0
      %612 = vdwg.mxu0
      %v615 = vunpack.c.l.b16 %v226
      %v616 = vunpack.c.l.b16 %v227
      %v617 = vpack.c.b16 %v616, %v615
      %v630 = vunpack.c.l.b16 %v262
      %v631 = vunpack.c.l.b16 %v263
      %v632 = vunpack.c.l.b16 %v264
      %v633 = vunpack.c.l.b16 %v265
      %v634 = vunpack.c.l.b16 %v266
      %v635 = vunpack.c.l.b16 %v267
      %v636 = vunpack.c.l.b16 %v268
      %v637 = vunpack.c.l.b16 %v269
      %v638 = vunpack.c.l.b16 %v270
      %v639 = vunpack.c.l.b16 %v271
      %v640 = vunpack.c.l.b16 %v272
      %v641 = vunpack.c.l.b16 %v273
      %v642 = vpack.c.b16 %v631, %v630
      %v643 = vpack.c.b16 %v633, %v632
      %v644 = vpack.c.b16 %v635, %v634
      %v645 = vpack.c.b16 %v637, %v636
      %v646 = vpack.c.b16 %v639, %v638
      %v647 = vpack.c.b16 %v641, %v640
      %v655 = vsel %vm403, %v617, 0
      %657 = vmatprep.subr.bf16.mxu0 0
      %658 = vmatpush1.bf16.msra.mxu0 %v642
      %659 = vmatprep.subr.bf16.mxu0 0
      %660 = vmatpush1.bf16.msra.mxu0 %v643
      %661 = vmatprep.subr.bf16.mxu0 0
      %662 = vmatpush1.bf16.msra.mxu0 %v644
      %663 = vmatprep.subr.bf16.mxu0 0
      %664 = vmatpush1.bf16.msra.mxu0 %v645
      %665 = vmatprep.subr.bf16.mxu0 0
      %666 = vmatpush1.bf16.msra.mxu0 %v646
      %667 = vmatprep.subr.bf16.mxu0 0
      %668 = vmatpush1.bf16.msra.mxu0 %v647
      %669 = vmatprep.subr.bf16.mxu0 0
      %670 = vmatpush1.bf16.msra.mxu0 0
      %671 = vmatprep.subr.bf16.mxu0 0
      %672 = vmatpush1.bf16.msra.mxu0 0
      %673 = vmatprep.subr.bf16.mxu0 0
      %674 = vmatpush1.bf16.msra.mxu0 0
      %675 = vmatprep.subr.bf16.mxu0 0
      %676 = vmatpush1.bf16.msra.mxu0 0
      %677 = vmatprep.subr.bf16.mxu0 0
      %678 = vmatpush1.bf16.msra.mxu0 0
      %679 = vmatprep.subr.bf16.mxu0 0
      %680 = vmatpush1.bf16.msra.mxu0 0
      %681 = vmatprep.subr.bf16.mxu0 0
      %682 = vmatpush1.bf16.msra.mxu0 0
      %683 = vmatprep.subr.bf16.mxu0 0
      %684 = vmatpush1.bf16.msra.mxu0 0
      %685 = vmatprep.subr.bf16.mxu0 0
      %686 = vmatpush1.bf16.msra.mxu0 0
      %687 = vmatprep.subr.bf16.mxu0 0
      %688 = vmatpush1.bf16.msra.mxu0 0
      %689 = vmatprep.mubr.bf16.mxu0 0
      %690 = vmatmul.mubr.bf16.gmra.mrb[0].mxu0 %v655
      %v691 = vpop.f32.mrb[0].mxu0
      %v692 = vadd.f32 %v487, %v691
      %v693 = vpop.f32.mrb[0].mxu0
      %v694 = vpop.f32.mrb[0].mxu0
      %v695 = vadd.f32 %v490, %v694
      %v696 = vpop.f32.mrb[0].mxu0
      %697 = vmatprep.mubr.bf16.mxu0 0
      %698 = vmatmul.mubr.bf16.gmra.mrb[0].mxu0 %v405
      %v699 = vpop.f32.mrb[0].mxu0
      %v700 = vadd.f32 %v495, %v699
      %v701 = vpop.f32.mrb[0].mxu0
      %v702 = vpop.f32.mrb[0].mxu0
      %v703 = vadd.f32 %v498, %v702
      %v704 = vpop.f32.mrb[0].mxu0
      %705 = vmatprep.mubr.bf16.mxu0 0
      %706 = vmatmul.mubr.bf16.gmra.mrb[0].mxu0 %v408
      %v707 = vpop.f32.mrb[0].mxu0
      %v708 = vadd.f32 %v503, %v707
      %v709 = vpop.f32.mrb[0].mxu0
      %v710 = vpop.f32.mrb[0].mxu0
      %v711 = vadd.f32 %v506, %v710
      %v712 = vpop.f32.mrb[0].mxu0
      %713 = vmatprep.mubr.bf16.mxu0 0
      %714 = vmatmul.mubr.bf16.gmra.mrb[0].mxu0 %v411
      %v715 = vpop.f32.mrb[0].mxu0
      %v716 = vadd.f32 %v511, %v715
      %v717 = vpop.f32.mrb[0].mxu0
      %v718 = vpop.f32.mrb[0].mxu0
      %v719 = vadd.f32 %v514, %v718
      %v720 = vpop.f32.mrb[0].mxu0
      %721 = vmatprep.mubr.bf16.mxu0 0
      %722 = vmatmul.mubr.bf16.gmra.mrb[0].mxu0 %v414
      %v723 = vpop.f32.mrb[0].mxu0
      %v724 = vadd.f32 %v519, %v723
      %v725 = vpop.f32.mrb[0].mxu0
      %v726 = vpop.f32.mrb[0].mxu0
      %v727 = vadd.f32 %v522, %v726
      %v728 = vpop.f32.mrb[0].mxu0
      %729 = vmatprep.mubr.bf16.mxu0 0
      %730 = vmatmul.mubr.bf16.gmra.mrb[0].mxu0 %v417
      %v731 = vpop.f32.mrb[0].mxu0
      %v732 = vadd.f32 %v527, %v731
      %v733 = vpop.f32.mrb[0].mxu0
      %v734 = vpop.f32.mrb[0].mxu0
      %v735 = vadd.f32 %v530, %v734
      %v736 = vpop.f32.mrb[0].mxu0
      %737 = vmatprep.mubr.bf16.mxu0 0
      %738 = vmatmul.mubr.bf16.gmra.mrb[0].mxu0 %v420
      %v739 = vpop.f32.mrb[0].mxu0
      %v740 = vadd.f32 %v535, %v739
      %v741 = vpop.f32.mrb[0].mxu0
      %v742 = vpop.f32.mrb[0].mxu0
      %v743 = vadd.f32 %v538, %v742
      %v744 = vpop.f32.mrb[0].mxu0
      %745 = vmatprep.mubr.bf16.mxu0 0
      %746 = vmatmul.mubr.bf16.gmra.mrb[0].mxu0 %v423
      %v747 = vpop.f32.mrb[0].mxu0
      %v748 = vadd.f32 %v543, %v747
      %v749 = vpop.f32.mrb[0].mxu0
      %v750 = vpop.f32.mrb[0].mxu0
      %v751 = vadd.f32 %v546, %v750
      %v752 = vpop.f32.mrb[0].mxu0
      %753 = vmatprep.mubr.bf16.mxu0 0
      %754 = vmatmul.mubr.bf16.gmra.mrb[0].mxu0 %v426
      %v755 = vpop.f32.mrb[0].mxu0
      %v756 = vadd.f32 %v551, %v755
      %v757 = vpop.f32.mrb[0].mxu0
      %v758 = vpop.f32.mrb[0].mxu0
      %v759 = vadd.f32 %v554, %v758
      %v760 = vpop.f32.mrb[0].mxu0
      %761 = vmatprep.mubr.bf16.mxu0 0
      %762 = vmatmul.mubr.bf16.gmra.mrb[0].mxu0 %v429
      %v763 = vpop.f32.mrb[0].mxu0
      %v764 = vadd.f32 %v559, %v763
      %v765 = vpop.f32.mrb[0].mxu0
      %v766 = vpop.f32.mrb[0].mxu0
      %v767 = vadd.f32 %v562, %v766
      %v768 = vpop.f32.mrb[0].mxu0
      %769 = vmatprep.mubr.bf16.mxu0 0
      %770 = vmatmul.mubr.bf16.gmra.mrb[0].mxu0 %v432
      %v771 = vpop.f32.mrb[0].mxu0
      %v772 = vadd.f32 %v567, %v771
      %v773 = vpop.f32.mrb[0].mxu0
      %v774 = vpop.f32.mrb[0].mxu0
      %v775 = vadd.f32 %v570, %v774
      %v776 = vpop.f32.mrb[0].mxu0
      %777 = vmatprep.mubr.bf16.mxu0 0
      %778 = vmatmul.mubr.bf16.gmra.mrb[0].mxu0 %v435
      %v779 = vpop.f32.mrb[0].mxu0
      %v780 = vadd.f32 %v575, %v779
      %v781 = vpop.f32.mrb[0].mxu0
      %v782 = vpop.f32.mrb[0].mxu0
      %v783 = vadd.f32 %v578, %v782
      %v784 = vpop.f32.mrb[0].mxu0
      %785 = vmatprep.mubr.bf16.mxu0 0
      %786 = vmatmul.mubr.bf16.gmra.mrb[0].mxu0 %v438
      %v787 = vpop.f32.mrb[0].mxu0
      %v788 = vadd.f32 %v583, %v787
      %v789 = vpop.f32.mrb[0].mxu0
      %v790 = vpop.f32.mrb[0].mxu0
      %v791 = vadd.f32 %v586, %v790
      %v792 = vpop.f32.mrb[0].mxu0
      %793 = vmatprep.mubr.bf16.mxu0 0
      %794 = vmatmul.mubr.bf16.gmra.mrb[0].mxu0 %v441
      %v795 = vpop.f32.mrb[0].mxu0
      %v796 = vadd.f32 %v591, %v795
      %v797 = vpop.f32.mrb[0].mxu0
      %v798 = vpop.f32.mrb[0].mxu0
      %v799 = vadd.f32 %v594, %v798
      %v800 = vpop.f32.mrb[0].mxu0
      %801 = vmatprep.mubr.bf16.mxu0 0
      %802 = vmatmul.mubr.bf16.gmra.mrb[0].mxu0 %v444
      %v803 = vpop.f32.mrb[0].mxu0
      %v804 = vadd.f32 %v599, %v803
      %v805 = vpop.f32.mrb[0].mxu0
      %v806 = vpop.f32.mrb[0].mxu0
      %v807 = vadd.f32 %v602, %v806
      %v808 = vpop.f32.mrb[0].mxu0
      %809 = vmatprep.mubr.bf16.mxu0 0
      %810 = vmatmul.mubr.bf16.gmra.mrb[0].mxu0 %v447
      %v811 = vpop.f32.mrb[0].mxu0
      %v812 = vadd.f32 %v607, %v811
      %v813 = vpop.f32.mrb[0].mxu0
      %v814 = vpop.f32.mrb[0].mxu0
      %v815 = vadd.f32 %v610, %v814
      %v816 = vpop.f32.mrb[0].mxu0
      %817 = vdwg.mxu0
      %s818 = scalar_lea.vmem %s1, 96
      %v819 = vld [vmem:[%s818] sm:$0xf]
      %v820 = vld [vmem:[%s818 + $0x4] sm:$0xf]
      %v821 = vld [vmem:[%s818 + $0x8] sm:$0xf]
      %v822 = vld [vmem:[%s818 + $0xc] sm:$0xf]
      %v823 = vld [vmem:[%s818 + $0x10] sm:$0xf]
      %v824 = vld [vmem:[%s818 + $0x14] sm:$0xf]
      %v825 = vld [vmem:[%s818 + $0x18] sm:$0xf]
      %v826 = vld [vmem:[%s818 + $0x1c] sm:$0xf]
      %v827 = vld [vmem:[%s818 + $0x20] sm:$0xf]
      %v828 = vld [vmem:[%s818 + $0x24] sm:$0xf]
      %v829 = vld [vmem:[%s818 + $0x28] sm:$0xf]
      %v830 = vld [vmem:[%s818 + $0x2c] sm:$0xf]
      %v833 = vunpack.c.l.b16 %v260
      %v834 = vunpack.c.l.b16 %v261
      %v835 = vpack.c.b16 %v834, %v833
      %v848 = vunpack.c.l.b16 %v819
      %v849 = vunpack.c.l.b16 %v820
      %v850 = vunpack.c.l.b16 %v821
      %v851 = vunpack.c.l.b16 %v822
      %v852 = vunpack.c.l.b16 %v823
      %v853 = vunpack.c.l.b16 %v824
      %v854 = vunpack.c.l.b16 %v825
      %v855 = vunpack.c.l.b16 %v826
      %v856 = vunpack.c.l.b16 %v827
      %v857 = vunpack.c.l.b16 %v828
      %v858 = vunpack.c.l.b16 %v829
      %v859 = vunpack.c.l.b16 %v830
      %v860 = vpack.c.b16 %v849, %v848
      %v861 = vpack.c.b16 %v851, %v850
      %v862 = vpack.c.b16 %v853, %v852
      %v863 = vpack.c.b16 %v855, %v854
      %v864 = vpack.c.b16 %v857, %v856
      %v865 = vpack.c.b16 %v859, %v858
      %v873 = vsel %vm403, %v835, 0
      %875 = vmatprep.subr.bf16.mxu0 0
      %876 = vmatpush1.bf16.msra.mxu0 %v860
      %877 = vmatprep.subr.bf16.mxu0 0
      %878 = vmatpush1.bf16.msra.mxu0 %v861
      %879 = vmatprep.subr.bf16.mxu0 0
      %880 = vmatpush1.bf16.msra.mxu0 %v862
      %881 = vmatprep.subr.bf16.mxu0 0
      %882 = vmatpush1.bf16.msra.mxu0 %v863
      %883 = vmatprep.subr.bf16.mxu0 0
      %884 = vmatpush1.bf16.msra.mxu0 %v864
      %885 = vmatprep.subr.bf16.mxu0 0
      %886 = vmatpush1.bf16.msra.mxu0 %v865
      %887 = vmatprep.subr.bf16.mxu0 0
      %888 = vmatpush1.bf16.msra.mxu0 0
      %889 = vmatprep.subr.bf16.mxu0 0
      %890 = vmatpush1.bf16.msra.mxu0 0
      %891 = vmatprep.subr.bf16.mxu0 0
      %892 = vmatpush1.bf16.msra.mxu0 0
      %893 = vmatprep.subr.bf16.mxu0 0
      %894 = vmatpush1.bf16.msra.mxu0 0
      %895 = vmatprep.subr.bf16.mxu0 0
      %896 = vmatpush1.bf16.msra.mxu0 0
      %897 = vmatprep.subr.bf16.mxu0 0
      %898 = vmatpush1.bf16.msra.mxu0 0
      %899 = vmatprep.subr.bf16.mxu0 0
      %900 = vmatpush1.bf16.msra.mxu0 0
      %901 = vmatprep.subr.bf16.mxu0 0
      %902 = vmatpush1.bf16.msra.mxu0 0
      %903 = vmatprep.subr.bf16.mxu0 0
      %904 = vmatpush1.bf16.msra.mxu0 0
      %905 = vmatprep.subr.bf16.mxu0 0
      %906 = vmatpush1.bf16.msra.mxu0 0
      %907 = vmatprep.mubr.bf16.mxu0 0
      %908 = vmatmul.mubr.bf16.gmra.mrb[0].mxu0 %v408
      %v909 = vpop.f32.mrb[0].mxu0
      %v910 = vadd.f32 0.0, %v909
      %v911 = vpop.f32.mrb[0].mxu0
      %v912 = vpop.f32.mrb[0].mxu0
      %v913 = vadd.f32 0.0, %v912
      %v914 = vpop.f32.mrb[0].mxu0
      %915 = vmatprep.mubr.bf16.mxu0 0
      %916 = vmatmul.mubr.bf16.gmra.mrb[0].mxu0 %v411
      %v917 = vpop.f32.mrb[0].mxu0
      %v918 = vadd.f32 0.0, %v917
      %v919 = vpop.f32.mrb[0].mxu0
      %v920 = vpop.f32.mrb[0].mxu0
      %v921 = vadd.f32 0.0, %v920
      %v922 = vpop.f32.mrb[0].mxu0
      %923 = vmatprep.mubr.bf16.mxu0 0
      %924 = vmatmul.mubr.bf16.gmra.mrb[0].mxu0 %v414
      %v925 = vpop.f32.mrb[0].mxu0
      %v926 = vadd.f32 0.0, %v925
      %v927 = vpop.f32.mrb[0].mxu0
      %v928 = vpop.f32.mrb[0].mxu0
      %v929 = vadd.f32 0.0, %v928
      %v930 = vpop.f32.mrb[0].mxu0
      %931 = vmatprep.mubr.bf16.mxu0 0
      %932 = vmatmul.mubr.bf16.gmra.mrb[0].mxu0 %v417
      %v933 = vpop.f32.mrb[0].mxu0
      %v934 = vadd.f32 0.0, %v933
      %v935 = vpop.f32.mrb[0].mxu0
      %v936 = vpop.f32.mrb[0].mxu0
      %v937 = vadd.f32 0.0, %v936
      %v938 = vpop.f32.mrb[0].mxu0
      %939 = vmatprep.mubr.bf16.mxu0 0
      %940 = vmatmul.mubr.bf16.gmra.mrb[0].mxu0 %v420
      %v941 = vpop.f32.mrb[0].mxu0
      %v942 = vadd.f32 0.0, %v941
      %v943 = vpop.f32.mrb[0].mxu0
      %v944 = vpop.f32.mrb[0].mxu0
      %v945 = vadd.f32 0.0, %v944
      %v946 = vpop.f32.mrb[0].mxu0
      %947 = vmatprep.mubr.bf16.mxu0 0
      %948 = vmatmul.mubr.bf16.gmra.mrb[0].mxu0 %v423
      %v949 = vpop.f32.mrb[0].mxu0
      %v950 = vadd.f32 0.0, %v949
      %v951 = vpop.f32.mrb[0].mxu0
      %v952 = vpop.f32.mrb[0].mxu0
      %v953 = vadd.f32 0.0, %v952
      %v954 = vpop.f32.mrb[0].mxu0
      %955 = vmatprep.mubr.bf16.mxu0 0
      %956 = vmatmul.mubr.bf16.gmra.mrb[0].mxu0 %v426
      %v957 = vpop.f32.mrb[0].mxu0
      %v958 = vadd.f32 0.0, %v957
      %v959 = vpop.f32.mrb[0].mxu0
      %v960 = vpop.f32.mrb[0].mxu0
      %v961 = vadd.f32 0.0, %v960
      %v962 = vpop.f32.mrb[0].mxu0
      %963 = vmatprep.mubr.bf16.mxu0 0
      %964 = vmatmul.mubr.bf16.gmra.mrb[0].mxu0 %v429
      %v965 = vpop.f32.mrb[0].mxu0
      %v966 = vadd.f32 0.0, %v965
      %v967 = vpop.f32.mrb[0].mxu0
      %v968 = vpop.f32.mrb[0].mxu0
      %v969 = vadd.f32 0.0, %v968
      %v970 = vpop.f32.mrb[0].mxu0
      %971 = vmatprep.mubr.bf16.mxu0 0
      %972 = vmatmul.mubr.bf16.gmra.mrb[0].mxu0 %v432
      %v973 = vpop.f32.mrb[0].mxu0
      %v974 = vadd.f32 0.0, %v973
      %v975 = vpop.f32.mrb[0].mxu0
      %v976 = vpop.f32.mrb[0].mxu0
      %v977 = vadd.f32 0.0, %v976
      %v978 = vpop.f32.mrb[0].mxu0
      %979 = vmatprep.mubr.bf16.mxu0 0
      %980 = vmatmul.mubr.bf16.gmra.mrb[0].mxu0 %v435
      %v981 = vpop.f32.mrb[0].mxu0
      %v982 = vadd.f32 0.0, %v981
      %v983 = vpop.f32.mrb[0].mxu0
      %v984 = vpop.f32.mrb[0].mxu0
      %v985 = vadd.f32 0.0, %v984
      %v986 = vpop.f32.mrb[0].mxu0
      %987 = vmatprep.mubr.bf16.mxu0 0
      %988 = vmatmul.mubr.bf16.gmra.mrb[0].mxu0 %v438
      %v989 = vpop.f32.mrb[0].mxu0
      %v990 = vadd.f32 0.0, %v989
      %v991 = vpop.f32.mrb[0].mxu0
      %v992 = vpop.f32.mrb[0].mxu0
      %v993 = vadd.f32 0.0, %v992
      %v994 = vpop.f32.mrb[0].mxu0
      %995 = vmatprep.mubr.bf16.mxu0 0
      %996 = vmatmul.mubr.bf16.gmra.mrb[0].mxu0 %v441
      %v997 = vpop.f32.mrb[0].mxu0
      %v998 = vadd.f32 0.0, %v997
      %v999 = vpop.f32.mrb[0].mxu0
      %v1000 = vpop.f32.mrb[0].mxu0
      %v1001 = vadd.f32 0.0, %v1000
      %v1002 = vpop.f32.mrb[0].mxu0
      %1003 = vmatprep.mubr.bf16.mxu0 0
      %1004 = vmatmul.mubr.bf16.gmra.mrb[0].mxu0 %v444
      %v1005 = vpop.f32.mrb[0].mxu0
      %v1006 = vadd.f32 0.0, %v1005
      %v1007 = vpop.f32.mrb[0].mxu0
      %v1008 = vpop.f32.mrb[0].mxu0
      %v1009 = vadd.f32 0.0, %v1008
      %v1010 = vpop.f32.mrb[0].mxu0
      %1011 = vmatprep.mubr.bf16.mxu0 0
      %1012 = vmatmul.mubr.bf16.gmra.mrb[0].mxu0 %v447
      %v1013 = vpop.f32.mrb[0].mxu0
      %v1014 = vadd.f32 0.0, %v1013
      %v1015 = vpop.f32.mrb[0].mxu0
      %v1016 = vpop.f32.mrb[0].mxu0
      %v1017 = vadd.f32 0.0, %v1016
      %v1018 = vpop.f32.mrb[0].mxu0
      %1019 = vmatprep.mubr.bf16.mxu0 0
      %1020 = vmatmul.mubr.bf16.gmra.mrb[0].mxu0 %v450
      %v1021 = vpop.f32.mrb[0].mxu0
      %v1022 = vadd.f32 0.0, %v1021
      %v1023 = vpop.f32.mrb[0].mxu0
      %v1024 = vpop.f32.mrb[0].mxu0
      %v1025 = vadd.f32 0.0, %v1024
      %v1026 = vpop.f32.mrb[0].mxu0
      %1027 = vmatprep.mubr.bf16.mxu0 0
      %1028 = vmatmul.mubr.bf16.gmra.mrb[0].mxu0 %v873
      %v1029 = vpop.f32.mrb[0].mxu0
      %v1030 = vadd.f32 0.0, %v1029
      %v1031 = vpop.f32.mrb[0].mxu0
      %v1032 = vpop.f32.mrb[0].mxu0
      %v1033 = vadd.f32 0.0, %v1032
      %v1034 = vpop.f32.mrb[0].mxu0
      %1035 = vdwg.mxu0
      %v1036 = vadd.f32 %v692, %v910
      %v1037 = vadd.f32 %v695, %v913
      %v1038 = vadd.f32 %v700, %v918
      %v1039 = vadd.f32 %v703, %v921
      %v1040 = vadd.f32 %v708, %v926
      %v1041 = vadd.f32 %v711, %v929
      %v1042 = vadd.f32 %v716, %v934
      %v1043 = vadd.f32 %v719, %v937
      %v1044 = vadd.f32 %v724, %v942
      %v1045 = vadd.f32 %v727, %v945
      %v1046 = vadd.f32 %v732, %v950
      %v1047 = vadd.f32 %v735, %v953
      %v1048 = vadd.f32 %v740, %v958
      %v1049 = vadd.f32 %v743, %v961
      %v1050 = vadd.f32 %v748, %v966
      %v1051 = vadd.f32 %v751, %v969
      %v1052 = vadd.f32 %v756, %v974
      %v1053 = vadd.f32 %v759, %v977
      %v1054 = vadd.f32 %v764, %v982
      %v1055 = vadd.f32 %v767, %v985
      %v1056 = vadd.f32 %v772, %v990
      %v1057 = vadd.f32 %v775, %v993
      %v1058 = vadd.f32 %v780, %v998
      %v1059 = vadd.f32 %v783, %v1001
      %v1060 = vadd.f32 %v788, %v1006
      %v1061 = vadd.f32 %v791, %v1009
      %v1062 = vadd.f32 %v796, %v1014
      %v1063 = vadd.f32 %v799, %v1017
      %v1064 = vadd.f32 %v804, %v1022
      %v1065 = vadd.f32 %v807, %v1025
      %v1066 = vadd.f32 %v812, %v1030
      %v1067 = vadd.f32 %v815, %v1033
      %v1068 = vld [vmem:[%s2] sm:$0x1]
      %v1070 = vlaneseq
      %v1071 = vshrl.u32 %v1070, 7
      %v1072 = vsub.s32 0, %v1071
      %v1073 = vrot.slane %v1068, %v1072
      %v1075 = vadd.f32 %v1036, %v1073
      %v1076 = vadd.f32 %v1037, %v1073
      %v1077 = vadd.f32 %v1038, %v1073
      %v1078 = vadd.f32 %v1039, %v1073
      %v1079 = vadd.f32 %v1040, %v1073
      %v1080 = vadd.f32 %v1041, %v1073
      %v1081 = vadd.f32 %v1042, %v1073
      %v1082 = vadd.f32 %v1043, %v1073
      %v1083 = vadd.f32 %v1044, %v1073
      %v1084 = vadd.f32 %v1045, %v1073
      %v1085 = vadd.f32 %v1046, %v1073
      %v1086 = vadd.f32 %v1047, %v1073
      %v1087 = vadd.f32 %v1048, %v1073
      %v1088 = vadd.f32 %v1049, %v1073
      %v1089 = vadd.f32 %v1050, %v1073
      %v1090 = vadd.f32 %v1051, %v1073
      %v1091 = vadd.f32 %v1052, %v1073
      %v1092 = vadd.f32 %v1053, %v1073
      %v1093 = vadd.f32 %v1054, %v1073
      %v1094 = vadd.f32 %v1055, %v1073
      %v1095 = vadd.f32 %v1056, %v1073
      %v1096 = vadd.f32 %v1057, %v1073
      %v1097 = vadd.f32 %v1058, %v1073
      %v1098 = vadd.f32 %v1059, %v1073
      %v1099 = vadd.f32 %v1060, %v1073
      %v1100 = vadd.f32 %v1061, %v1073
      %v1101 = vadd.f32 %v1062, %v1073
      %v1102 = vadd.f32 %v1063, %v1073
      %v1103 = vadd.f32 %v1064, %v1073
      %v1104 = vadd.f32 %v1065, %v1073
      %v1105 = vadd.f32 %v1066, %v1073
      %v1106 = vadd.f32 %v1067, %v1073
      %v1107 = vmax.f32 %v1075, 0.0
      %v1108 = vmax.f32 %v1076, 0.0
      %v1109 = vmax.f32 %v1077, 0.0
      %v1110 = vmax.f32 %v1078, 0.0
      %v1111 = vmax.f32 %v1079, 0.0
      %v1112 = vmax.f32 %v1080, 0.0
      %v1113 = vmax.f32 %v1081, 0.0
      %v1114 = vmax.f32 %v1082, 0.0
      %v1115 = vmax.f32 %v1083, 0.0
      %v1116 = vmax.f32 %v1084, 0.0
      %v1117 = vmax.f32 %v1085, 0.0
      %v1118 = vmax.f32 %v1086, 0.0
      %v1119 = vmax.f32 %v1087, 0.0
      %v1120 = vmax.f32 %v1088, 0.0
      %v1121 = vmax.f32 %v1089, 0.0
      %v1122 = vmax.f32 %v1090, 0.0
      %v1123 = vmax.f32 %v1091, 0.0
      %v1124 = vmax.f32 %v1092, 0.0
      %v1125 = vmax.f32 %v1093, 0.0
      %v1126 = vmax.f32 %v1094, 0.0
      %v1127 = vmax.f32 %v1095, 0.0
      %v1128 = vmax.f32 %v1096, 0.0
      %v1129 = vmax.f32 %v1097, 0.0
      %v1130 = vmax.f32 %v1098, 0.0
      %v1131 = vmax.f32 %v1099, 0.0
      %v1132 = vmax.f32 %v1100, 0.0
      %v1133 = vmax.f32 %v1101, 0.0
      %v1134 = vmax.f32 %v1102, 0.0
      %v1135 = vmax.f32 %v1103, 0.0
      %v1136 = vmax.f32 %v1104, 0.0
      %v1137 = vmax.f32 %v1105, 0.0
      %v1138 = vmax.f32 %v1106, 0.0
      %v1139 = vpack.c.bf16 %v1108, %v1107
      %v1140 = vpack.c.bf16 %v1110, %v1109
      %v1141 = vpack.c.bf16 %v1112, %v1111
      %v1142 = vpack.c.bf16 %v1114, %v1113
      %v1143 = vpack.c.bf16 %v1116, %v1115
      %v1144 = vpack.c.bf16 %v1118, %v1117
      %v1145 = vpack.c.bf16 %v1120, %v1119
      %v1146 = vpack.c.bf16 %v1122, %v1121
      %v1147 = vpack.c.bf16 %v1124, %v1123
      %v1148 = vpack.c.bf16 %v1126, %v1125
      %v1149 = vpack.c.bf16 %v1128, %v1127
      %v1150 = vpack.c.bf16 %v1130, %v1129
      %v1151 = vpack.c.bf16 %v1132, %v1131
      %v1152 = vpack.c.bf16 %v1134, %v1133
      %v1153 = vpack.c.bf16 %v1136, %v1135
      %v1154 = vpack.c.bf16 %v1138, %v1137
      %v1155 = vld [vmem:[%s3] sm:$0xf]
      %v1156 = vld [vmem:[%s3 + $0x4] sm:$0xf]
      %v1157 = vld [vmem:[%s3 + $0x8] sm:$0xf]
      %v1158 = vld [vmem:[%s3 + $0xc] sm:$0xf]
      %v1159 = vld [vmem:[%s4] sm:$0x1]
      %v1161 = vlaneseq
      %v1162 = vshrl.u32 %v1161, 7
      %v1163 = vsub.s32 0, %v1162
      %v1164 = vrot.slane %v1159, %v1163
      %v1170 = vunpack.c.l.b16 %v1155
      %v1171 = vunpack.c.l.b16 %v1156
      %v1172 = vunpack.c.l.b16 %v1157
      %v1173 = vunpack.c.l.b16 %v1158
      %v1174 = vpack.c.b16 %v1171, %v1170
      %v1175 = vpack.c.b16 %v1173, %v1172
      %vm1178 = vcmask 261120
      %v1180 = vsel %vm1178, %v1139, 0
      %v1183 = vsel %vm1178, %v1140, 0
      %v1186 = vsel %vm1178, %v1141, 0
      %v1189 = vsel %vm1178, %v1142, 0
      %v1192 = vsel %vm1178, %v1143, 0
      %v1195 = vsel %vm1178, %v1144, 0
      %v1198 = vsel %vm1178, %v1145, 0
      %v1201 = vsel %vm1178, %v1146, 0
      %v1204 = vsel %vm1178, %v1147, 0
      %v1207 = vsel %vm1178, %v1148, 0
      %v1210 = vsel %vm1178, %v1149, 0
      %v1213 = vsel %vm1178, %v1150, 0
      %v1216 = vsel %vm1178, %v1151, 0
      %v1219 = vsel %vm1178, %v1152, 0
      %v1222 = vsel %vm1178, %v1153, 0
      %v1225 = vsel %vm1178, %v1154, 0
      %1227 = vmatprep.subr.bf16.mxu0 0
      %1228 = vmatpush1.bf16.msra.mxu0 %v1174
      %1229 = vmatprep.subr.bf16.mxu0 0
      %1230 = vmatpush1.bf16.msra.mxu0 %v1175
      %1231 = vmatprep.subr.bf16.mxu0 0
      %1232 = vmatpush1.bf16.msra.mxu0 0
      %1233 = vmatprep.subr.bf16.mxu0 0
      %1234 = vmatpush1.bf16.msra.mxu0 0
      %1235 = vmatprep.subr.bf16.mxu0 0
      %1236 = vmatpush1.bf16.msra.mxu0 0
      %1237 = vmatprep.subr.bf16.mxu0 0
      %1238 = vmatpush1.bf16.msra.mxu0 0
      %1239 = vmatprep.subr.bf16.mxu0 0
      %1240 = vmatpush1.bf16.msra.mxu0 0
      %1241 = vmatprep.subr.bf16.mxu0 0
      %1242 = vmatpush1.bf16.msra.mxu0 0
      %1243 = vmatprep.subr.bf16.mxu0 0
      %1244 = vmatpush1.bf16.msra.mxu0 0
      %1245 = vmatprep.subr.bf16.mxu0 0
      %1246 = vmatpush1.bf16.msra.mxu0 0
      %1247 = vmatprep.subr.bf16.mxu0 0
      %1248 = vmatpush1.bf16.msra.mxu0 0
      %1249 = vmatprep.subr.bf16.mxu0 0
      %1250 = vmatpush1.bf16.msra.mxu0 0
      %1251 = vmatprep.subr.bf16.mxu0 0
      %1252 = vmatpush1.bf16.msra.mxu0 0
      %1253 = vmatprep.subr.bf16.mxu0 0
      %1254 = vmatpush1.bf16.msra.mxu0 0
      %1255 = vmatprep.subr.bf16.mxu0 0
      %1256 = vmatpush1.bf16.msra.mxu0 0
      %1257 = vmatprep.subr.bf16.mxu0 0
      %1258 = vmatpush1.bf16.msra.mxu0 0
      %1259 = vmatprep.mubr.bf16.mxu0 0
      %1260 = vmatmul.mubr.bf16.gmra.mrb[0].mxu0 %v1180
      %v1261 = vpop.f32.mrb[0].mxu0
      %v1262 = vadd.f32 %v1164, %v1261
      %v1263 = vpop.f32.mrb[0].mxu0
      %v1264 = vpop.f32.mrb[0].mxu0
      %v1265 = vadd.f32 %v1164, %v1264
      %v1266 = vpop.f32.mrb[0].mxu0
      %1267 = vmatprep.mubr.bf16.mxu0 0
      %1268 = vmatmul.mubr.bf16.gmra.mrb[0].mxu0 %v1183
      %v1269 = vpop.f32.mrb[0].mxu0
      %v1270 = vadd.f32 %v1164, %v1269
      %v1271 = vpop.f32.mrb[0].mxu0
      %v1272 = vpop.f32.mrb[0].mxu0
      %v1273 = vadd.f32 %v1164, %v1272
      %v1274 = vpop.f32.mrb[0].mxu0
      %1275 = vmatprep.mubr.bf16.mxu0 0
      %1276 = vmatmul.mubr.bf16.gmra.mrb[0].mxu0 %v1186
      %v1277 = vpop.f32.mrb[0].mxu0
      %v1278 = vadd.f32 %v1164, %v1277
      %v1279 = vpop.f32.mrb[0].mxu0
      %v1280 = vpop.f32.mrb[0].mxu0
      %v1281 = vadd.f32 %v1164, %v1280
      %v1282 = vpop.f32.mrb[0].mxu0
      %1283 = vmatprep.mubr.bf16.mxu0 0
      %1284 = vmatmul.mubr.bf16.gmra.mrb[0].mxu0 %v1189
      %v1285 = vpop.f32.mrb[0].mxu0
      %v1286 = vadd.f32 %v1164, %v1285
      %v1287 = vpop.f32.mrb[0].mxu0
      %v1288 = vpop.f32.mrb[0].mxu0
      %v1289 = vadd.f32 %v1164, %v1288
      %v1290 = vpop.f32.mrb[0].mxu0
      %1291 = vmatprep.mubr.bf16.mxu0 0
      %1292 = vmatmul.mubr.bf16.gmra.mrb[0].mxu0 %v1192
      %v1293 = vpop.f32.mrb[0].mxu0
      %v1294 = vadd.f32 %v1164, %v1293
      %v1295 = vpop.f32.mrb[0].mxu0
      %v1296 = vpop.f32.mrb[0].mxu0
      %v1297 = vadd.f32 %v1164, %v1296
      %v1298 = vpop.f32.mrb[0].mxu0
      %1299 = vmatprep.mubr.bf16.mxu0 0
      %1300 = vmatmul.mubr.bf16.gmra.mrb[0].mxu0 %v1195
      %v1301 = vpop.f32.mrb[0].mxu0
      %v1302 = vadd.f32 %v1164, %v1301
      %v1303 = vpop.f32.mrb[0].mxu0
      %v1304 = vpop.f32.mrb[0].mxu0
      %v1305 = vadd.f32 %v1164, %v1304
      %v1306 = vpop.f32.mrb[0].mxu0
      %1307 = vmatprep.mubr.bf16.mxu0 0
      %1308 = vmatmul.mubr.bf16.gmra.mrb[0].mxu0 %v1198
      %v1309 = vpop.f32.mrb[0].mxu0
      %v1310 = vadd.f32 %v1164, %v1309
      %v1311 = vpop.f32.mrb[0].mxu0
      %v1312 = vpop.f32.mrb[0].mxu0
      %v1313 = vadd.f32 %v1164, %v1312
      %v1314 = vpop.f32.mrb[0].mxu0
      %1315 = vmatprep.mubr.bf16.mxu0 0
      %1316 = vmatmul.mubr.bf16.gmra.mrb[0].mxu0 %v1201
      %v1317 = vpop.f32.mrb[0].mxu0
      %v1318 = vadd.f32 %v1164, %v1317
      %v1319 = vpop.f32.mrb[0].mxu0
      %v1320 = vpop.f32.mrb[0].mxu0
      %v1321 = vadd.f32 %v1164, %v1320
      %v1322 = vpop.f32.mrb[0].mxu0
      %1323 = vmatprep.mubr.bf16.mxu0 0
      %1324 = vmatmul.mubr.bf16.gmra.mrb[0].mxu0 %v1204
      %v1325 = vpop.f32.mrb[0].mxu0
      %v1326 = vadd.f32 %v1164, %v1325
      %v1327 = vpop.f32.mrb[0].mxu0
      %v1328 = vpop.f32.mrb[0].mxu0
      %v1329 = vadd.f32 %v1164, %v1328
      %v1330 = vpop.f32.mrb[0].mxu0
      %1331 = vmatprep.mubr.bf16.mxu0 0
      %1332 = vmatmul.mubr.bf16.gmra.mrb[0].mxu0 %v1207
      %v1333 = vpop.f32.mrb[0].mxu0
      %v1334 = vadd.f32 %v1164, %v1333
      %v1335 = vpop.f32.mrb[0].mxu0
      %v1336 = vpop.f32.mrb[0].mxu0
      %v1337 = vadd.f32 %v1164, %v1336
      %v1338 = vpop.f32.mrb[0].mxu0
      %1339 = vmatprep.mubr.bf16.mxu0 0
      %1340 = vmatmul.mubr.bf16.gmra.mrb[0].mxu0 %v1210
      %v1341 = vpop.f32.mrb[0].mxu0
      %v1342 = vadd.f32 %v1164, %v1341
      %v1343 = vpop.f32.mrb[0].mxu0
      %v1344 = vpop.f32.mrb[0].mxu0
      %v1345 = vadd.f32 %v1164, %v1344
      %v1346 = vpop.f32.mrb[0].mxu0
      %1347 = vmatprep.mubr.bf16.mxu0 0
      %1348 = vmatmul.mubr.bf16.gmra.mrb[0].mxu0 %v1213
      %v1349 = vpop.f32.mrb[0].mxu0
      %v1350 = vadd.f32 %v1164, %v1349
      %v1351 = vpop.f32.mrb[0].mxu0
      %v1352 = vpop.f32.mrb[0].mxu0
      %v1353 = vadd.f32 %v1164, %v1352
      %v1354 = vpop.f32.mrb[0].mxu0
      %1355 = vmatprep.mubr.bf16.mxu0 0
      %1356 = vmatmul.mubr.bf16.gmra.mrb[0].mxu0 %v1216
      %v1357 = vpop.f32.mrb[0].mxu0
      %v1358 = vadd.f32 %v1164, %v1357
      %v1359 = vpop.f32.mrb[0].mxu0
      %v1360 = vpop.f32.mrb[0].mxu0
      %v1361 = vadd.f32 %v1164, %v1360
      %v1362 = vpop.f32.mrb[0].mxu0
      %1363 = vmatprep.mubr.bf16.mxu0 0
      %1364 = vmatmul.mubr.bf16.gmra.mrb[0].mxu0 %v1219
      %v1365 = vpop.f32.mrb[0].mxu0
      %v1366 = vadd.f32 %v1164, %v1365
      %v1367 = vpop.f32.mrb[0].mxu0
      %v1368 = vpop.f32.mrb[0].mxu0
      %v1369 = vadd.f32 %v1164, %v1368
      %v1370 = vpop.f32.mrb[0].mxu0
      %1371 = vmatprep.mubr.bf16.mxu0 0
      %1372 = vmatmul.mubr.bf16.gmra.mrb[0].mxu0 %v1222
      %v1373 = vpop.f32.mrb[0].mxu0
      %v1374 = vadd.f32 %v1164, %v1373
      %v1375 = vpop.f32.mrb[0].mxu0
      %v1376 = vpop.f32.mrb[0].mxu0
      %v1377 = vadd.f32 %v1164, %v1376
      %v1378 = vpop.f32.mrb[0].mxu0
      %1379 = vmatprep.mubr.bf16.mxu0 0
      %1380 = vmatmul.mubr.bf16.gmra.mrb[0].mxu0 %v1225
      %v1381 = vpop.f32.mrb[0].mxu0
      %v1382 = vadd.f32 %v1164, %v1381
      %v1383 = vpop.f32.mrb[0].mxu0
      %v1384 = vpop.f32.mrb[0].mxu0
      %v1385 = vadd.f32 %v1164, %v1384
      %v1386 = vpop.f32.mrb[0].mxu0
      %1387 = vdwg.mxu0
      %vm1388 = vcmask 130048
      %1389 = vst.msk [vmem:[%s224] sm:$0xff] %vm1388, %v1262
      %1390 = vst.msk [vmem:[%s224 + $0x8] sm:$0xff] %vm1388, %v1265
      %1391 = vst.msk [vmem:[%s224 + $0x10] sm:$0xff] %vm1388, %v1270
      %1392 = vst.msk [vmem:[%s224 + $0x18] sm:$0xff] %vm1388, %v1273
      %1393 = vst.msk [vmem:[%s224 + $0x20] sm:$0xff] %vm1388, %v1278
      %1394 = vst.msk [vmem:[%s224 + $0x28] sm:$0xff] %vm1388, %v1281
      %1395 = vst.msk [vmem:[%s224 + $0x30] sm:$0xff] %vm1388, %v1286
      %1396 = vst.msk [vmem:[%s224 + $0x38] sm:$0xff] %vm1388, %v1289
      %1397 = vst.msk [vmem:[%s224 + $0x40] sm:$0xff] %vm1388, %v1294
      %1398 = vst.msk [vmem:[%s224 + $0x48] sm:$0xff] %vm1388, %v1297
      %1399 = vst.msk [vmem:[%s224 + $0x50] sm:$0xff] %vm1388, %v1302
      %1400 = vst.msk [vmem:[%s224 + $0x58] sm:$0xff] %vm1388, %v1305
      %1401 = vst.msk [vmem:[%s224 + $0x60] sm:$0xff] %vm1388, %v1310
      %1402 = vst.msk [vmem:[%s224 + $0x68] sm:$0xff] %vm1388, %v1313
      %1403 = vst.msk [vmem:[%s224 + $0x70] sm:$0xff] %vm1388, %v1318
      %1404 = vst.msk [vmem:[%s224 + $0x78] sm:$0xff] %vm1388, %v1321
      %1405 = vst.msk [vmem:[%s224 + $0x80] sm:$0xff] %vm1388, %v1326
      %1406 = vst.msk [vmem:[%s224 + $0x88] sm:$0xff] %vm1388, %v1329
      %1407 = vst.msk [vmem:[%s224 + $0x90] sm:$0xff] %vm1388, %v1334
      %1408 = vst.msk [vmem:[%s224 + $0x98] sm:$0xff] %vm1388, %v1337
      %1409 = vst.msk [vmem:[%s224 + $0xa0] sm:$0xff] %vm1388, %v1342
      %1410 = vst.msk [vmem:[%s224 + $0xa8] sm:$0xff] %vm1388, %v1345
      %1411 = vst.msk [vmem:[%s224 + $0xb0] sm:$0xff] %vm1388, %v1350
      %1412 = vst.msk [vmem:[%s224 + $0xb8] sm:$0xff] %vm1388, %v1353
      %1413 = vst.msk [vmem:[%s224 + $0xc0] sm:$0xff] %vm1388, %v1358
      %1414 = vst.msk [vmem:[%s224 + $0xc8] sm:$0xff] %vm1388, %v1361
      %1415 = vst.msk [vmem:[%s224 + $0xd0] sm:$0xff] %vm1388, %v1366
      %1416 = vst.msk [vmem:[%s224 + $0xd8] sm:$0xff] %vm1388, %v1369
      %1417 = vst.msk [vmem:[%s224 + $0xe0] sm:$0xff] %vm1388, %v1374
      %1418 = vst.msk [vmem:[%s224 + $0xe8] sm:$0xff] %vm1388, %v1377
      %1419 = vst.msk [vmem:[%s224 + $0xf0] sm:$0xff] %vm1388, %v1382
      %1420 = vst.msk [vmem:[%s224 + $0xf8] sm:$0xff] %vm1388, %v1385
      %p1421 = scmp.lt.s32.totalorder %s16, 1
      %s1422 = scalar_select %p1421, %s16, 1
      %s1423 = smul.addr %s1422, 32
      %s1424 = smul.addr %s1423, 8
      %s1425 = scalar_lea.vmem %s5, %s1424
      // Predicated region
      $region41: #{teacher_forward.6} parent=39 // pred_check
        %p1426 = pneg %p144
      $region42: #{teacher_forward.6} parent=39 // pred_check_branch
        %1428 = sbr.rel (%p1426) target = $region44
      $region43: #{teacher_forward.6} parent=39 // pred_region
        _
      $region44: #{teacher_forward.6} parent=39 // pred_fallthru
        _
    $region40: #{teacher_forward.6} parent=5 // pred_fallthru
      _
    %p1429 = scmp.le.s32.totalorder 2, %s11
    // Predicated region
    $region45: #{teacher_forward.6} parent=5 // pred_check
      %p1430 = pneg %p1429
    $region46: #{teacher_forward.6} parent=5 // pred_check_branch
      %1432 = sbr.rel (%p1430) target = $region48
    $region47: #{teacher_forward.6} parent=5 // pred_region
      %s1433 = ssub.s32 %s11, 2
      // Predicated region
      $region49: #{teacher_forward.6} parent=47 // pred_check
        %p1434 = pneg %p150
      $region50: #{teacher_forward.6} parent=47 // pred_check_branch
        %1436 = sbr.rel (%p1434) target = $region52
      $region51: #{teacher_forward.6} parent=47 // pred_region
        %p1437 = scmp.lt.s32.totalorder %s17, 1
        %s1438 = scalar_select %p1437, %s17, 1
        %s1439 = smul.addr %s1438, 32
        %s1440 = smul.addr %s1439, 8
        %s1441 = scalar_lea.vmem %s5, %s1440
      $region52: #{teacher_forward.6} parent=47 // pred_fallthru
        _
    $region48: #{teacher_forward.6} parent=5 // pred_fallthru
      _
  $region6: #{teacher_forward.6} parent=0 // loop_footer
    %s15 = sadd.s32 1, %s11
  $region7: #{teacher_forward.6} parent=0 // loop_footer_branch
    %10 = sbr.rel target = $region3
  $region8: #{teacher_forward.6} parent=0 // loop_exit
    _

// kernel: teacher_forward.7
$region0: #{teacher_forward.7}
  #allocation0 [shape = 'u32[]', space=smem, size = 0x4, offset = 0x4, fixed_abs, tag = 'smem constant byte address 0x4 - core index']
  #allocation1 [shape = 'u32[144,128]{1,0:T(1,128)}', space=vmem, size = 0x12000, scoped, tag = 'internal scratch']
  %s0 = inlined_call_operand.vmem [shape: bf16[16,1568], index: 0, kind: input, shape index: {}]
  %s1 = inlined_call_operand.vmem [shape: bf16[1568,128], index: 1, kind: input, shape index: {}]
  %s2 = inlined_call_operand.vmem [shape: f32[1,128], index: 2, kind: input, shape index: {}]
  %s3 = inlined_call_operand.vmem [shape: bf16[128,128], index: 3, kind: input, shape index: {}]
  %s4 = inlined_call_operand.vmem [shape: f32[1,128], index: 4, kind: input, shape index: {}]
  %s5 = inlined_call_operand.vmem [shape: bf16[128,48], index: 5, kind: input, shape index: {}]
  %s6 = inlined_call_operand.vmem [shape: f32[1,48], index: 6, kind: input, shape index: {}]
  %s7 = inlined_call_operand.vmem [shape: f32[16,48], index: 7, kind: output, shape index: {}]
  %s8 = sld [smem:[#allocation0]]
  $region38: #{teacher_forward.7} parent=0
    _
  %s10 = ssub.s32 1, %s8
  %s11 = scalar_select 0, %s10, %s8
  // Predicated region
  $region2: #{teacher_forward.7} parent=0 // pred_check
    _
  $region3: #{teacher_forward.7} parent=0 // pred_check_branch
    %13 = sbr.rel (0) target = $region5
  $region4: #{teacher_forward.7} parent=0 // pred_region
    _
  $region5: #{teacher_forward.7} parent=0 // pred_fallthru
    _
  // Predicated region
  $region6: #{teacher_forward.7} parent=0 // pred_check
    _
  $region7: #{teacher_forward.7} parent=0 // pred_check_branch
    %15 = sbr.rel (0) target = $region9
  $region8: #{teacher_forward.7} parent=0 // pred_region
    _
  $region9: #{teacher_forward.7} parent=0 // pred_fallthru
    _
  // Predicated region
  $region10: #{teacher_forward.7} parent=0 // pred_check
    _
  $region11: #{teacher_forward.7} parent=0 // pred_check_branch
    %17 = sbr.rel (0) target = $region13
  $region12: #{teacher_forward.7} parent=0 // pred_region
    _
  $region13: #{teacher_forward.7} parent=0 // pred_fallthru
    _
  // Predicated region
  $region14: #{teacher_forward.7} parent=0 // pred_check
    _
  $region15: #{teacher_forward.7} parent=0 // pred_check_branch
    %19 = sbr.rel (0) target = $region17
  $region16: #{teacher_forward.7} parent=0 // pred_region
    _
  $region17: #{teacher_forward.7} parent=0 // pred_fallthru
    _
  // Predicated region
  $region18: #{teacher_forward.7} parent=0 // pred_check
    _
  $region19: #{teacher_forward.7} parent=0 // pred_check_branch
    %21 = sbr.rel (0) target = $region21
  $region20: #{teacher_forward.7} parent=0 // pred_region
    _
  $region21: #{teacher_forward.7} parent=0 // pred_fallthru
    _
  // Predicated region
  $region22: #{teacher_forward.7} parent=0 // pred_check
    _
  $region23: #{teacher_forward.7} parent=0 // pred_check_branch
    %23 = sbr.rel (0) target = $region25
  $region24: #{teacher_forward.7} parent=0 // pred_region
    _
  $region25: #{teacher_forward.7} parent=0 // pred_fallthru
    _
  // Predicated region
  $region26: #{teacher_forward.7} parent=0 // pred_check
    _
  $region27: #{teacher_forward.7} parent=0 // pred_check_branch
    %25 = sbr.rel (0) target = $region29
  $region28: #{teacher_forward.7} parent=0 // pred_region
    _
  $region29: #{teacher_forward.7} parent=0 // pred_fallthru
    _
  %v27 = vld [vmem:[%s0] sm:$0xff]
  %v28 = vld [vmem:[%s0 + $0x8] sm:$0xff]
  %v29 = vld [vmem:[%s0 + $0x10] sm:$0xff]
  %v30 = vld [vmem:[%s0 + $0x18] sm:$0xff]
  %v31 = vld [vmem:[%s0 + $0x20] sm:$0xff]
  %v32 = vld [vmem:[%s0 + $0x28] sm:$0xff]
  %v33 = vld [vmem:[%s0 + $0x30] sm:$0xf]
  %v34 = vld [vmem:[%s0 + $0x34] sm:$0xff]
  %v35 = vld [vmem:[%s0 + $0x3c] sm:$0xff]
  %v36 = vld [vmem:[%s0 + $0x44] sm:$0xff]
  %v37 = vld [vmem:[%s0 + $0x4c] sm:$0xff]
  %v38 = vld [vmem:[%s0 + $0x54] sm:$0xff]
  %v39 = vld [vmem:[%s0 + $0x5c] sm:$0xff]
  %v40 = vld [vmem:[%s0 + $0x64] sm:$0xf]
  %v41 = vld [vmem:[%s1] sm:$0xf]
  %v42 = vld [vmem:[%s1 + $0x4] sm:$0xf]
  %v43 = vld [vmem:[%s1 + $0x8] sm:$0xf]
  %v44 = vld [vmem:[%s1 + $0xc] sm:$0xf]
  %v45 = vld [vmem:[%s1 + $0x10] sm:$0xf]
  %v46 = vld [vmem:[%s1 + $0x14] sm:$0xf]
  %v47 = vld [vmem:[%s1 + $0x18] sm:$0xf]
  %v48 = vld [vmem:[%s1 + $0x1c] sm:$0xf]
  %v49 = vld [vmem:[%s1 + $0x20] sm:$0xf]
  %v50 = vld [vmem:[%s1 + $0x24] sm:$0xf]
  %v51 = vld [vmem:[%s1 + $0x28] sm:$0xf]
  %v52 = vld [vmem:[%s1 + $0x2c] sm:$0xf]
  %v53 = vld [vmem:[%s1 + $0x30] sm:$0xf]
  %v54 = vld [vmem:[%s1 + $0x34] sm:$0xf]
  %v55 = vld [vmem:[%s1 + $0x38] sm:$0xf]
  %v56 = vld [vmem:[%s1 + $0x3c] sm:$0xf]
  %v57 = vld [vmem:[%s1 + $0x40] sm:$0xf]
  %v58 = vld [vmem:[%s1 + $0x44] sm:$0xf]
  %v59 = vld [vmem:[%s1 + $0x48] sm:$0xf]
  %v60 = vld [vmem:[%s1 + $0x4c] sm:$0xf]
  %v61 = vld [vmem:[%s1 + $0x50] sm:$0xf]
  %v62 = vld [vmem:[%s1 + $0x54] sm:$0xf]
  %v63 = vld [vmem:[%s1 + $0x58] sm:$0xf]
  %v64 = vld [vmem:[%s1 + $0x5c] sm:$0xf]
  %v65 = vld [vmem:[%s1 + $0x60] sm:$0xf]
  %v66 = vld [vmem:[%s1 + $0x64] sm:$0xf]
  %v67 = vld [vmem:[%s1 + $0x68] sm:$0xf]
  %v68 = vld [vmem:[%s1 + $0x6c] sm:$0xf]
  %v69 = vld [vmem:[%s1 + $0x70] sm:$0xf]
  %v70 = vld [vmem:[%s1 + $0x74] sm:$0xf]
  %v71 = vld [vmem:[%s1 + $0x78] sm:$0xf]
  %v72 = vld [vmem:[%s1 + $0x7c] sm:$0xf]
  %v73 = vld [vmem:[%s1 + $0x80] sm:$0xf]
  %v74 = vld [vmem:[%s1 + $0x84] sm:$0xf]
  %v75 = vld [vmem:[%s1 + $0x88] sm:$0xf]
  %v76 = vld [vmem:[%s1 + $0x8c] sm:$0xf]
  %v77 = vld [vmem:[%s1 + $0x90] sm:$0xf]
  %v78 = vld [vmem:[%s1 + $0x94] sm:$0xf]
  %v79 = vld [vmem:[%s1 + $0x98] sm:$0xf]
  %v80 = vld [vmem:[%s1 + $0x9c] sm:$0xf]
  %v81 = vld [vmem:[%s1 + $0xa0] sm:$0xf]
  %v82 = vld [vmem:[%s1 + $0xa4] sm:$0xf]
  %v83 = vld [vmem:[%s1 + $0xa8] sm:$0xf]
  %v84 = vld [vmem:[%s1 + $0xac] sm:$0xf]
  %v85 = vld [vmem:[%s1 + $0xb0] sm:$0xf]
  %v86 = vld [vmem:[%s1 + $0xb4] sm:$0xf]
  %v87 = vld [vmem:[%s1 + $0xb8] sm:$0xf]
  %v88 = vld [vmem:[%s1 + $0xbc] sm:$0xf]
  %v89 = vld [vmem:[%s1 + $0xc0] sm:$0xf]
  %v90 = vld [vmem:[%s1 + $0xc4] sm:$0xf]
  %v91 = vld [vmem:[%s1 + $0xc8] sm:$0xf]
  %v92 = vld [vmem:[%s1 + $0xcc] sm:$0xf]
  %v93 = vld [vmem:[%s1 + $0xd0] sm:$0xf]
  %v94 = vld [vmem:[%s1 + $0xd4] sm:$0xf]
  %v95 = vld [vmem:[%s1 + $0xd8] sm:$0xf]
  %v96 = vld [vmem:[%s1 + $0xdc] sm:$0xf]
  %v97 = vld [vmem:[%s1 + $0xe0] sm:$0xf]
  %v98 = vld [vmem:[%s1 + $0xe4] sm:$0xf]
  %v99 = vld [vmem:[%s1 + $0xe8] sm:$0xf]
  %v100 = vld [vmem:[%s1 + $0xec] sm:$0xf]
  %v101 = vld [vmem:[%s1 + $0xf0] sm:$0xf]
  %v102 = vld [vmem:[%s1 + $0xf4] sm:$0xf]
  %v103 = vld [vmem:[%s1 + $0xf8] sm:$0xf]
  %v104 = vld [vmem:[%s1 + $0xfc] sm:$0xf]
  %v105 = vld [vmem:[%s1 + $0x100] sm:$0xf]
  %v106 = vld [vmem:[%s1 + $0x104] sm:$0xf]
  %v107 = vld [vmem:[%s1 + $0x108] sm:$0xf]
  %v108 = vld [vmem:[%s1 + $0x10c] sm:$0xf]
  %v109 = vld [vmem:[%s1 + $0x110] sm:$0xf]
  %v110 = vld [vmem:[%s1 + $0x114] sm:$0xf]
  %v111 = vld [vmem:[%s1 + $0x118] sm:$0xf]
  %v112 = vld [vmem:[%s1 + $0x11c] sm:$0xf]
  %v113 = vld [vmem:[%s1 + $0x120] sm:$0xf]
  %v114 = vld [vmem:[%s1 + $0x124] sm:$0xf]
  %v115 = vld [vmem:[%s1 + $0x128] sm:$0xf]
  %v116 = vld [vmem:[%s1 + $0x12c] sm:$0xf]
  %v117 = vld [vmem:[%s1 + $0x130] sm:$0xf]
  %v118 = vld [vmem:[%s1 + $0x134] sm:$0xf]
  %v119 = vld [vmem:[%s1 + $0x138] sm:$0xf]
  %v120 = vld [vmem:[%s1 + $0x13c] sm:$0xf]
  %v121 = vld [vmem:[%s1 + $0x140] sm:$0xf]
  %v122 = vld [vmem:[%s1 + $0x144] sm:$0xf]
  %v123 = vld [vmem:[%s1 + $0x148] sm:$0xf]
  %v124 = vld [vmem:[%s1 + $0x14c] sm:$0xf]
  %v125 = vld [vmem:[%s1 + $0x150] sm:$0xf]
  %v126 = vld [vmem:[%s1 + $0x154] sm:$0xf]
  %v127 = vld [vmem:[%s1 + $0x158] sm:$0xf]
  %v128 = vld [vmem:[%s1 + $0x15c] sm:$0xf]
  %v129 = vld [vmem:[%s1 + $0x160] sm:$0xf]
  %v130 = vld [vmem:[%s1 + $0x164] sm:$0xf]
  %v131 = vld [vmem:[%s1 + $0x168] sm:$0xf]
  %v132 = vld [vmem:[%s1 + $0x16c] sm:$0xf]
  %v133 = vld [vmem:[%s1 + $0x170] sm:$0xf]
  %v134 = vld [vmem:[%s1 + $0x174] sm:$0xf]
  %v135 = vld [vmem:[%s1 + $0x178] sm:$0xf]
  %v136 = vld [vmem:[%s1 + $0x17c] sm:$0xf]
  %v137 = vld [vmem:[%s1 + $0x180] sm:$0xf]
  %v138 = vld [vmem:[%s1 + $0x184] sm:$0xf]
  %v139 = vld [vmem:[%s1 + $0x188] sm:$0xf]
  %v140 = vld [vmem:[%s1 + $0x18c] sm:$0xf]
  %v141 = vld [vmem:[%s1 + $0x190] sm:$0xf]
  %v142 = vld [vmem:[%s1 + $0x194] sm:$0xf]
  %v143 = vld [vmem:[%s1 + $0x198] sm:$0xf]
  %v144 = vld [vmem:[%s1 + $0x19c] sm:$0xf]
  %v145 = vld [vmem:[%s1 + $0x1a0] sm:$0xf]
  %v146 = vld [vmem:[%s1 + $0x1a4] sm:$0xf]
  %v147 = vld [vmem:[%s1 + $0x1a8] sm:$0xf]
  %v148 = vld [vmem:[%s1 + $0x1ac] sm:$0xf]
  %v149 = vld [vmem:[%s1 + $0x1b0] sm:$0xf]
  %v150 = vld [vmem:[%s1 + $0x1b4] sm:$0xf]
  %v151 = vld [vmem:[%s1 + $0x1b8] sm:$0xf]
  %v152 = vld [vmem:[%s1 + $0x1bc] sm:$0xf]
  %v153 = vld [vmem:[%s1 + $0x1c0] sm:$0xf]
  %v154 = vld [vmem:[%s1 + $0x1c4] sm:$0xf]
  %v155 = vld [vmem:[%s1 + $0x1c8] sm:$0xf]
  %v156 = vld [vmem:[%s1 + $0x1cc] sm:$0xf]
  %v157 = vld [vmem:[%s1 + $0x1d0] sm:$0xf]
  %v158 = vld [vmem:[%s1 + $0x1d4] sm:$0xf]
  %v159 = vld [vmem:[%s1 + $0x1d8] sm:$0xf]
  %v160 = vld [vmem:[%s1 + $0x1dc] sm:$0xf]
  %v161 = vld [vmem:[%s1 + $0x1e0] sm:$0xf]
  %v162 = vld [vmem:[%s1 + $0x1e4] sm:$0xf]
  %v163 = vld [vmem:[%s1 + $0x1e8] sm:$0xf]
  %v164 = vld [vmem:[%s1 + $0x1ec] sm:$0xf]
  %v165 = vld [vmem:[%s1 + $0x1f0] sm:$0xf]
  %v166 = vld [vmem:[%s1 + $0x1f4] sm:$0xf]
  %v167 = vld [vmem:[%s1 + $0x1f8] sm:$0xf]
  %v168 = vld [vmem:[%s1 + $0x1fc] sm:$0xf]
  %v169 = vld [vmem:[%s1 + $0x200] sm:$0xf]
  %v170 = vld [vmem:[%s1 + $0x204] sm:$0xf]
  %v171 = vld [vmem:[%s1 + $0x208] sm:$0xf]
  %v172 = vld [vmem:[%s1 + $0x20c] sm:$0xf]
  %v173 = vld [vmem:[%s1 + $0x210] sm:$0xf]
  %v174 = vld [vmem:[%s1 + $0x214] sm:$0xf]
  %v175 = vld [vmem:[%s1 + $0x218] sm:$0xf]
  %v176 = vld [vmem:[%s1 + $0x21c] sm:$0xf]
  %v177 = vld [vmem:[%s1 + $0x220] sm:$0xf]
  %v178 = vld [vmem:[%s1 + $0x224] sm:$0xf]
  %v179 = vld [vmem:[%s1 + $0x228] sm:$0xf]
  %v180 = vld [vmem:[%s1 + $0x22c] sm:$0xf]
  %v181 = vld [vmem:[%s1 + $0x230] sm:$0xf]
  %v182 = vld [vmem:[%s1 + $0x234] sm:$0xf]
  %v183 = vld [vmem:[%s1 + $0x238] sm:$0xf]
  %v184 = vld [vmem:[%s1 + $0x23c] sm:$0xf]
  %v185 = vld [vmem:[%s1 + $0x240] sm:$0xf]
  %v186 = vld [vmem:[%s1 + $0x244] sm:$0xf]
  %v187 = vld [vmem:[%s1 + $0x248] sm:$0xf]
  %v188 = vld [vmem:[%s1 + $0x24c] sm:$0xf]
  %v189 = vld [vmem:[%s1 + $0x250] sm:$0xf]
  %v190 = vld [vmem:[%s1 + $0x254] sm:$0xf]
  %v191 = vld [vmem:[%s1 + $0x258] sm:$0xf]
  %v192 = vld [vmem:[%s1 + $0x25c] sm:$0xf]
  %v193 = vld [vmem:[%s1 + $0x260] sm:$0xf]
  %v194 = vld [vmem:[%s1 + $0x264] sm:$0xf]
  %v195 = vld [vmem:[%s1 + $0x268] sm:$0xf]
  %v196 = vld [vmem:[%s1 + $0x26c] sm:$0xf]
  %v197 = vld [vmem:[%s1 + $0x270] sm:$0xf]
  %v198 = vld [vmem:[%s1 + $0x274] sm:$0xf]
  %v199 = vld [vmem:[%s1 + $0x278] sm:$0xf]
  %v200 = vld [vmem:[%s1 + $0x27c] sm:$0xf]
  %v201 = vld [vmem:[%s1 + $0x280] sm:$0xf]
  %v202 = vld [vmem:[%s1 + $0x284] sm:$0xf]
  %v203 = vld [vmem:[%s1 + $0x288] sm:$0xf]
  %v204 = vld [vmem:[%s1 + $0x28c] sm:$0xf]
  %v205 = vld [vmem:[%s1 + $0x290] sm:$0xf]
  %v206 = vld [vmem:[%s1 + $0x294] sm:$0xf]
  %v207 = vld [vmem:[%s1 + $0x298] sm:$0xf]
  %v208 = vld [vmem:[%s1 + $0x29c] sm:$0xf]
  %v209 = vld [vmem:[%s1 + $0x2a0] sm:$0xf]
  %v210 = vld [vmem:[%s1 + $0x2a4] sm:$0xf]
  %v211 = vld [vmem:[%s1 + $0x2a8] sm:$0xf]
  %v212 = vld [vmem:[%s1 + $0x2ac] sm:$0xf]
  %v213 = vld [vmem:[%s1 + $0x2b0] sm:$0xf]
  %v214 = vld [vmem:[%s1 + $0x2b4] sm:$0xf]
  %v215 = vld [vmem:[%s1 + $0x2b8] sm:$0xf]
  %v216 = vld [vmem:[%s1 + $0x2bc] sm:$0xf]
  %v217 = vld [vmem:[%s1 + $0x2c0] sm:$0xf]
  %v218 = vld [vmem:[%s1 + $0x2c4] sm:$0xf]
  %v219 = vld [vmem:[%s1 + $0x2c8] sm:$0xf]
  %v220 = vld [vmem:[%s1 + $0x2cc] sm:$0xf]
  %v221 = vld [vmem:[%s1 + $0x2d0] sm:$0xf]
  %v222 = vld [vmem:[%s1 + $0x2d4] sm:$0xf]
  %v223 = vld [vmem:[%s1 + $0x2d8] sm:$0xf]
  %v224 = vld [vmem:[%s1 + $0x2dc] sm:$0xf]
  %v225 = vld [vmem:[%s1 + $0x2e0] sm:$0xf]
  %v226 = vld [vmem:[%s1 + $0x2e4] sm:$0xf]
  %v227 = vld [vmem:[%s1 + $0x2e8] sm:$0xf]
  %v228 = vld [vmem:[%s1 + $0x2ec] sm:$0xf]
  %v229 = vld [vmem:[%s1 + $0x2f0] sm:$0xf]
  %v230 = vld [vmem:[%s1 + $0x2f4] sm:$0xf]
  %v231 = vld [vmem:[%s1 + $0x2f8] sm:$0xf]
  %v232 = vld [vmem:[%s1 + $0x2fc] sm:$0xf]
  %v233 = vld [vmem:[%s1 + $0x300] sm:$0xf]
  %v234 = vld [vmem:[%s1 + $0x304] sm:$0xf]
  %v235 = vld [vmem:[%s1 + $0x308] sm:$0xf]
  %v236 = vld [vmem:[%s1 + $0x30c] sm:$0xf]
  %v237 = vld [vmem:[%s2] sm:$0x1]
  %v239 = vlaneseq
  %v240 = vshrl.u32 %v239, 7
  %v241 = vsub.s32 0, %v240
  %v242 = vrot.slane %v237, %v241
  %v258 = vunpack.c.l.b16 %v27
  %v259 = vunpack.c.h.b16 %v27
  %v260 = vunpack.c.l.b16 %v28
  %v261 = vunpack.c.h.b16 %v28
  %v262 = vunpack.c.l.b16 %v29
  %v263 = vunpack.c.h.b16 %v29
  %v264 = vunpack.c.l.b16 %v30
  %v265 = vunpack.c.h.b16 %v30
  %v266 = vunpack.c.l.b16 %v31
  %v267 = vunpack.c.h.b16 %v31
  %v268 = vunpack.c.l.b16 %v32
  %v269 = vunpack.c.h.b16 %v32
  %v270 = vunpack.c.l.b16 %v33
  %v271 = vunpack.c.l.b16 %v34
  %v272 = vunpack.c.h.b16 %v34
  %v273 = vunpack.c.l.b16 %v35
  %v274 = vunpack.c.h.b16 %v35
  %v275 = vunpack.c.l.b16 %v36
  %v276 = vunpack.c.h.b16 %v36
  %v277 = vunpack.c.l.b16 %v37
  %v278 = vunpack.c.h.b16 %v37
  %v279 = vunpack.c.l.b16 %v38
  %v280 = vunpack.c.h.b16 %v38
  %v281 = vunpack.c.l.b16 %v39
  %v282 = vunpack.c.h.b16 %v39
  %v283 = vunpack.c.l.b16 %v40
  %v284 = vpack.c.b16 %v271, %v258
  %v285 = vpack.c.b16 %v272, %v259
  %v286 = vpack.c.b16 %v273, %v260
  %v287 = vpack.c.b16 %v274, %v261
  %v288 = vpack.c.b16 %v275, %v262
  %v289 = vpack.c.b16 %v276, %v263
  %v290 = vpack.c.b16 %v277, %v264
  %v291 = vpack.c.b16 %v278, %v265
  %v292 = vpack.c.b16 %v279, %v266
  %v293 = vpack.c.b16 %v280, %v267
  %v294 = vpack.c.b16 %v281, %v268
  %v295 = vpack.c.b16 %v282, %v269
  %v296 = vpack.c.b16 %v283, %v270
  %v505 = vunpack.c.l.b16 %v41
  %v506 = vunpack.c.l.b16 %v42
  %v507 = vunpack.c.l.b16 %v43
  %v508 = vunpack.c.l.b16 %v44
  %v509 = vunpack.c.l.b16 %v45
  %v510 = vunpack.c.l.b16 %v46
  %v511 = vunpack.c.l.b16 %v47
  %v512 = vunpack.c.l.b16 %v48
  %v513 = vunpack.c.l.b16 %v49
  %v514 = vunpack.c.l.b16 %v50
  %v515 = vunpack.c.l.b16 %v51
  %v516 = vunpack.c.l.b16 %v52
  %v517 = vunpack.c.l.b16 %v53
  %v518 = vunpack.c.l.b16 %v54
  %v519 = vunpack.c.l.b16 %v55
  %v520 = vunpack.c.l.b16 %v56
  %v521 = vunpack.c.l.b16 %v57
  %v522 = vunpack.c.l.b16 %v58
  %v523 = vunpack.c.l.b16 %v59
  %v524 = vunpack.c.l.b16 %v60
  %v525 = vunpack.c.l.b16 %v61
  %v526 = vunpack.c.l.b16 %v62
  %v527 = vunpack.c.l.b16 %v63
  %v528 = vunpack.c.l.b16 %v64
  %v529 = vunpack.c.l.b16 %v65
  %v530 = vunpack.c.l.b16 %v66
  %v531 = vunpack.c.l.b16 %v67
  %v532 = vunpack.c.l.b16 %v68
  %v533 = vunpack.c.l.b16 %v69
  %v534 = vunpack.c.l.b16 %v70
  %v535 = vunpack.c.l.b16 %v71
  %v536 = vunpack.c.l.b16 %v72
  %v537 = vunpack.c.l.b16 %v73
  %v538 = vunpack.c.l.b16 %v74
  %v539 = vunpack.c.l.b16 %v75
  %v540 = vunpack.c.l.b16 %v76
  %v541 = vunpack.c.l.b16 %v77
  %v542 = vunpack.c.l.b16 %v78
  %v543 = vunpack.c.l.b16 %v79
  %v544 = vunpack.c.l.b16 %v80
  %v545 = vunpack.c.l.b16 %v81
  %v546 = vunpack.c.l.b16 %v82
  %v547 = vunpack.c.l.b16 %v83
  %v548 = vunpack.c.l.b16 %v84
  %v549 = vunpack.c.l.b16 %v85
  %v550 = vunpack.c.l.b16 %v86
  %v551 = vunpack.c.l.b16 %v87
  %v552 = vunpack.c.l.b16 %v88
  %v553 = vunpack.c.l.b16 %v89
  %v554 = vunpack.c.l.b16 %v90
  %v555 = vunpack.c.l.b16 %v91
  %v556 = vunpack.c.l.b16 %v92
  %v557 = vunpack.c.l.b16 %v93
  %v558 = vunpack.c.l.b16 %v94
  %v559 = vunpack.c.l.b16 %v95
  %v560 = vunpack.c.l.b16 %v96
  %v561 = vunpack.c.l.b16 %v97
  %v562 = vunpack.c.l.b16 %v98
  %v563 = vunpack.c.l.b16 %v99
  %v564 = vunpack.c.l.b16 %v100
  %v565 = vunpack.c.l.b16 %v101
  %v566 = vunpack.c.l.b16 %v102
  %v567 = vunpack.c.l.b16 %v103
  %v568 = vunpack.c.l.b16 %v104
  %v569 = vunpack.c.l.b16 %v105
  %v570 = vunpack.c.l.b16 %v106
  %v571 = vunpack.c.l.b16 %v107
  %v572 = vunpack.c.l.b16 %v108
  %v573 = vunpack.c.l.b16 %v109
  %v574 = vunpack.c.l.b16 %v110
  %v575 = vunpack.c.l.b16 %v111
  %v576 = vunpack.c.l.b16 %v112
  %v577 = vunpack.c.l.b16 %v113
  %v578 = vunpack.c.l.b16 %v114
  %v579 = vunpack.c.l.b16 %v115
  %v580 = vunpack.c.l.b16 %v116
  %v581 = vunpack.c.l.b16 %v117
  %v582 = vunpack.c.l.b16 %v118
  %v583 = vunpack.c.l.b16 %v119
  %v584 = vunpack.c.l.b16 %v120
  %v585 = vunpack.c.l.b16 %v121
  %v586 = vunpack.c.l.b16 %v122
  %v587 = vunpack.c.l.b16 %v123
  %v588 = vunpack.c.l.b16 %v124
  %v589 = vunpack.c.l.b16 %v125
  %v590 = vunpack.c.l.b16 %v126
  %v591 = vunpack.c.l.b16 %v127
  %v592 = vunpack.c.l.b16 %v128
  %v593 = vunpack.c.l.b16 %v129
  %v594 = vunpack.c.l.b16 %v130
  %v595 = vunpack.c.l.b16 %v131
  %v596 = vunpack.c.l.b16 %v132
  %v597 = vunpack.c.l.b16 %v133
  %v598 = vunpack.c.l.b16 %v134
  %v599 = vunpack.c.l.b16 %v135
  %v600 = vunpack.c.l.b16 %v136
  %v601 = vunpack.c.l.b16 %v137
  %v602 = vunpack.c.l.b16 %v138
  %v603 = vunpack.c.l.b16 %v139
  %v604 = vunpack.c.l.b16 %v140
  %v605 = vunpack.c.l.b16 %v141
  %v606 = vunpack.c.l.b16 %v142
  %v607 = vunpack.c.l.b16 %v143
  %v608 = vunpack.c.l.b16 %v144
  %v609 = vunpack.c.l.b16 %v145
  %v610 = vunpack.c.l.b16 %v146
  %v611 = vunpack.c.l.b16 %v147
  %v612 = vunpack.c.l.b16 %v148
  %v613 = vunpack.c.l.b16 %v149
  %v614 = vunpack.c.l.b16 %v150
  %v615 = vunpack.c.l.b16 %v151
  %v616 = vunpack.c.l.b16 %v152
  %v617 = vunpack.c.l.b16 %v153
  %v618 = vunpack.c.l.b16 %v154
  %v619 = vunpack.c.l.b16 %v155
  %v620 = vunpack.c.l.b16 %v156
  %v621 = vunpack.c.l.b16 %v157
  %v622 = vunpack.c.l.b16 %v158
  %v623 = vunpack.c.l.b16 %v159
  %v624 = vunpack.c.l.b16 %v160
  %v625 = vunpack.c.l.b16 %v161
  %v626 = vunpack.c.l.b16 %v162
  %v627 = vunpack.c.l.b16 %v163
  %v628 = vunpack.c.l.b16 %v164
  %v629 = vunpack.c.l.b16 %v165
  %v630 = vunpack.c.l.b16 %v166
  %v631 = vunpack.c.l.b16 %v167
  %v632 = vunpack.c.l.b16 %v168
  %v633 = vunpack.c.l.b16 %v169
  %v634 = vunpack.c.l.b16 %v170
  %v635 = vunpack.c.l.b16 %v171
  %v636 = vunpack.c.l.b16 %v172
  %v637 = vunpack.c.l.b16 %v173
  %v638 = vunpack.c.l.b16 %v174
  %v639 = vunpack.c.l.b16 %v175
  %v640 = vunpack.c.l.b16 %v176
  %v641 = vunpack.c.l.b16 %v177
  %v642 = vunpack.c.l.b16 %v178
  %v643 = vunpack.c.l.b16 %v179
  %v644 = vunpack.c.l.b16 %v180
  %v645 = vunpack.c.l.b16 %v181
  %v646 = vunpack.c.l.b16 %v182
  %v647 = vunpack.c.l.b16 %v183
  %v648 = vunpack.c.l.b16 %v184
  %v649 = vunpack.c.l.b16 %v185
  %v650 = vunpack.c.l.b16 %v186
  %v651 = vunpack.c.l.b16 %v187
  %v652 = vunpack.c.l.b16 %v188
  %v653 = vunpack.c.l.b16 %v189
  %v654 = vunpack.c.l.b16 %v190
  %v655 = vunpack.c.l.b16 %v191
  %v656 = vunpack.c.l.b16 %v192
  %v657 = vunpack.c.l.b16 %v193
  %v658 = vunpack.c.l.b16 %v194
  %v659 = vunpack.c.l.b16 %v195
  %v660 = vunpack.c.l.b16 %v196
  %v661 = vunpack.c.l.b16 %v197
  %v662 = vunpack.c.l.b16 %v198
  %v663 = vunpack.c.l.b16 %v199
  %v664 = vunpack.c.l.b16 %v200
  %v665 = vunpack.c.l.b16 %v201
  %v666 = vunpack.c.l.b16 %v202
  %v667 = vunpack.c.l.b16 %v203
  %v668 = vunpack.c.l.b16 %v204
  %v669 = vunpack.c.l.b16 %v205
  %v670 = vunpack.c.l.b16 %v206
  %v671 = vunpack.c.l.b16 %v207
  %v672 = vunpack.c.l.b16 %v208
  %v673 = vunpack.c.l.b16 %v209
  %v674 = vunpack.c.l.b16 %v210
  %v675 = vunpack.c.l.b16 %v211
  %v676 = vunpack.c.l.b16 %v212
  %v677 = vunpack.c.l.b16 %v213
  %v678 = vunpack.c.l.b16 %v214
  %v679 = vunpack.c.l.b16 %v215
  %v680 = vunpack.c.l.b16 %v216
  %v681 = vunpack.c.l.b16 %v217
  %v682 = vunpack.c.l.b16 %v218
  %v683 = vunpack.c.l.b16 %v219
  %v684 = vunpack.c.l.b16 %v220
  %v685 = vunpack.c.l.b16 %v221
  %v686 = vunpack.c.l.b16 %v222
  %v687 = vunpack.c.l.b16 %v223
  %v688 = vunpack.c.l.b16 %v224
  %v689 = vunpack.c.l.b16 %v225
  %v690 = vunpack.c.l.b16 %v226
  %v691 = vunpack.c.l.b16 %v227
  %v692 = vunpack.c.l.b16 %v228
  %v693 = vunpack.c.l.b16 %v229
  %v694 = vunpack.c.l.b16 %v230
  %v695 = vunpack.c.l.b16 %v231
  %v696 = vunpack.c.l.b16 %v232
  %v697 = vunpack.c.l.b16 %v233
  %v698 = vunpack.c.l.b16 %v234
  %v699 = vunpack.c.l.b16 %v235
  %v700 = vunpack.c.l.b16 %v236
  %v701 = vpack.c.b16 %v506, %v505
  %v702 = vpack.c.b16 %v508, %v507
  %v703 = vpack.c.b16 %v510, %v509
  %v704 = vpack.c.b16 %v512, %v511
  %v705 = vpack.c.b16 %v514, %v513
  %v706 = vpack.c.b16 %v516, %v515
  %v707 = vpack.c.b16 %v518, %v517
  %v708 = vpack.c.b16 %v520, %v519
  %v709 = vpack.c.b16 %v522, %v521
  %v710 = vpack.c.b16 %v524, %v523
  %v711 = vpack.c.b16 %v526, %v525
  %v712 = vpack.c.b16 %v528, %v527
  %v713 = vpack.c.b16 %v530, %v529
  %v714 = vpack.c.b16 %v532, %v531
  %v715 = vpack.c.b16 %v534, %v533
  %v716 = vpack.c.b16 %v536, %v535
  %v717 = vpack.c.b16 %v538, %v537
  %v718 = vpack.c.b16 %v540, %v539
  %v719 = vpack.c.b16 %v542, %v541
  %v720 = vpack.c.b16 %v544, %v543
  %v721 = vpack.c.b16 %v546, %v545
  %v722 = vpack.c.b16 %v548, %v547
  %v723 = vpack.c.b16 %v550, %v549
  %v724 = vpack.c.b16 %v552, %v551
  %v725 = vpack.c.b16 %v554, %v553
  %v726 = vpack.c.b16 %v556, %v555
  %v727 = vpack.c.b16 %v558, %v557
  %v728 = vpack.c.b16 %v560, %v559
  %v729 = vpack.c.b16 %v562, %v561
  %v730 = vpack.c.b16 %v564, %v563
  %v731 = vpack.c.b16 %v566, %v565
  %v732 = vpack.c.b16 %v568, %v567
  %v733 = vpack.c.b16 %v570, %v569
  %v734 = vpack.c.b16 %v572, %v571
  %v735 = vpack.c.b16 %v574, %v573
  %v736 = vpack.c.b16 %v576, %v575
  %v737 = vpack.c.b16 %v578, %v577
  %v738 = vpack.c.b16 %v580, %v579
  %v739 = vpack.c.b16 %v582, %v581
  %v740 = vpack.c.b16 %v584, %v583
  %v741 = vpack.c.b16 %v586, %v585
  %v742 = vpack.c.b16 %v588, %v587
  %v743 = vpack.c.b16 %v590, %v589
  %v744 = vpack.c.b16 %v592, %v591
  %v745 = vpack.c.b16 %v594, %v593
  %v746 = vpack.c.b16 %v596, %v595
  %v747 = vpack.c.b16 %v598, %v597
  %v748 = vpack.c.b16 %v600, %v599
  %v749 = vpack.c.b16 %v602, %v601
  %v750 = vpack.c.b16 %v604, %v603
  %v751 = vpack.c.b16 %v606, %v605
  %v752 = vpack.c.b16 %v608, %v607
  %v753 = vpack.c.b16 %v610, %v609
  %v754 = vpack.c.b16 %v612, %v611
  %v755 = vpack.c.b16 %v614, %v613
  %v756 = vpack.c.b16 %v616, %v615
  %v757 = vpack.c.b16 %v618, %v617
  %v758 = vpack.c.b16 %v620, %v619
  %v759 = vpack.c.b16 %v622, %v621
  %v760 = vpack.c.b16 %v624, %v623
  %v761 = vpack.c.b16 %v626, %v625
  %v762 = vpack.c.b16 %v628, %v627
  %v763 = vpack.c.b16 %v630, %v629
  %v764 = vpack.c.b16 %v632, %v631
  %v765 = vpack.c.b16 %v634, %v633
  %v766 = vpack.c.b16 %v636, %v635
  %v767 = vpack.c.b16 %v638, %v637
  %v768 = vpack.c.b16 %v640, %v639
  %v769 = vpack.c.b16 %v642, %v641
  %v770 = vpack.c.b16 %v644, %v643
  %v771 = vpack.c.b16 %v646, %v645
  %v772 = vpack.c.b16 %v648, %v647
  %v773 = vpack.c.b16 %v650, %v649
  %v774 = vpack.c.b16 %v652, %v651
  %v775 = vpack.c.b16 %v654, %v653
  %v776 = vpack.c.b16 %v656, %v655
  %v777 = vpack.c.b16 %v658, %v657
  %v778 = vpack.c.b16 %v660, %v659
  %v779 = vpack.c.b16 %v662, %v661
  %v780 = vpack.c.b16 %v664, %v663
  %v781 = vpack.c.b16 %v666, %v665
  %v782 = vpack.c.b16 %v668, %v667
  %v783 = vpack.c.b16 %v670, %v669
  %v784 = vpack.c.b16 %v672, %v671
  %v785 = vpack.c.b16 %v674, %v673
  %v786 = vpack.c.b16 %v676, %v675
  %v787 = vpack.c.b16 %v678, %v677
  %v788 = vpack.c.b16 %v680, %v679
  %v789 = vpack.c.b16 %v682, %v681
  %v790 = vpack.c.b16 %v684, %v683
  %v791 = vpack.c.b16 %v686, %v685
  %v792 = vpack.c.b16 %v688, %v687
  %v793 = vpack.c.b16 %v690, %v689
  %v794 = vpack.c.b16 %v692, %v691
  %v795 = vpack.c.b16 %v694, %v693
  %v796 = vpack.c.b16 %v696, %v695
  %v797 = vpack.c.b16 %v698, %v697
  %v798 = vpack.c.b16 %v700, %v699
  %vm897 = vcmask 261120
  %v899 = vsel %vm897, %v296, 0
  %901 = vmatprep.subr.bf16.mxu0 0
  %902 = vmatpush1.bf16.msra.mxu0 %v701
  %903 = vmatprep.subr.bf16.mxu0 0
  %904 = vmatpush1.bf16.msra.mxu0 %v702
  %905 = vmatprep.subr.bf16.mxu0 0
  %906 = vmatpush1.bf16.msra.mxu0 %v703
  %907 = vmatprep.subr.bf16.mxu0 0
  %908 = vmatpush1.bf16.msra.mxu0 %v704
  %909 = vmatprep.subr.bf16.mxu0 0
  %910 = vmatpush1.bf16.msra.mxu0 %v705
  %911 = vmatprep.subr.bf16.mxu0 0
  %912 = vmatpush1.bf16.msra.mxu0 %v706
  %913 = vmatprep.subr.bf16.mxu0 0
  %914 = vmatpush1.bf16.msra.mxu0 %v707
  %915 = vmatprep.subr.bf16.mxu0 0
  %916 = vmatpush1.bf16.msra.mxu0 %v708
  %917 = vmatprep.subr.bf16.mxu0 0
  %918 = vmatpush1.bf16.msra.mxu0 %v709
  %919 = vmatprep.subr.bf16.mxu0 0
  %920 = vmatpush1.bf16.msra.mxu0 %v710
  %921 = vmatprep.subr.bf16.mxu0 0
  %922 = vmatpush1.bf16.msra.mxu0 %v711
  %923 = vmatprep.subr.bf16.mxu0 0
  %924 = vmatpush1.bf16.msra.mxu0 %v712
  %925 = vmatprep.subr.bf16.mxu0 0
  %926 = vmatpush1.bf16.msra.mxu0 %v713
  %927 = vmatprep.subr.bf16.mxu0 0
  %928 = vmatpush1.bf16.msra.mxu0 %v714
  %929 = vmatprep.subr.bf16.mxu0 0
  %930 = vmatpush1.bf16.msra.mxu0 %v715
  %931 = vmatprep.subr.bf16.mxu0 0
  %932 = vmatpush1.bf16.msra.mxu0 %v716
  %933 = vmatprep.mubr.bf16.mxu0 %v285
  %934 = vmatmul.mubr.bf16.gmra.mrb[0].mxu0 %v284
  %v935 = vpop.f32.mrb[0].mxu0
  %v936 = vadd.f32 %v242, %v935
  %v937 = vpop.f32.mrb[0].mxu0
  %v938 = vpop.f32.mrb[0].mxu0
  %v939 = vadd.f32 %v242, %v938
  %v940 = vpop.f32.mrb[0].mxu0
  %941 = vdwg.mxu0
  %942 = vmatprep.subr.bf16.mxu0 0
  %943 = vmatpush1.bf16.msra.mxu0 %v717
  %944 = vmatprep.subr.bf16.mxu0 0
  %945 = vmatpush1.bf16.msra.mxu0 %v718
  %946 = vmatprep.subr.bf16.mxu0 0
  %947 = vmatpush1.bf16.msra.mxu0 %v719
  %948 = vmatprep.subr.bf16.mxu0 0
  %949 = vmatpush1.bf16.msra.mxu0 %v720
  %950 = vmatprep.subr.bf16.mxu0 0
  %951 = vmatpush1.bf16.msra.mxu0 %v721
  %952 = vmatprep.subr.bf16.mxu0 0
  %953 = vmatpush1.bf16.msra.mxu0 %v722
  %954 = vmatprep.subr.bf16.mxu0 0
  %955 = vmatpush1.bf16.msra.mxu0 %v723
  %956 = vmatprep.subr.bf16.mxu0 0
  %957 = vmatpush1.bf16.msra.mxu0 %v724
  %958 = vmatprep.subr.bf16.mxu0 0
  %959 = vmatpush1.bf16.msra.mxu0 %v725
  %960 = vmatprep.subr.bf16.mxu0 0
  %961 = vmatpush1.bf16.msra.mxu0 %v726
  %962 = vmatprep.subr.bf16.mxu0 0
  %963 = vmatpush1.bf16.msra.mxu0 %v727
  %964 = vmatprep.subr.bf16.mxu0 0
  %965 = vmatpush1.bf16.msra.mxu0 %v728
  %966 = vmatprep.subr.bf16.mxu0 0
  %967 = vmatpush1.bf16.msra.mxu0 %v729
  %968 = vmatprep.subr.bf16.mxu0 0
  %969 = vmatpush1.bf16.msra.mxu0 %v730
  %970 = vmatprep.subr.bf16.mxu0 0
  %971 = vmatpush1.bf16.msra.mxu0 %v731
  %972 = vmatprep.subr.bf16.mxu0 0
  %973 = vmatpush1.bf16.msra.mxu0 %v732
  %974 = vmatprep.mubr.bf16.mxu0 %v287
  %975 = vmatmul.mubr.bf16.gmra.mrb[0].mxu0 %v286
  %v976 = vpop.f32.mrb[0].mxu0
  %v977 = vadd.f32 %v936, %v976
  %v978 = vpop.f32.mrb[0].mxu0
  %v979 = vpop.f32.mrb[0].mxu0
  %v980 = vadd.f32 %v939, %v979
  %v981 = vpop.f32.mrb[0].mxu0
  %982 = vdwg.mxu0
  %983 = vmatprep.subr.bf16.mxu0 0
  %984 = vmatpush1.bf16.msra.mxu0 %v733
  %985 = vmatprep.subr.bf16.mxu0 0
  %986 = vmatpush1.bf16.msra.mxu0 %v734
  %987 = vmatprep.subr.bf16.mxu0 0
  %988 = vmatpush1.bf16.msra.mxu0 %v735
  %989 = vmatprep.subr.bf16.mxu0 0
  %990 = vmatpush1.bf16.msra.mxu0 %v736
  %991 = vmatprep.subr.bf16.mxu0 0
  %992 = vmatpush1.bf16.msra.mxu0 %v737
  %993 = vmatprep.subr.bf16.mxu0 0
  %994 = vmatpush1.bf16.msra.mxu0 %v738
  %995 = vmatprep.subr.bf16.mxu0 0
  %996 = vmatpush1.bf16.msra.mxu0 %v739
  %997 = vmatprep.subr.bf16.mxu0 0
  %998 = vmatpush1.bf16.msra.mxu0 %v740
  %999 = vmatprep.subr.bf16.mxu0 0
  %1000 = vmatpush1.bf16.msra.mxu0 %v741
  %1001 = vmatprep.subr.bf16.mxu0 0
  %1002 = vmatpush1.bf16.msra.mxu0 %v742
  %1003 = vmatprep.subr.bf16.mxu0 0
  %1004 = vmatpush1.bf16.msra.mxu0 %v743
  %1005 = vmatprep.subr.bf16.mxu0 0
  %1006 = vmatpush1.bf16.msra.mxu0 %v744
  %1007 = vmatprep.subr.bf16.mxu0 0
  %1008 = vmatpush1.bf16.msra.mxu0 %v745
  %1009 = vmatprep.subr.bf16.mxu0 0
  %1010 = vmatpush1.bf16.msra.mxu0 %v746
  %1011 = vmatprep.subr.bf16.mxu0 0
  %1012 = vmatpush1.bf16.msra.mxu0 %v747
  %1013 = vmatprep.subr.bf16.mxu0 0
  %1014 = vmatpush1.bf16.msra.mxu0 %v748
  %1015 = vmatprep.mubr.bf16.mxu0 %v289
  %1016 = vmatmul.mubr.bf16.gmra.mrb[0].mxu0 %v288
  %v1017 = vpop.f32.mrb[0].mxu0
  %v1018 = vadd.f32 %v977, %v1017
  %v1019 = vpop.f32.mrb[0].mxu0
  %v1020 = vpop.f32.mrb[0].mxu0
  %v1021 = vadd.f32 %v980, %v1020
  %v1022 = vpop.f32.mrb[0].mxu0
  %1023 = vdwg.mxu0
  %1024 = vmatprep.subr.bf16.mxu0 0
  %1025 = vmatpush1.bf16.msra.mxu0 %v749
  %1026 = vmatprep.subr.bf16.mxu0 0
  %1027 = vmatpush1.bf16.msra.mxu0 %v750
  %1028 = vmatprep.subr.bf16.mxu0 0
  %1029 = vmatpush1.bf16.msra.mxu0 %v751
  %1030 = vmatprep.subr.bf16.mxu0 0
  %1031 = vmatpush1.bf16.msra.mxu0 %v752
  %1032 = vmatprep.subr.bf16.mxu0 0
  %1033 = vmatpush1.bf16.msra.mxu0 %v753
  %1034 = vmatprep.subr.bf16.mxu0 0
  %1035 = vmatpush1.bf16.msra.mxu0 %v754
  %1036 = vmatprep.subr.bf16.mxu0 0
  %1037 = vmatpush1.bf16.msra.mxu0 %v755
  %1038 = vmatprep.subr.bf16.mxu0 0
  %1039 = vmatpush1.bf16.msra.mxu0 %v756
  %1040 = vmatprep.subr.bf16.mxu0 0
  %1041 = vmatpush1.bf16.msra.mxu0 %v757
  %1042 = vmatprep.subr.bf16.mxu0 0
  %1043 = vmatpush1.bf16.msra.mxu0 %v758
  %1044 = vmatprep.subr.bf16.mxu0 0
  %1045 = vmatpush1.bf16.msra.mxu0 %v759
  %1046 = vmatprep.subr.bf16.mxu0 0
  %1047 = vmatpush1.bf16.msra.mxu0 %v760
  %1048 = vmatprep.subr.bf16.mxu0 0
  %1049 = vmatpush1.bf16.msra.mxu0 %v761
  %1050 = vmatprep.subr.bf16.mxu0 0
  %1051 = vmatpush1.bf16.msra.mxu0 %v762
  %1052 = vmatprep.subr.bf16.mxu0 0
  %1053 = vmatpush1.bf16.msra.mxu0 %v763
  %1054 = vmatprep.subr.bf16.mxu0 0
  %1055 = vmatpush1.bf16.msra.mxu0 %v764
  %1056 = vmatprep.mubr.bf16.mxu0 %v291
  %1057 = vmatmul.mubr.bf16.gmra.mrb[0].mxu0 %v290
  %v1058 = vpop.f32.mrb[0].mxu0
  %v1059 = vadd.f32 %v1018, %v1058
  %v1060 = vpop.f32.mrb[0].mxu0
  %v1061 = vpop.f32.mrb[0].mxu0
  %v1062 = vadd.f32 %v1021, %v1061
  %v1063 = vpop.f32.mrb[0].mxu0
  %1064 = vdwg.mxu0
  %1065 = vmatprep.subr.bf16.mxu0 0
  %1066 = vmatpush1.bf16.msra.mxu0 %v765
  %1067 = vmatprep.subr.bf16.mxu0 0
  %1068 = vmatpush1.bf16.msra.mxu0 %v766
  %1069 = vmatprep.subr.bf16.mxu0 0
  %1070 = vmatpush1.bf16.msra.mxu0 %v767
  %1071 = vmatprep.subr.bf16.mxu0 0
  %1072 = vmatpush1.bf16.msra.mxu0 %v768
  %1073 = vmatprep.subr.bf16.mxu0 0
  %1074 = vmatpush1.bf16.msra.mxu0 %v769
  %1075 = vmatprep.subr.bf16.mxu0 0
  %1076 = vmatpush1.bf16.msra.mxu0 %v770
  %1077 = vmatprep.subr.bf16.mxu0 0
  %1078 = vmatpush1.bf16.msra.mxu0 %v771
  %1079 = vmatprep.subr.bf16.mxu0 0
  %1080 = vmatpush1.bf16.msra.mxu0 %v772
  %1081 = vmatprep.subr.bf16.mxu0 0
  %1082 = vmatpush1.bf16.msra.mxu0 %v773
  %1083 = vmatprep.subr.bf16.mxu0 0
  %1084 = vmatpush1.bf16.msra.mxu0 %v774
  %1085 = vmatprep.subr.bf16.mxu0 0
  %1086 = vmatpush1.bf16.msra.mxu0 %v775
  %1087 = vmatprep.subr.bf16.mxu0 0
  %1088 = vmatpush1.bf16.msra.mxu0 %v776
  %1089 = vmatprep.subr.bf16.mxu0 0
  %1090 = vmatpush1.bf16.msra.mxu0 %v777
  %1091 = vmatprep.subr.bf16.mxu0 0
  %1092 = vmatpush1.bf16.msra.mxu0 %v778
  %1093 = vmatprep.subr.bf16.mxu0 0
  %1094 = vmatpush1.bf16.msra.mxu0 %v779
  %1095 = vmatprep.subr.bf16.mxu0 0
  %1096 = vmatpush1.bf16.msra.mxu0 %v780
  %1097 = vmatprep.mubr.bf16.mxu0 %v293
  %1098 = vmatmul.mubr.bf16.gmra.mrb[0].mxu0 %v292
  %v1099 = vpop.f32.mrb[0].mxu0
  %v1100 = vadd.f32 %v1059, %v1099
  %v1101 = vpop.f32.mrb[0].mxu0
  %v1102 = vpop.f32.mrb[0].mxu0
  %v1103 = vadd.f32 %v1062, %v1102
  %v1104 = vpop.f32.mrb[0].mxu0
  %1105 = vdwg.mxu0
  %1106 = vmatprep.subr.bf16.mxu0 0
  %1107 = vmatpush1.bf16.msra.mxu0 %v781
  %1108 = vmatprep.subr.bf16.mxu0 0
  %1109 = vmatpush1.bf16.msra.mxu0 %v782
  %1110 = vmatprep.subr.bf16.mxu0 0
  %1111 = vmatpush1.bf16.msra.mxu0 %v783
  %1112 = vmatprep.subr.bf16.mxu0 0
  %1113 = vmatpush1.bf16.msra.mxu0 %v784
  %1114 = vmatprep.subr.bf16.mxu0 0
  %1115 = vmatpush1.bf16.msra.mxu0 %v785
  %1116 = vmatprep.subr.bf16.mxu0 0
  %1117 = vmatpush1.bf16.msra.mxu0 %v786
  %1118 = vmatprep.subr.bf16.mxu0 0
  %1119 = vmatpush1.bf16.msra.mxu0 %v787
  %1120 = vmatprep.subr.bf16.mxu0 0
  %1121 = vmatpush1.bf16.msra.mxu0 %v788
  %1122 = vmatprep.subr.bf16.mxu0 0
  %1123 = vmatpush1.bf16.msra.mxu0 %v789
  %1124 = vmatprep.subr.bf16.mxu0 0
  %1125 = vmatpush1.bf16.msra.mxu0 %v790
  %1126 = vmatprep.subr.bf16.mxu0 0
  %1127 = vmatpush1.bf16.msra.mxu0 %v791
  %1128 = vmatprep.subr.bf16.mxu0 0
  %1129 = vmatpush1.bf16.msra.mxu0 %v792
  %1130 = vmatprep.subr.bf16.mxu0 0
  %1131 = vmatpush1.bf16.msra.mxu0 %v793
  %1132 = vmatprep.subr.bf16.mxu0 0
  %1133 = vmatpush1.bf16.msra.mxu0 %v794
  %1134 = vmatprep.subr.bf16.mxu0 0
  %1135 = vmatpush1.bf16.msra.mxu0 %v795
  %1136 = vmatprep.subr.bf16.mxu0 0
  %1137 = vmatpush1.bf16.msra.mxu0 %v796
  %1138 = vmatprep.mubr.bf16.mxu0 %v295
  %1139 = vmatmul.mubr.bf16.gmra.mrb[0].mxu0 %v294
  %v1140 = vpop.f32.mrb[0].mxu0
  %v1141 = vadd.f32 %v1100, %v1140
  %v1142 = vpop.f32.mrb[0].mxu0
  %v1143 = vpop.f32.mrb[0].mxu0
  %v1144 = vadd.f32 %v1103, %v1143
  %v1145 = vpop.f32.mrb[0].mxu0
  %1146 = vdwg.mxu0
  %1147 = vmatprep.subr.bf16.mxu0 0
  %1148 = vmatpush1.bf16.msra.mxu0 %v797
  %1149 = vmatprep.subr.bf16.mxu0 0
  %1150 = vmatpush1.bf16.msra.mxu0 %v798
  %1151 = vmatprep.subr.bf16.mxu0 0
  %1152 = vmatpush1.bf16.msra.mxu0 0
  %1153 = vmatprep.subr.bf16.mxu0 0
  %1154 = vmatpush1.bf16.msra.mxu0 0
  %1155 = vmatprep.subr.bf16.mxu0 0
  %1156 = vmatpush1.bf16.msra.mxu0 0
  %1157 = vmatprep.subr.bf16.mxu0 0
  %1158 = vmatpush1.bf16.msra.mxu0 0
  %1159 = vmatprep.subr.bf16.mxu0 0
  %1160 = vmatpush1.bf16.msra.mxu0 0
  %1161 = vmatprep.subr.bf16.mxu0 0
  %1162 = vmatpush1.bf16.msra.mxu0 0
  %1163 = vmatprep.subr.bf16.mxu0 0
  %1164 = vmatpush1.bf16.msra.mxu0 0
  %1165 = vmatprep.subr.bf16.mxu0 0
  %1166 = vmatpush1.bf16.msra.mxu0 0
  %1167 = vmatprep.subr.bf16.mxu0 0
  %1168 = vmatpush1.bf16.msra.mxu0 0
  %1169 = vmatprep.subr.bf16.mxu0 0
  %1170 = vmatpush1.bf16.msra.mxu0 0
  %1171 = vmatprep.subr.bf16.mxu0 0
  %1172 = vmatpush1.bf16.msra.mxu0 0
  %1173 = vmatprep.subr.bf16.mxu0 0
  %1174 = vmatpush1.bf16.msra.mxu0 0
  %1175 = vmatprep.subr.bf16.mxu0 0
  %1176 = vmatpush1.bf16.msra.mxu0 0
  %1177 = vmatprep.subr.bf16.mxu0 0
  %1178 = vmatpush1.bf16.msra.mxu0 0
  %1179 = vmatprep.mubr.bf16.mxu0 0
  %1180 = vmatmul.mubr.bf16.gmra.mrb[0].mxu0 %v899
  %v1181 = vpop.f32.mrb[0].mxu0
  %v1182 = vadd.f32 %v1141, %v1181
  %v1183 = vpop.f32.mrb[0].mxu0
  %v1184 = vpop.f32.mrb[0].mxu0
  %v1185 = vadd.f32 %v1144, %v1184
  %v1186 = vpop.f32.mrb[0].mxu0
  %1187 = vdwg.mxu0
  %v1188 = vmax.f32 %v1182, 0.0
  %v1189 = vmax.f32 %v1185, 0.0
  %v1190 = vpack.c.bf16 %v1189, %v1188
  %v1191 = vld [vmem:[%s3] sm:$0xf]
  %v1192 = vld [vmem:[%s3 + $0x4] sm:$0xf]
  %v1193 = vld [vmem:[%s3 + $0x8] sm:$0xf]
  %v1194 = vld [vmem:[%s3 + $0xc] sm:$0xf]
  %v1195 = vld [vmem:[%s3 + $0x10] sm:$0xf]
  %v1196 = vld [vmem:[%s3 + $0x14] sm:$0xf]
  %v1197 = vld [vmem:[%s3 + $0x18] sm:$0xf]
  %v1198 = vld [vmem:[%s3 + $0x1c] sm:$0xf]
  %v1199 = vld [vmem:[%s3 + $0x20] sm:$0xf]
  %v1200 = vld [vmem:[%s3 + $0x24] sm:$0xf]
  %v1201 = vld [vmem:[%s3 + $0x28] sm:$0xf]
  %v1202 = vld [vmem:[%s3 + $0x2c] sm:$0xf]
  %v1203 = vld [vmem:[%s3 + $0x30] sm:$0xf]
  %v1204 = vld [vmem:[%s3 + $0x34] sm:$0xf]
  %v1205 = vld [vmem:[%s3 + $0x38] sm:$0xf]
  %v1206 = vld [vmem:[%s3 + $0x3c] sm:$0xf]
  %v1207 = vld [vmem:[%s4] sm:$0x1]
  %v1209 = vlaneseq
  %v1210 = vshrl.u32 %v1209, 7
  %v1211 = vsub.s32 0, %v1210
  %v1212 = vrot.slane %v1207, %v1211
  %v1230 = vunpack.c.l.b16 %v1191
  %v1231 = vunpack.c.l.b16 %v1192
  %v1232 = vunpack.c.l.b16 %v1193
  %v1233 = vunpack.c.l.b16 %v1194
  %v1234 = vunpack.c.l.b16 %v1195
  %v1235 = vunpack.c.l.b16 %v1196
  %v1236 = vunpack.c.l.b16 %v1197
  %v1237 = vunpack.c.l.b16 %v1198
  %v1238 = vunpack.c.l.b16 %v1199
  %v1239 = vunpack.c.l.b16 %v1200
  %v1240 = vunpack.c.l.b16 %v1201
  %v1241 = vunpack.c.l.b16 %v1202
  %v1242 = vunpack.c.l.b16 %v1203
  %v1243 = vunpack.c.l.b16 %v1204
  %v1244 = vunpack.c.l.b16 %v1205
  %v1245 = vunpack.c.l.b16 %v1206
  %v1246 = vpack.c.b16 %v1231, %v1230
  %v1247 = vpack.c.b16 %v1233, %v1232
  %v1248 = vpack.c.b16 %v1235, %v1234
  %v1249 = vpack.c.b16 %v1237, %v1236
  %v1250 = vpack.c.b16 %v1239, %v1238
  %v1251 = vpack.c.b16 %v1241, %v1240
  %v1252 = vpack.c.b16 %v1243, %v1242
  %v1253 = vpack.c.b16 %v1245, %v1244
  %1262 = vmatprep.subr.bf16.mxu0 0
  %1263 = vmatpush1.bf16.msra.mxu0 %v1246
  %1264 = vmatprep.subr.bf16.mxu0 0
  %1265 = vmatpush1.bf16.msra.mxu0 %v1247
  %1266 = vmatprep.subr.bf16.mxu0 0
  %1267 = vmatpush1.bf16.msra.mxu0 %v1248
  %1268 = vmatprep.subr.bf16.mxu0 0
  %1269 = vmatpush1.bf16.msra.mxu0 %v1249
  %1270 = vmatprep.subr.bf16.mxu0 0
  %1271 = vmatpush1.bf16.msra.mxu0 %v1250
  %1272 = vmatprep.subr.bf16.mxu0 0
  %1273 = vmatpush1.bf16.msra.mxu0 %v1251
  %1274 = vmatprep.subr.bf16.mxu0 0
  %1275 = vmatpush1.bf16.msra.mxu0 %v1252
  %1276 = vmatprep.subr.bf16.mxu0 0
  %1277 = vmatpush1.bf16.msra.mxu0 %v1253
  %1278 = vmatprep.subr.bf16.mxu0 0
  %1279 = vmatpush1.bf16.msra.mxu0 0
  %1280 = vmatprep.subr.bf16.mxu0 0
  %1281 = vmatpush1.bf16.msra.mxu0 0
  %1282 = vmatprep.subr.bf16.mxu0 0
  %1283 = vmatpush1.bf16.msra.mxu0 0
  %1284 = vmatprep.subr.bf16.mxu0 0
  %1285 = vmatpush1.bf16.msra.mxu0 0
  %1286 = vmatprep.subr.bf16.mxu0 0
  %1287 = vmatpush1.bf16.msra.mxu0 0
  %1288 = vmatprep.subr.bf16.mxu0 0
  %1289 = vmatpush1.bf16.msra.mxu0 0
  %1290 = vmatprep.subr.bf16.mxu0 0
  %1291 = vmatpush1.bf16.msra.mxu0 0
  %1292 = vmatprep.subr.bf16.mxu0 0
  %1293 = vmatpush1.bf16.msra.mxu0 0
  %1294 = vmatprep.mubr.bf16.mxu0 0
  %1295 = vmatmul.mubr.bf16.gmra.mrb[0].mxu0 %v1190
  %v1296 = vpop.f32.mrb[0].mxu0
  %v1297 = vadd.f32 %v1212, %v1296
  %v1298 = vpop.f32.mrb[0].mxu0
  %v1299 = vpop.f32.mrb[0].mxu0
  %v1300 = vadd.f32 %v1212, %v1299
  %v1301 = vpop.f32.mrb[0].mxu0
  %1302 = vdwg.mxu0
  %v1303 = vmax.f32 %v1297, 0.0
  %v1304 = vmax.f32 %v1300, 0.0
  %v1305 = vpack.c.bf16 %v1304, %v1303
  %v1306 = vld [vmem:[%s5] sm:$0xf]
  %v1307 = vld [vmem:[%s5 + $0x4] sm:$0xf]
  %v1308 = vld [vmem:[%s5 + $0x8] sm:$0xf]
  %v1309 = vld [vmem:[%s5 + $0xc] sm:$0xf]
  %v1310 = vld [vmem:[%s5 + $0x10] sm:$0xf]
  %v1311 = vld [vmem:[%s5 + $0x14] sm:$0xf]
  %v1312 = vld [vmem:[%s5 + $0x18] sm:$0xf]
  %v1313 = vld [vmem:[%s5 + $0x1c] sm:$0xf]
  %v1314 = vld [vmem:[%s5 + $0x20] sm:$0xf]
  %v1315 = vld [vmem:[%s5 + $0x24] sm:$0xf]
  %v1316 = vld [vmem:[%s5 + $0x28] sm:$0xf]
  %v1317 = vld [vmem:[%s5 + $0x2c] sm:$0xf]
  %v1318 = vld [vmem:[%s5 + $0x30] sm:$0xf]
  %v1319 = vld [vmem:[%s5 + $0x34] sm:$0xf]
  %v1320 = vld [vmem:[%s5 + $0x38] sm:$0xf]
  %v1321 = vld [vmem:[%s5 + $0x3c] sm:$0xf]
  %v1322 = vld [vmem:[%s6] sm:$0x1]
  %v1324 = vlaneseq
  %v1325 = vshrl.u32 %v1324, 7
  %v1326 = vsub.s32 0, %v1325
  %v1327 = vrot.slane %v1322, %v1326
  %v1345 = vunpack.c.l.b16 %v1306
  %v1346 = vunpack.c.l.b16 %v1307
  %v1347 = vunpack.c.l.b16 %v1308
  %v1348 = vunpack.c.l.b16 %v1309
  %v1349 = vunpack.c.l.b16 %v1310
  %v1350 = vunpack.c.l.b16 %v1311
  %v1351 = vunpack.c.l.b16 %v1312
  %v1352 = vunpack.c.l.b16 %v1313
  %v1353 = vunpack.c.l.b16 %v1314
  %v1354 = vunpack.c.l.b16 %v1315
  %v1355 = vunpack.c.l.b16 %v1316
  %v1356 = vunpack.c.l.b16 %v1317
  %v1357 = vunpack.c.l.b16 %v1318
  %v1358 = vunpack.c.l.b16 %v1319
  %v1359 = vunpack.c.l.b16 %v1320
  %v1360 = vunpack.c.l.b16 %v1321
  %v1361 = vpack.c.b16 %v1346, %v1345
  %v1362 = vpack.c.b16 %v1348, %v1347
  %v1363 = vpack.c.b16 %v1350, %v1349
  %v1364 = vpack.c.b16 %v1352, %v1351
  %v1365 = vpack.c.b16 %v1354, %v1353
  %v1366 = vpack.c.b16 %v1356, %v1355
  %v1367 = vpack.c.b16 %v1358, %v1357
  %v1368 = vpack.c.b16 %v1360, %v1359
  %1377 = vmatprep.subr.bf16.mxu0 0
  %1378 = vmatpush1.bf16.msra.mxu0 %v1361
  %1379 = vmatprep.subr.bf16.mxu0 0
  %1380 = vmatpush1.bf16.msra.mxu0 %v1362
  %1381 = vmatprep.subr.bf16.mxu0 0
  %1382 = vmatpush1.bf16.msra.mxu0 %v1363
  %1383 = vmatprep.subr.bf16.mxu0 0
  %1384 = vmatpush1.bf16.msra.mxu0 %v1364
  %1385 = vmatprep.subr.bf16.mxu0 0
  %1386 = vmatpush1.bf16.msra.mxu0 %v1365
  %1387 = vmatprep.subr.bf16.mxu0 0
  %1388 = vmatpush1.bf16.msra.mxu0 %v1366
  %1389 = vmatprep.subr.bf16.mxu0 0
  %1390 = vmatpush1.bf16.msra.mxu0 %v1367
  %1391 = vmatprep.subr.bf16.mxu0 0
  %1392 = vmatpush1.bf16.msra.mxu0 %v1368
  %1393 = vmatprep.subr.bf16.mxu0 0
  %1394 = vmatpush1.bf16.msra.mxu0 0
  %1395 = vmatprep.subr.bf16.mxu0 0
  %1396 = vmatpush1.bf16.msra.mxu0 0
  %1397 = vmatprep.subr.bf16.mxu0 0
  %1398 = vmatpush1.bf16.msra.mxu0 0
  %1399 = vmatprep.subr.bf16.mxu0 0
  %1400 = vmatpush1.bf16.msra.mxu0 0
  %1401 = vmatprep.subr.bf16.mxu0 0
  %1402 = vmatpush1.bf16.msra.mxu0 0
  %1403 = vmatprep.subr.bf16.mxu0 0
  %1404 = vmatpush1.bf16.msra.mxu0 0
  %1405 = vmatprep.subr.bf16.mxu0 0
  %1406 = vmatpush1.bf16.msra.mxu0 0
  %1407 = vmatprep.subr.bf16.mxu0 0
  %1408 = vmatpush1.bf16.msra.mxu0 0
  %1409 = vmatprep.mubr.bf16.mxu0 0
  %1410 = vmatmul.mubr.bf16.gmra.mrb[0].mxu0 %v1305
  %v1411 = vpop.f32.mrb[0].mxu0
  %v1412 = vadd.f32 %v1327, %v1411
  %v1413 = vpop.f32.mrb[0].mxu0
  %v1414 = vpop.f32.mrb[0].mxu0
  %v1415 = vadd.f32 %v1327, %v1414
  %v1416 = vpop.f32.mrb[0].mxu0
  %1417 = vdwg.mxu0
  %vm1418 = vcmask 392192
  %1419 = vst.msk [vmem:[%s7] sm:$0xff] %vm1418, %v1412
  %1420 = vst.msk [vmem:[%s7 + $0x8] sm:$0xff] %vm1418, %v1415
  // Predicated region
  $region30: #{teacher_forward.7} parent=0 // pred_check
    _
  $region31: #{teacher_forward.7} parent=0 // pred_check_branch
    %1422 = sbr.rel (0) target = $region33
  $region32: #{teacher_forward.7} parent=0 // pred_region
    _
  $region33: #{teacher_forward.7} parent=0 // pred_fallthru
    _
  // Predicated region
  $region34: #{teacher_forward.7} parent=0 // pred_check
    _
  $region35: #{teacher_forward.7} parent=0 // pred_check_branch
    %1424 = sbr.rel (0) target = $region37
  $region36: #{teacher_forward.7} parent=0 // pred_region
    _
  $region37: #{teacher_forward.7} parent=0 // pred_fallthru
    _

</llo_original>
